<compile_context>
chip_gen: v7x
topology: tpu7x:2x2x1
jax: 0.10.0
libtpu: 0.0.40
codegen_flags: <defaults>
</compile_context>

<pallas_src>
import functools

import jax
import jax.numpy as jnp
from jax import lax
from jax.experimental import pallas as pl
from jax.experimental.pallas import tpu as pltpu

NEG_INF = -1e30
SEQ_LANES = 128  # lane-dense per-step token block (col 0 holds the token)


def _round_up(x, m):
    return (x + m - 1) // m * m


def decoder_rnn_kernel(*refs, num_layers, approx_recip):
    if num_layers > 1:
        (h0_ref, c0_ref, enc_ref, bias_ref, emb_ref, w0_ref, wl_ref, b_ref,
         wo_ref, bo_ref,
         logp_ref, attn_ref, seq_ref,
         h_scr, c_scr, sel_scr) = refs
    else:
        (h0_ref, c0_ref, enc_ref, bias_ref, emb_ref, w0_ref, b_ref,
         wo_ref, bo_ref,
         logp_ref, attn_ref, seq_ref,
         h_scr, c_scr, sel_scr) = refs
        wl_ref = None

    t = pl.program_id(1)
    L, Bt, Hp = h_scr.shape
    Vp, Ep = emb_ref.shape
    cdt = enc_ref.dtype
    f32 = jnp.float32

    @pl.when(t == 0)
    def _init():
        # replicate (h, c) over layers (== torch.cat([h] * num_layer)); SOS token = 1
        for l in range(L):
            h_scr[l] = h0_ref[0]
            c_scr[l] = c0_ref[0]
        iota_v = lax.broadcasted_iota(jnp.int32, (Bt, Vp), 1)
        sel_scr[...] = (iota_v == 1).astype(cdt)

    # ---- embedding lookup: one-hot(prev token) @ emb on the MXU ----
    # TODO(synk): for production vocab sizes this should be an HBM row-gather
    # (emb in pl.ANY + per-row make_async_copy); the gather index is produced inside
    # the kernel (greedy argmax) and routing an in-kernel vector value into SMEM
    # scalars for DMA indexing does not lower robustly, so the guaranteed-lowering
    # one-hot matmul is kept here.
    embedded = jnp.dot(sel_scr[...], emb_ref[...],
                       preferred_element_type=f32).astype(cdt)          # (Bt, Ep)

    # ---- Luong dot attention: batched MXU matvecs on the (B, T, H) encoder ----
    h_top = h_scr[L - 1]                                                 # (Bt, Hp) f32
    q = h_top.astype(cdt)[:, None, :]                                    # (Bt, 1, Hp)
    scores = jnp.einsum("bqh,bkh->bqk", q, enc_ref[...],
                        preferred_element_type=f32)[:, 0, :]             # (Bt, Tp)
    scores = scores + bias_ref[...]                                      # mask padded keys
    m = jnp.max(scores, axis=-1, keepdims=True)
    e = jnp.exp(scores - m)
    denom = jnp.sum(e, axis=-1, keepdims=True)
    if approx_recip:
        attnw = e * pl.reciprocal(denom, approx=True)                    # EUP slot
    else:
        attnw = e / denom                                                # exact (test parity)
    context = jnp.einsum("bqk,bkh->bqh", attnw.astype(cdt)[:, None, :], enc_ref[...],
                         preferred_element_type=f32)[:, 0, :]            # (Bt, Hp) f32

    # ---- stacked LSTM, PyTorch gate order [i, f, g, o]; one fused dot per layer ----
    x = context.astype(cdt)
    for l in range(L):
        h_prev = h_scr[l]
        if l == 0:
            xin = jnp.concatenate([embedded, x, h_prev.astype(cdt)], axis=-1)
            w = w0_ref[...]
        else:
            xin = jnp.concatenate([x, h_prev.astype(cdt)], axis=-1)
            w = wl_ref[l - 1]
        gates = jnp.dot(xin, w, preferred_element_type=f32) + b_ref[l]   # (Bt, 4Hp) f32
        # Hp is a multiple of 128 -> gate slices are lane-aligned.
        i_g = jax.nn.sigmoid(gates[:, 0 * Hp:1 * Hp])
        f_g = jax.nn.sigmoid(gates[:, 1 * Hp:2 * Hp])
        g_g = jnp.tanh(gates[:, 2 * Hp:3 * Hp])
        o_g = jax.nn.sigmoid(gates[:, 3 * Hp:4 * Hp])
        c_new = f_g * c_scr[l] + i_g * g_g
        h_new = o_g * jnp.tanh(c_new)
        h_scr[l] = h_new
        c_scr[l] = c_new
        x = h_new.astype(cdt)
        # TODO(synk): inter-layer LSTM dropout omitted (inference mode).

    # ---- output projection + log_softmax (padded vocab columns carry -1e30 bias) ----
    # TODO(synk): for very large vocab on v7x, stream wo in vocab chunks from HBM with
    # an online logsumexp / running argmax instead of keeping (Hp, Vp) resident.
    logits = jnp.dot(x, wo_ref[...], preferred_element_type=f32) + bo_ref[...]
    maxv = jnp.max(logits, axis=-1, keepdims=True)
    z = logits - maxv
    # exp in the compute dtype (bf16 EUP packing on v6e/v7x); sum accumulated in f32.
    sumexp = jnp.sum(jnp.exp(z.astype(cdt)).astype(f32), axis=-1, keepdims=True)
    logp = z - jnp.log(sumexp)

    # greedy next token: reuse maxv (argmax(logits) == argmax(logp)), first-max tie break
    iota_v = lax.broadcasted_iota(jnp.int32, (Bt, Vp), 1)
    next_tok = jnp.min(jnp.where(logits == maxv, iota_v, Vp), axis=-1, keepdims=True)
    sel_scr[...] = (iota_v == next_tok).astype(cdt)                      # one-hot for t+1

    logp_ref[...] = logp
    attn_ref[...] = attnw
    seq_ref[...] = jnp.broadcast_to(next_tok, (Bt, seq_ref.shape[-1]))


@functools.partial(jax.jit, static_argnames=("num_layer", "compute_dtype", "approx_recip"))
def decoder_rnn_forward(h, c, encoder_outputs, params, *, num_layer,
                        compute_dtype=jnp.float32, approx_recip=True):
    T, B, H = encoder_outputs.shape
    V, E = params["emb"].shape
    L = num_layer
    cdt = compute_dtype
    f32 = jnp.float32

    Hp = _round_up(H, 128)
    Ep = _round_up(E, 128)
    Vp = _round_up(V, 128)
    Tp = _round_up(T, 128)
    csz = jnp.dtype(cdt).itemsize

    # ---- generation-aware VMEM budget (v7x has 64 MiB per TensorCore) ----
    try:
        vmem_cap = int(pltpu.get_tpu_info().vmem_capacity_bytes)
    except Exception:
        vmem_cap = 64 * 1024 * 1024

    def est_vmem(bt):
        in_b = (2 * bt * Hp * 4                        # h0 + c0 blocks (f32)
                + bt * Tp * Hp * csz                   # encoder block
                + Tp * 4                               # attention key mask
                + Vp * Ep * csz                        # embedding table
                + (Ep + 2 * Hp) * 4 * Hp * csz         # fused layer-0 weight
                + max(L - 1, 0) * 2 * Hp * 4 * Hp * csz
                + L * 4 * Hp * 4                       # biases
                + Hp * Vp * csz + Vp * 4)              # output projection
        out_b = bt * (Vp + Tp + SEQ_LANES) * 4
        scr_b = 2 * L * bt * Hp * 4 + bt * Vp * csz
        live_b = bt * (3 * Vp + 4 * Hp) * 4 + 2 * bt * Tp * csz
        # inputs/outputs are double-buffered by the automatic pipeliner.
        # TODO(synk): mark constant-index weight blocks pipeline_mode=pl.Buffered(1)
        # once single-buffering via BlockSpec is confirmed supported by this jax build.
        return 2 * (in_b + out_b) + scr_b + live_b

    budget = int(0.75 * vmem_cap)
    b8 = _round_up(max(B, 1), 8)
    B_TILE = 8
    for bt in (128, 64, 32, 16):
        if bt > b8:
            continue
        if (b8 + bt - 1) // bt < 2:
            continue  # keep >= 2 batch tiles so a 2-TC chip (v7x) can shard the bt axis
        if est_vmem(bt) <= budget:
            B_TILE = bt
            break
    Bp = _round_up(B, B_TILE)
    n_bt = Bp // B_TILE

    vmem_limit = int(min(vmem_cap - (2 << 20),
                         max(est_vmem(B_TILE) + (8 << 20), 32 << 20)))

    def pad_to(x, shape):
        return jnp.pad(x, [(0, s - d) for d, s in zip(x.shape, shape)])

    def pad_gates(w):
        # pad the trailing [i|f|g|o] axis gate-by-gate: (..., 4H) -> (..., 4Hp)
        w4 = w.reshape(w.shape[:-1] + (4, H))
        w4 = jnp.pad(w4, [(0, 0)] * (w4.ndim - 1) + [(0, Hp - H)])
        return w4.reshape(w.shape[:-1] + (4 * Hp,))

    emb_p = pad_to(params["emb"], (Vp, Ep)).astype(cdt)

    # fused layer-0 weight rows: [embedded (Ep) | context (Hp) | h (Hp)]
    w_e = pad_gates(params["w_e"])
    w_x0 = pad_gates(params["w_xh"][0])
    w_h0 = pad_gates(params["w_hh"][0])
    w0 = jnp.zeros((Ep + 2 * Hp, 4 * Hp), f32)
    w0 = w0.at[:E].set(w_e).at[Ep:Ep + H].set(w_x0).at[Ep + Hp:Ep + Hp + H].set(w_h0)
    w0 = w0.astype(cdt)

    # fused layer-l (l>0) weight rows: [x (Hp) | h (Hp)]; only built/passed when L > 1
    if L > 1:
        w_xl = pad_gates(params["w_xh"][1:])
        w_hl = pad_gates(params["w_hh"][1:])
        wl = jnp.zeros((L - 1, 2 * Hp, 4 * Hp), f32)
        wl = wl.at[:, :H].set(w_xl).at[:, Hp:Hp + H].set(w_hl)
        wl = wl.astype(cdt)

    b_p = pad_gates(params["b"]).astype(f32)                           # (L, 1, 4Hp)
    wo_p = pad_to(params["w_out"], (Hp, Vp)).astype(cdt)
    bo_p = jnp.full((1, Vp), NEG_INF, f32).at[:, :V].set(params["b_out"].astype(f32))

    h0_p = pad_to(h.astype(f32), (1, Bp, Hp))
    c0_p = pad_to(c.astype(f32), (1, Bp, Hp))
    enc_p = pad_to(jnp.transpose(encoder_outputs, (1, 0, 2)), (Bp, Tp, Hp)).astype(cdt)
    attn_bias = jnp.where(jnp.arange(Tp) < T, 0.0, NEG_INF).astype(f32)[None, :]

    in_specs = [
        pl.BlockSpec((1, B_TILE, Hp), lambda bt, t: (0, bt, 0)),          # h0
        pl.BlockSpec((1, B_TILE, Hp), lambda bt, t: (0, bt, 0)),          # c0
        pl.BlockSpec((B_TILE, Tp, Hp), lambda bt, t: (bt, 0, 0)),         # encoder (B,T,H)
        pl.BlockSpec((1, Tp), lambda bt, t: (0, 0)),                      # attn key mask
        pl.BlockSpec((Vp, Ep), lambda bt, t: (0, 0)),                     # embedding
        pl.BlockSpec((Ep + 2 * Hp, 4 * Hp), lambda bt, t: (0, 0)),        # fused W, layer 0
    ]
    args = [h0_p, c0_p, enc_p, attn_bias, emb_p, w0]
    if L > 1:
        in_specs.append(pl.BlockSpec((L - 1, 2 * Hp, 4 * Hp), lambda bt, t: (0, 0, 0)))
        args.append(wl)
    in_specs += [
        pl.BlockSpec((L, 1, 4 * Hp), lambda bt, t: (0, 0, 0)),            # biases
        pl.BlockSpec((Hp, Vp), lambda bt, t: (0, 0)),                     # out proj W
        pl.BlockSpec((1, Vp), lambda bt, t: (0, 0)),                      # out proj b
    ]
    args += [b_p, wo_p, bo_p]

    kernel = functools.partial(decoder_rnn_kernel, num_layers=L, approx_recip=approx_recip)

    logp_flat, attn_flat, seq_flat = pl.pallas_call(
        kernel,
        out_shape=(
            jax.ShapeDtypeStruct((Bp, T * Vp), f32),
            jax.ShapeDtypeStruct((Bp, T * Tp), f32),
            jax.ShapeDtypeStruct((Bp, T * SEQ_LANES), jnp.int32),
        ),
        grid=(n_bt, T),
        in_specs=in_specs,
        out_specs=(
            pl.BlockSpec((B_TILE, Vp), lambda bt, t: (bt, t)),            # streamed logp
            pl.BlockSpec((B_TILE, Tp), lambda bt, t: (bt, t)),            # streamed attn
            pl.BlockSpec((B_TILE, SEQ_LANES), lambda bt, t: (bt, t)),     # streamed tokens
        ),
        scratch_shapes=[
            pltpu.VMEM((L, B_TILE, Hp), f32),      # h state
            pltpu.VMEM((L, B_TILE, Hp), f32),      # c state
            pltpu.VMEM((B_TILE, Vp), cdt),         # one-hot of previous token
        ],
        compiler_params=pltpu.CompilerParams(
            dimension_semantics=("parallel", "arbitrary"),
            vmem_limit_bytes=vmem_limit,
        ),
    )(*args)

    # free reshapes (row-major compatible), then crop the padding
    logp = logp_flat.reshape(Bp, T, Vp)[:B, :, :V]               # (B, T, V)
    attn = attn_flat.reshape(Bp, T, Tp)[:B, :, :T]               # (B, T, T)
    seq = seq_flat.reshape(Bp, T, SEQ_LANES)[:B, :, 0]           # (B, T) int32
    return logp, seq, attn


def make_params(key, V, E, H, L):
    ks = jax.random.split(key, 7)
    s = 0.1
    return dict(
        emb=s * jax.random.normal(ks[0], (V, E), jnp.float32),
        w_e=s * jax.random.normal(ks[1], (E, 4 * H), jnp.float32),
        w_xh=s * jax.random.normal(ks[2], (L, H, 4 * H), jnp.float32),
        w_hh=s * jax.random.normal(ks[3], (L, H, 4 * H), jnp.float32),
        b=s * jax.random.normal(ks[4], (L, 1, 4 * H), jnp.float32),
        w_out=0.5 * jax.random.normal(ks[5], (H, V), jnp.float32),
        b_out=0.5 * jax.random.normal(ks[6], (1, V), jnp.float32),
    )


def decoder_rnn_reference(h, c, enc, params, num_layer):
    """Pure-JAX reference (same math, XLA-lowered) for a sanity check."""
    T, B, H = enc.shape
    V, _ = params["emb"].shape
    L = num_layer
    h_l = jnp.tile(h, (L, 1, 1))
    c_l = jnp.tile(c, (L, 1, 1))
    tok = jnp.ones((B,), jnp.int32)
    logps, seqs, attns = [], [], []
    for _ in range(T):
        embedded = params["emb"][tok]
        h_top = h_l[-1]
        scores = jnp.einsum("bh,tbh->bt", h_top, enc)
        attn = jax.nn.softmax(scores, axis=-1)
        context = jnp.einsum("bt,tbh->bh", attn, enc)
        x = context
        new_h, new_c = [], []
        for l in range(L):
            gates = x @ params["w_xh"][l] + h_l[l] @ params["w_hh"][l] + params["b"][l]
            if l == 0:
                gates = gates + embedded @ params["w_e"]
            i_g = jax.nn.sigmoid(gates[:, :H])
            f_g = jax.nn.sigmoid(gates[:, H:2 * H])
            g_g = jnp.tanh(gates[:, 2 * H:3 * H])
            o_g = jax.nn.sigmoid(gates[:, 3 * H:])
            cn = f_g * c_l[l] + i_g * g_g
            hn = o_g * jnp.tanh(cn)
            new_h.append(hn); new_c.append(cn); x = hn
        h_l = jnp.stack(new_h); c_l = jnp.stack(new_c)
        logits = x @ params["w_out"] + params["b_out"]
        logp = jax.nn.log_softmax(logits, axis=-1)
        tok = jnp.argmax(logp, axis=-1).astype(jnp.int32)
        logps.append(logp); seqs.append(tok); attns.append(attn)
    return (jnp.stack(logps, axis=1), jnp.stack(seqs, axis=1), jnp.stack(attns, axis=1))


if __name__ == "__main__":
    # small shapes consistent with the module: hidden_dim=16 -> decoder H = 2*16 = 32
    B, T, E, hidden_dim, V, L = 2, 8, 16, 16, 16, 2
    H = 2 * hidden_dim

    key = jax.random.PRNGKey(0)
    k1, k2, k3, k4 = jax.random.split(key, 4)
    h0 = jax.random.normal(k1, (1, B, H), jnp.float32)
    c0 = jax.random.normal(k2, (1, B, H), jnp.float32)
    enc = jax.random.normal(k3, (T, B, H), jnp.float32)
    params = make_params(k4, V, E, H, L)

    # exact-arithmetic f32 run for parity against the pure-JAX reference
    out, seq, attn = decoder_rnn_forward(h0, c0, enc, params, num_layer=L,
                                         compute_dtype=jnp.float32, approx_recip=False)
    jax.block_until_ready((out, seq, attn))
    assert out.shape == (B, T, V) and seq.shape == (B, T) and attn.shape == (B, T, T)

    ref_out, ref_seq, ref_attn = decoder_rnn_reference(h0, c0, enc, params, L)
    assert jnp.allclose(out, ref_out, atol=2e-2, rtol=2e-2), "log-prob mismatch"
    assert jnp.allclose(attn, ref_attn, atol=2e-2, rtol=2e-2), "attention mismatch"
    assert jnp.array_equal(seq, ref_seq), "greedy sequence mismatch"

    # single-layer configuration (exercises the L==1 path with no wl block)
    params1 = make_params(k4, V, E, H, 1)
    out1, seq1, attn1 = decoder_rnn_forward(h0, c0, enc, params1, num_layer=1,
                                            compute_dtype=jnp.float32, approx_recip=False)
    ref1 = decoder_rnn_reference(h0, c0, enc, params1, 1)
    jax.block_until_ready((out1, seq1, attn1))
    assert jnp.allclose(out1, ref1[0], atol=2e-2, rtol=2e-2), "L=1 log-prob mismatch"
    assert jnp.array_equal(seq1, ref1[1]), "L=1 greedy sequence mismatch"

    # production path (bf16 weights/encoder, approx reciprocal): lowering + finiteness smoke test
    out16, seq16, attn16 = decoder_rnn_forward(h0, c0, enc, params, num_layer=L,
                                               compute_dtype=jnp.bfloat16, approx_recip=True)
    jax.block_until_ready((out16, seq16, attn16))
    assert out16.shape == (B, T, V) and seq16.shape == (B, T) and attn16.shape == (B, T, T)
    assert bool(jnp.isfinite(out16).all()) and bool(jnp.isfinite(attn16).all())

    print("KERNEL_OK")
</pallas_src>

<mosaic_0001>
module attributes {stable_mosaic.version = 11 : i64} {
  func.func @decoder_rnn_kernel(%arg0: i32, %arg1: i32, %arg2: memref<1x8x128xf32, #tpu.memory_space<vmem>>, %arg3: memref<1x8x128xf32, #tpu.memory_space<vmem>>, %arg4: memref<8x128x128xf32, #tpu.memory_space<vmem>>, %arg5: memref<1x128xf32, #tpu.memory_space<vmem>>, %arg6: memref<128x128xf32, #tpu.memory_space<vmem>>, %arg7: memref<384x512xf32, #tpu.memory_space<vmem>>, %arg8: memref<1x256x512xf32, #tpu.memory_space<vmem>>, %arg9: memref<2x1x512xf32, #tpu.memory_space<vmem>>, %arg10: memref<128x128xf32, #tpu.memory_space<vmem>>, %arg11: memref<1x128xf32, #tpu.memory_space<vmem>>, %arg12: memref<8x128xf32, #tpu.memory_space<vmem>>, %arg13: memref<8x128xf32, #tpu.memory_space<vmem>>, %arg14: memref<8x128xi32, #tpu.memory_space<vmem>>, %arg15: memref<2x8x128xf32, #tpu.memory_space<vmem>>, %arg16: memref<2x8x128xf32, #tpu.memory_space<vmem>>, %arg17: memref<8x128xf32, #tpu.memory_space<vmem>>) attributes {dimension_semantics = [#tpu.dimension_semantics<parallel>, #tpu.dimension_semantics<arbitrary>], iteration_bounds = array<i64: 1, 8>, scalar_prefetch = 0 : i64, scratch_operands = 3 : i64, tpu.core_type = #tpu.core_type<tc>, window_params = [{transform_indices = @transform_0, window_bounds = array<i64: 1, 8, 128>}, {transform_indices = @transform_1, window_bounds = array<i64: 1, 8, 128>}, {transform_indices = @transform_2, window_bounds = array<i64: 8, 128, 128>}, {pipeline_mode = #tpu.pipeline_mode<synchronous>, transform_indices = @transform_3, window_bounds = array<i64: 1, 128>}, {pipeline_mode = #tpu.pipeline_mode<synchronous>, transform_indices = @transform_4, window_bounds = array<i64: 128, 128>}, {pipeline_mode = #tpu.pipeline_mode<synchronous>, transform_indices = @transform_5, window_bounds = array<i64: 384, 512>}, {pipeline_mode = #tpu.pipeline_mode<synchronous>, transform_indices = @transform_6, window_bounds = array<i64: 1, 256, 512>}, {pipeline_mode = #tpu.pipeline_mode<synchronous>, transform_indices = @transform_7, window_bounds = array<i64: 2, 1, 512>}, {pipeline_mode = #tpu.pipeline_mode<synchronous>, transform_indices = @transform_8, window_bounds = array<i64: 128, 128>}, {pipeline_mode = #tpu.pipeline_mode<synchronous>, transform_indices = @transform_9, window_bounds = array<i64: 1, 128>}, {transform_indices = @transform_10, window_bounds = array<i64: 8, 128>}, {transform_indices = @transform_11, window_bounds = array<i64: 8, 128>}, {transform_indices = @transform_12, window_bounds = array<i64: 8, 128>}]} {
    %c0_i32 = arith.constant 0 : i32
    %0 = arith.cmpi eq, %arg1, %c0_i32 : i32
    %1 = arith.extui %0 : i1 to i32
    %c0_i32_0 = arith.constant 0 : i32
    %2 = arith.cmpi ne, %1, %c0_i32_0 : i32
    scf.if %2 {
      %c0_77 = arith.constant 0 : index
      %c0_78 = arith.constant 0 : index
      %c0_79 = arith.constant 0 : index
      %145 = vector.load %arg2[%c0_77, %c0_78, %c0_79] : memref<1x8x128xf32, #tpu.memory_space<vmem>>, vector<1x8x128xf32>
      %146 = vector.shape_cast %145 : vector<1x8x128xf32> to vector<8x128xf32>
      %c0_80 = arith.constant 0 : index
      %c0_81 = arith.constant 0 : index
      %c0_82 = arith.constant 0 : index
      %147 = vector.load %arg15[%c0_80, %c0_81, %c0_82] : memref<2x8x128xf32, #tpu.memory_space<vmem>>, vector<1x8x128xf32>
      %148 = vector.shape_cast %147 : vector<1x8x128xf32> to vector<8x128xf32>
      %149 = vector.shape_cast %146 : vector<8x128xf32> to vector<1x8x128xf32>
      tpu.vector_store %arg15[%c0_80, %c0_81, %c0_82], %149 {strides = array<i32>} : memref<2x8x128xf32, #tpu.memory_space<vmem>>, vector<1x8x128xf32>,
      %c0_83 = arith.constant 0 : index
      %c0_84 = arith.constant 0 : index
      %c0_85 = arith.constant 0 : index
      %150 = vector.load %arg3[%c0_83, %c0_84, %c0_85] : memref<1x8x128xf32, #tpu.memory_space<vmem>>, vector<1x8x128xf32>
      %151 = vector.shape_cast %150 : vector<1x8x128xf32> to vector<8x128xf32>
      %c0_86 = arith.constant 0 : index
      %c0_87 = arith.constant 0 : index
      %c0_88 = arith.constant 0 : index
      %152 = vector.load %arg16[%c0_86, %c0_87, %c0_88] : memref<2x8x128xf32, #tpu.memory_space<vmem>>, vector<1x8x128xf32>
      %153 = vector.shape_cast %152 : vector<1x8x128xf32> to vector<8x128xf32>
      %154 = vector.shape_cast %151 : vector<8x128xf32> to vector<1x8x128xf32>
      tpu.vector_store %arg16[%c0_86, %c0_87, %c0_88], %154 {strides = array<i32>} : memref<2x8x128xf32, #tpu.memory_space<vmem>>, vector<1x8x128xf32>,
      %c0_89 = arith.constant 0 : index
      %c0_90 = arith.constant 0 : index
      %c0_91 = arith.constant 0 : index
      %155 = vector.load %arg2[%c0_89, %c0_90, %c0_91] : memref<1x8x128xf32, #tpu.memory_space<vmem>>, vector<1x8x128xf32>
      %156 = vector.shape_cast %155 : vector<1x8x128xf32> to vector<8x128xf32>
      %c1_92 = arith.constant 1 : index
      %c0_93 = arith.constant 0 : index
      %c0_94 = arith.constant 0 : index
      %157 = vector.load %arg15[%c1_92, %c0_93, %c0_94] : memref<2x8x128xf32, #tpu.memory_space<vmem>>, vector<1x8x128xf32>
      %158 = vector.shape_cast %157 : vector<1x8x128xf32> to vector<8x128xf32>
      %159 = vector.shape_cast %156 : vector<8x128xf32> to vector<1x8x128xf32>
      tpu.vector_store %arg15[%c1_92, %c0_93, %c0_94], %159 {strides = array<i32>} : memref<2x8x128xf32, #tpu.memory_space<vmem>>, vector<1x8x128xf32>,
      %c0_95 = arith.constant 0 : index
      %c0_96 = arith.constant 0 : index
      %c0_97 = arith.constant 0 : index
      %160 = vector.load %arg3[%c0_95, %c0_96, %c0_97] : memref<1x8x128xf32, #tpu.memory_space<vmem>>, vector<1x8x128xf32>
      %161 = vector.shape_cast %160 : vector<1x8x128xf32> to vector<8x128xf32>
      %c1_98 = arith.constant 1 : index
      %c0_99 = arith.constant 0 : index
      %c0_100 = arith.constant 0 : index
      %162 = vector.load %arg16[%c1_98, %c0_99, %c0_100] : memref<2x8x128xf32, #tpu.memory_space<vmem>>, vector<1x8x128xf32>
      %163 = vector.shape_cast %162 : vector<1x8x128xf32> to vector<8x128xf32>
      %164 = vector.shape_cast %161 : vector<8x128xf32> to vector<1x8x128xf32>
      tpu.vector_store %arg16[%c1_98, %c0_99, %c0_100], %164 {strides = array<i32>} : memref<2x8x128xf32, #tpu.memory_space<vmem>>, vector<1x8x128xf32>,
      %165 = tpu.iota {dimensions = array<i32: 1>} : vector<8x128xi32>
      %c1_i32 = arith.constant 1 : i32
      %166 = vector.broadcast %c1_i32 : i32 to vector<8x128xi32>
      %167 = arith.cmpi eq, %165, %166 : vector<8x128xi32>
      %168 = arith.extui %167 : vector<8x128xi1> to vector<8x128xi32>
      %169 = arith.sitofp %168 : vector<8x128xi32> to vector<8x128xf32>
      %c0_101 = arith.constant 0 : index
      %c0_102 = arith.constant 0 : index
      %170 = vector.load %arg17[%c0_101, %c0_102] : memref<8x128xf32, #tpu.memory_space<vmem>>, vector<8x128xf32>
      tpu.vector_store %arg17[%c0_101, %c0_102], %169 {strides = array<i32>} : memref<8x128xf32, #tpu.memory_space<vmem>>, vector<8x128xf32>,
    } else {
    }
    %c0 = arith.constant 0 : index
    %c0_1 = arith.constant 0 : index
    %3 = vector.load %arg17[%c0, %c0_1] : memref<8x128xf32, #tpu.memory_space<vmem>>, vector<8x128xf32>
    %c0_2 = arith.constant 0 : index
    %c0_3 = arith.constant 0 : index
    %4 = vector.load %arg6[%c0_2, %c0_3] : memref<128x128xf32, #tpu.memory_space<vmem>>, vector<128x128xf32>
    %cst = arith.constant dense<0.000000e+00> : vector<8x128xf32>
    %5 = tpu.matmul %3, %4, %cst {dimension_numbers = #tpu.dot_dimension_numbers<[1], [0], [0], [1], [0, 0, 1, 1], [], []>} : vector<8x128xf32>, vector<128x128xf32>, vector<8x128xf32> -> vector<8x128xf32>
    %c1 = arith.constant 1 : index
    %c0_4 = arith.constant 0 : index
    %c0_5 = arith.constant 0 : index
    %6 = vector.load %arg15[%c1, %c0_4, %c0_5] : memref<2x8x128xf32, #tpu.memory_space<vmem>>, vector<1x8x128xf32>
    %7 = vector.shape_cast %6 : vector<1x8x128xf32> to vector<8x128xf32>
    %8 = vector.shape_cast %7 : vector<8x128xf32> to vector<8x1x128xf32>
    %c0_6 = arith.constant 0 : index
    %c0_7 = arith.constant 0 : index
    %c0_8 = arith.constant 0 : index
    %9 = vector.load %arg4[%c0_6, %c0_7, %c0_8] : memref<8x128x128xf32, #tpu.memory_space<vmem>>, vector<8x128x128xf32>
    "tpu.trace_start"() <{level = 10 : i32, message = "bqh,bkh->bqk"}> : () -> ()
    %cst_9 = arith.constant dense<0.000000e+00> : vector<8x1x128xf32>
    %10 = tpu.matmul %8, %9, %cst_9 {dimension_numbers = #tpu.dot_dimension_numbers<[2], [2], [1], [1], [0, 0, 0, 1, 1, 1], [0], [0]>} : vector<8x1x128xf32>, vector<8x128x128xf32>, vector<8x1x128xf32> -> vector<8x1x128xf32>
    "tpu.trace_stop"() : () -> ()
    %11 = vector.shape_cast %10 : vector<8x1x128xf32> to vector<8x128xf32>
    %c0_10 = arith.constant 0 : index
    %c0_11 = arith.constant 0 : index
    %12 = vector.load %arg5[%c0_10, %c0_11] : memref<1x128xf32, #tpu.memory_space<vmem>>, vector<1x128xf32>
    %13 = vector.broadcast %12 : vector<1x128xf32> to vector<8x128xf32>
    %14 = arith.addf %11, %13 : vector<8x128xf32>
    %cst_12 = arith.constant dense<0xFF800000> : vector<8xf32>
    %15 = vector.multi_reduction <maximumf>, %14, %cst_12 [1] : vector<8x128xf32> to vector<8xf32>
    %16 = vector.shape_cast %15 : vector<8xf32> to vector<8x1xf32>
    %17 = vector.broadcast %16 : vector<8x1xf32> to vector<8x128xf32>
    %18 = arith.subf %14, %17 : vector<8x128xf32>
    %19 = math.exp %18 : vector<8x128xf32>
    %cst_13 = arith.constant dense<0.000000e+00> : vector<8xf32>
    %20 = vector.multi_reduction <add>, %19, %cst_13 [1] : vector<8x128xf32> to vector<8xf32>
    %21 = vector.shape_cast %20 : vector<8xf32> to vector<8x1xf32>
    %22 = vector.broadcast %21 : vector<8x1xf32> to vector<8x128xf32>
    %23 = arith.divf %19, %22 : vector<8x128xf32>
    %24 = vector.shape_cast %23 : vector<8x128xf32> to vector<8x1x128xf32>
    %c0_14 = arith.constant 0 : index
    %c0_15 = arith.constant 0 : index
    %c0_16 = arith.constant 0 : index
    %25 = vector.load %arg4[%c0_14, %c0_15, %c0_16] : memref<8x128x128xf32, #tpu.memory_space<vmem>>, vector<8x128x128xf32>
    "tpu.trace_start"() <{level = 10 : i32, message = "bqk,bkh->bqh"}> : () -> ()
    %cst_17 = arith.constant dense<0.000000e+00> : vector<8x1x128xf32>
    %26 = tpu.matmul %24, %25, %cst_17 {dimension_numbers = #tpu.dot_dimension_numbers<[2], [1], [1], [2], [0, 0, 0, 1, 1, 2], [0], [0]>} : vector<8x1x128xf32>, vector<8x128x128xf32>, vector<8x1x128xf32> -> vector<8x1x128xf32>
    "tpu.trace_stop"() : () -> ()
    %27 = vector.shape_cast %26 : vector<8x1x128xf32> to vector<8x128xf32>
    %c0_18 = arith.constant 0 : index
    %c0_19 = arith.constant 0 : index
    %c0_20 = arith.constant 0 : index
    %28 = vector.load %arg15[%c0_18, %c0_19, %c0_20] : memref<2x8x128xf32, #tpu.memory_space<vmem>>, vector<1x8x128xf32>
    %29 = vector.shape_cast %28 : vector<1x8x128xf32> to vector<8x128xf32>
    %30 = tpu.concatenate %5, %27, %29 in 1 : vector<8x128xf32>, vector<8x128xf32>, vector<8x128xf32> -> vector<8x384xf32>
    %c0_21 = arith.constant 0 : index
    %c0_22 = arith.constant 0 : index
    %31 = vector.load %arg7[%c0_21, %c0_22] : memref<384x512xf32, #tpu.memory_space<vmem>>, vector<384x512xf32>
    %cst_23 = arith.constant dense<0.000000e+00> : vector<8x512xf32>
    %32 = tpu.matmul %30, %31, %cst_23 {dimension_numbers = #tpu.dot_dimension_numbers<[1], [0], [0], [1], [0, 0, 1, 1], [], []>} : vector<8x384xf32>, vector<384x512xf32>, vector<8x512xf32> -> vector<8x512xf32>
    %c0_24 = arith.constant 0 : index
    %c0_25 = arith.constant 0 : index
    %c0_26 = arith.constant 0 : index
    %33 = vector.load %arg9[%c0_24, %c0_25, %c0_26] : memref<2x1x512xf32, #tpu.memory_space<vmem>>, vector<1x1x512xf32>
    %34 = vector.shape_cast %33 : vector<1x1x512xf32> to vector<1x512xf32>
    %35 = vector.broadcast %34 : vector<1x512xf32> to vector<8x512xf32>
    %36 = arith.addf %32, %35 : vector<8x512xf32>
    %37 = vector.extract_strided_slice %36 {offsets = [0, 0], sizes = [8, 128], strides = [1, 1]} : vector<8x512xf32> to vector<8x128xf32>
    %38 = arith.negf %37 : vector<8x128xf32>
    %39 = math.exp %38 : vector<8x128xf32>
    %cst_27 = arith.constant 1.000000e+00 : f32
    %40 = vector.broadcast %cst_27 : f32 to vector<8x128xf32>
    %41 = arith.addf %40, %39 : vector<8x128xf32>
    %42 = arith.divf %40, %41 : vector<8x128xf32>
    %43 = vector.extract_strided_slice %36 {offsets = [0, 128], sizes = [8, 128], strides = [1, 1]} : vector<8x512xf32> to vector<8x128xf32>
    %44 = arith.negf %43 : vector<8x128xf32>
    %45 = math.exp %44 : vector<8x128xf32>
    %cst_28 = arith.constant 1.000000e+00 : f32
    %46 = vector.broadcast %cst_28 : f32 to vector<8x128xf32>
    %47 = arith.addf %46, %45 : vector<8x128xf32>
    %48 = arith.divf %46, %47 : vector<8x128xf32>
    %49 = vector.extract_strided_slice %36 {offsets = [0, 256], sizes = [8, 128], strides = [1, 1]} : vector<8x512xf32> to vector<8x128xf32>
    %50 = math.tanh %49 : vector<8x128xf32>
    %51 = vector.extract_strided_slice %36 {offsets = [0, 384], sizes = [8, 128], strides = [1, 1]} : vector<8x512xf32> to vector<8x128xf32>
    %52 = arith.negf %51 : vector<8x128xf32>
    %53 = math.exp %52 : vector<8x128xf32>
    %cst_29 = arith.constant 1.000000e+00 : f32
    %54 = vector.broadcast %cst_29 : f32 to vector<8x128xf32>
    %55 = arith.addf %54, %53 : vector<8x128xf32>
    %56 = arith.divf %54, %55 : vector<8x128xf32>
    %c0_30 = arith.constant 0 : index
    %c0_31 = arith.constant 0 : index
    %c0_32 = arith.constant 0 : index
    %57 = vector.load %arg16[%c0_30, %c0_31, %c0_32] : memref<2x8x128xf32, #tpu.memory_space<vmem>>, vector<1x8x128xf32>
    %58 = vector.shape_cast %57 : vector<1x8x128xf32> to vector<8x128xf32>
    %59 = arith.mulf %48, %58 : vector<8x128xf32>
    %60 = arith.mulf %42, %50 : vector<8x128xf32>
    %61 = arith.addf %59, %60 : vector<8x128xf32>
    %62 = math.tanh %61 : vector<8x128xf32>
    %63 = arith.mulf %56, %62 : vector<8x128xf32>
    %c0_33 = arith.constant 0 : index
    %c0_34 = arith.constant 0 : index
    %c0_35 = arith.constant 0 : index
    %64 = vector.load %arg15[%c0_33, %c0_34, %c0_35] : memref<2x8x128xf32, #tpu.memory_space<vmem>>, vector<1x8x128xf32>
    %65 = vector.shape_cast %64 : vector<1x8x128xf32> to vector<8x128xf32>
    %66 = vector.shape_cast %63 : vector<8x128xf32> to vector<1x8x128xf32>
    tpu.vector_store %arg15[%c0_33, %c0_34, %c0_35], %66 {strides = array<i32>} : memref<2x8x128xf32, #tpu.memory_space<vmem>>, vector<1x8x128xf32>,
    %c0_36 = arith.constant 0 : index
    %c0_37 = arith.constant 0 : index
    %c0_38 = arith.constant 0 : index
    %67 = vector.load %arg16[%c0_36, %c0_37, %c0_38] : memref<2x8x128xf32, #tpu.memory_space<vmem>>, vector<1x8x128xf32>
    %68 = vector.shape_cast %67 : vector<1x8x128xf32> to vector<8x128xf32>
    %69 = vector.shape_cast %61 : vector<8x128xf32> to vector<1x8x128xf32>
    tpu.vector_store %arg16[%c0_36, %c0_37, %c0_38], %69 {strides = array<i32>} : memref<2x8x128xf32, #tpu.memory_space<vmem>>, vector<1x8x128xf32>,
    %c1_39 = arith.constant 1 : index
    %c0_40 = arith.constant 0 : index
    %c0_41 = arith.constant 0 : index
    %70 = vector.load %arg15[%c1_39, %c0_40, %c0_41] : memref<2x8x128xf32, #tpu.memory_space<vmem>>, vector<1x8x128xf32>
    %71 = vector.shape_cast %70 : vector<1x8x128xf32> to vector<8x128xf32>
    %72 = tpu.concatenate %63, %71 in 1 : vector<8x128xf32>, vector<8x128xf32> -> vector<8x256xf32>
    %c0_42 = arith.constant 0 : index
    %c0_43 = arith.constant 0 : index
    %c0_44 = arith.constant 0 : index
    %73 = vector.load %arg8[%c0_42, %c0_43, %c0_44] : memref<1x256x512xf32, #tpu.memory_space<vmem>>, vector<1x256x512xf32>
    %74 = vector.shape_cast %73 : vector<1x256x512xf32> to vector<256x512xf32>
    %cst_45 = arith.constant dense<0.000000e+00> : vector<8x512xf32>
    %75 = tpu.matmul %72, %74, %cst_45 {dimension_numbers = #tpu.dot_dimension_numbers<[1], [0], [0], [1], [0, 0, 1, 1], [], []>} : vector<8x256xf32>, vector<256x512xf32>, vector<8x512xf32> -> vector<8x512xf32>
    %c1_46 = arith.constant 1 : index
    %c0_47 = arith.constant 0 : index
    %c0_48 = arith.constant 0 : index
    %76 = vector.load %arg9[%c1_46, %c0_47, %c0_48] : memref<2x1x512xf32, #tpu.memory_space<vmem>>, vector<1x1x512xf32>
    %77 = vector.shape_cast %76 : vector<1x1x512xf32> to vector<1x512xf32>
    %78 = vector.broadcast %77 : vector<1x512xf32> to vector<8x512xf32>
    %79 = arith.addf %75, %78 : vector<8x512xf32>
    %80 = vector.extract_strided_slice %79 {offsets = [0, 0], sizes = [8, 128], strides = [1, 1]} : vector<8x512xf32> to vector<8x128xf32>
    %81 = arith.negf %80 : vector<8x128xf32>
    %82 = math.exp %81 : vector<8x128xf32>
    %cst_49 = arith.constant 1.000000e+00 : f32
    %83 = vector.broadcast %cst_49 : f32 to vector<8x128xf32>
    %84 = arith.addf %83, %82 : vector<8x128xf32>
    %85 = arith.divf %83, %84 : vector<8x128xf32>
    %86 = vector.extract_strided_slice %79 {offsets = [0, 128], sizes = [8, 128], strides = [1, 1]} : vector<8x512xf32> to vector<8x128xf32>
    %87 = arith.negf %86 : vector<8x128xf32>
    %88 = math.exp %87 : vector<8x128xf32>
    %cst_50 = arith.constant 1.000000e+00 : f32
    %89 = vector.broadcast %cst_50 : f32 to vector<8x128xf32>
    %90 = arith.addf %89, %88 : vector<8x128xf32>
    %91 = arith.divf %89, %90 : vector<8x128xf32>
    %92 = vector.extract_strided_slice %79 {offsets = [0, 256], sizes = [8, 128], strides = [1, 1]} : vector<8x512xf32> to vector<8x128xf32>
    %93 = math.tanh %92 : vector<8x128xf32>
    %94 = vector.extract_strided_slice %79 {offsets = [0, 384], sizes = [8, 128], strides = [1, 1]} : vector<8x512xf32> to vector<8x128xf32>
    %95 = arith.negf %94 : vector<8x128xf32>
    %96 = math.exp %95 : vector<8x128xf32>
    %cst_51 = arith.constant 1.000000e+00 : f32
    %97 = vector.broadcast %cst_51 : f32 to vector<8x128xf32>
    %98 = arith.addf %97, %96 : vector<8x128xf32>
    %99 = arith.divf %97, %98 : vector<8x128xf32>
    %c1_52 = arith.constant 1 : index
    %c0_53 = arith.constant 0 : index
    %c0_54 = arith.constant 0 : index
    %100 = vector.load %arg16[%c1_52, %c0_53, %c0_54] : memref<2x8x128xf32, #tpu.memory_space<vmem>>, vector<1x8x128xf32>
    %101 = vector.shape_cast %100 : vector<1x8x128xf32> to vector<8x128xf32>
    %102 = arith.mulf %91, %101 : vector<8x128xf32>
    %103 = arith.mulf %85, %93 : vector<8x128xf32>
    %104 = arith.addf %102, %103 : vector<8x128xf32>
    %105 = math.tanh %104 : vector<8x128xf32>
    %106 = arith.mulf %99, %105 : vector<8x128xf32>
    %c1_55 = arith.constant 1 : index
    %c0_56 = arith.constant 0 : index
    %c0_57 = arith.constant 0 : index
    %107 = vector.load %arg15[%c1_55, %c0_56, %c0_57] : memref<2x8x128xf32, #tpu.memory_space<vmem>>, vector<1x8x128xf32>
    %108 = vector.shape_cast %107 : vector<1x8x128xf32> to vector<8x128xf32>
    %109 = vector.shape_cast %106 : vector<8x128xf32> to vector<1x8x128xf32>
    tpu.vector_store %arg15[%c1_55, %c0_56, %c0_57], %109 {strides = array<i32>} : memref<2x8x128xf32, #tpu.memory_space<vmem>>, vector<1x8x128xf32>,
    %c1_58 = arith.constant 1 : index
    %c0_59 = arith.constant 0 : index
    %c0_60 = arith.constant 0 : index
    %110 = vector.load %arg16[%c1_58, %c0_59, %c0_60] : memref<2x8x128xf32, #tpu.memory_space<vmem>>, vector<1x8x128xf32>
    %111 = vector.shape_cast %110 : vector<1x8x128xf32> to vector<8x128xf32>
    %112 = vector.shape_cast %104 : vector<8x128xf32> to vector<1x8x128xf32>
    tpu.vector_store %arg16[%c1_58, %c0_59, %c0_60], %112 {strides = array<i32>} : memref<2x8x128xf32, #tpu.memory_space<vmem>>, vector<1x8x128xf32>,
    %c0_61 = arith.constant 0 : index
    %c0_62 = arith.constant 0 : index
    %113 = vector.load %arg10[%c0_61, %c0_62] : memref<128x128xf32, #tpu.memory_space<vmem>>, vector<128x128xf32>
    %cst_63 = arith.constant dense<0.000000e+00> : vector<8x128xf32>
    %114 = tpu.matmul %106, %113, %cst_63 {dimension_numbers = #tpu.dot_dimension_numbers<[1], [0], [0], [1], [0, 0, 1, 1], [], []>} : vector<8x128xf32>, vector<128x128xf32>, vector<8x128xf32> -> vector<8x128xf32>
    %c0_64 = arith.constant 0 : index
    %c0_65 = arith.constant 0 : index
    %115 = vector.load %arg11[%c0_64, %c0_65] : memref<1x128xf32, #tpu.memory_space<vmem>>, vector<1x128xf32>
    %116 = vector.broadcast %115 : vector<1x128xf32> to vector<8x128xf32>
    %117 = arith.addf %114, %116 : vector<8x128xf32>
    %cst_66 = arith.constant dense<0xFF800000> : vector<8xf32>
    %118 = vector.multi_reduction <maximumf>, %117, %cst_66 [1] : vector<8x128xf32> to vector<8xf32>
    %119 = vector.shape_cast %118 : vector<8xf32> to vector<8x1xf32>
    %120 = vector.broadcast %119 : vector<8x1xf32> to vector<8x128xf32>
    %121 = arith.subf %117, %120 : vector<8x128xf32>
    %122 = math.exp %121 : vector<8x128xf32>
    %cst_67 = arith.constant dense<0.000000e+00> : vector<8xf32>
    %123 = vector.multi_reduction <add>, %122, %cst_67 [1] : vector<8x128xf32> to vector<8xf32>
    %124 = vector.shape_cast %123 : vector<8xf32> to vector<8x1xf32>
    %125 = math.log %124 : vector<8x1xf32>
    %126 = vector.broadcast %125 : vector<8x1xf32> to vector<8x128xf32>
    %127 = arith.subf %121, %126 : vector<8x128xf32>
    %128 = tpu.iota {dimensions = array<i32: 1>} : vector<8x128xi32>
    %129 = vector.broadcast %119 : vector<8x1xf32> to vector<8x128xf32>
    %130 = arith.cmpf oeq, %117, %129 : vector<8x128xf32>
    %c128_i32 = arith.constant 128 : i32
    %131 = vector.broadcast %c128_i32 : i32 to vector<8x128xi32>
    %132 = arith.select %130, %128, %131 : vector<8x128xi1>, vector<8x128xi32>
    %cst_68 = arith.constant dense<2147483647> : vector<8xi32>
    %133 = vector.multi_reduction <minsi>, %132, %cst_68 [1] : vector<8x128xi32> to vector<8xi32>
    %134 = vector.shape_cast %133 : vector<8xi32> to vector<8x1xi32>
    %135 = vector.broadcast %134 : vector<8x1xi32> to vector<8x128xi32>
    %136 = arith.cmpi eq, %128, %135 : vector<8x128xi32>
    %137 = arith.extui %136 : vector<8x128xi1> to vector<8x128xi32>
    %138 = arith.sitofp %137 : vector<8x128xi32> to vector<8x128xf32>
    %c0_69 = arith.constant 0 : index
    %c0_70 = arith.constant 0 : index
    %139 = vector.load %arg17[%c0_69, %c0_70] : memref<8x128xf32, #tpu.memory_space<vmem>>, vector<8x128xf32>
    tpu.vector_store %arg17[%c0_69, %c0_70], %138 {strides = array<i32>} : memref<8x128xf32, #tpu.memory_space<vmem>>, vector<8x128xf32>,
    %c0_71 = arith.constant 0 : index
    %c0_72 = arith.constant 0 : index
    %140 = vector.load %arg12[%c0_71, %c0_72] : memref<8x128xf32, #tpu.memory_space<vmem>>, vector<8x128xf32>
    tpu.vector_store %arg12[%c0_71, %c0_72], %127 {strides = array<i32>} : memref<8x128xf32, #tpu.memory_space<vmem>>, vector<8x128xf32>,
    %c0_73 = arith.constant 0 : index
    %c0_74 = arith.constant 0 : index
    %141 = vector.load %arg13[%c0_73, %c0_74] : memref<8x128xf32, #tpu.memory_space<vmem>>, vector<8x128xf32>
    tpu.vector_store %arg13[%c0_73, %c0_74], %23 {strides = array<i32>} : memref<8x128xf32, #tpu.memory_space<vmem>>, vector<8x128xf32>,
    %142 = vector.shape_cast %134 : vector<8x1xi32> to vector<8x1xi32>
    %143 = vector.broadcast %142 : vector<8x1xi32> to vector<8x128xi32>
    %c0_75 = arith.constant 0 : index
    %c0_76 = arith.constant 0 : index
    %144 = vector.load %arg14[%c0_75, %c0_76] : memref<8x128xi32, #tpu.memory_space<vmem>>, vector<8x128xi32>
    tpu.vector_store %arg14[%c0_75, %c0_76], %143 {strides = array<i32>} : memref<8x128xi32, #tpu.memory_space<vmem>>, vector<8x128xi32>,
    return
  }
  func.func @transform_0(%arg0: i32, %arg1: i32) -> (i32, i32, i32) {
    %c0_i32 = arith.constant 0 : i32
    %c0_i32_0 = arith.constant 0 : i32
    %c0_i32_1 = arith.constant 0 : i32
    return %c0_i32, %arg0, %c0_i32_0 : i32, i32, i32
  }
  func.func @transform_1(%arg0: i32, %arg1: i32) -> (i32, i32, i32) {
    %c0_i32 = arith.constant 0 : i32
    %c0_i32_0 = arith.constant 0 : i32
    %c0_i32_1 = arith.constant 0 : i32
    return %c0_i32, %arg0, %c0_i32_0 : i32, i32, i32
  }
  func.func @transform_2(%arg0: i32, %arg1: i32) -> (i32, i32, i32) {
    %c0_i32 = arith.constant 0 : i32
    %c0_i32_0 = arith.constant 0 : i32
    %c0_i32_1 = arith.constant 0 : i32
    return %arg0, %c0_i32, %c0_i32_0 : i32, i32, i32
  }
  func.func @transform_3(%arg0: i32, %arg1: i32) -> (i32, i32) {
    %c0_i32 = arith.constant 0 : i32
    %c0_i32_0 = arith.constant 0 : i32
    %c0_i32_1 = arith.constant 0 : i32
    return %c0_i32, %c0_i32_0 : i32, i32
  }
  func.func @transform_4(%arg0: i32, %arg1: i32) -> (i32, i32) {
    %c0_i32 = arith.constant 0 : i32
    %c0_i32_0 = arith.constant 0 : i32
    %c0_i32_1 = arith.constant 0 : i32
    return %c0_i32, %c0_i32_0 : i32, i32
  }
  func.func @transform_5(%arg0: i32, %arg1: i32) -> (i32, i32) {
    %c0_i32 = arith.constant 0 : i32
    %c0_i32_0 = arith.constant 0 : i32
    %c0_i32_1 = arith.constant 0 : i32
    return %c0_i32, %c0_i32_0 : i32, i32
  }
  func.func @transform_6(%arg0: i32, %arg1: i32) -> (i32, i32, i32) {
    %c0_i32 = arith.constant 0 : i32
    %c0_i32_0 = arith.constant 0 : i32
    %c0_i32_1 = arith.constant 0 : i32
    %c0_i32_2 = arith.constant 0 : i32
    return %c0_i32, %c0_i32_0, %c0_i32_1 : i32, i32, i32
  }
  func.func @transform_7(%arg0: i32, %arg1: i32) -> (i32, i32, i32) {
    %c0_i32 = arith.constant 0 : i32
    %c0_i32_0 = arith.constant 0 : i32
    %c0_i32_1 = arith.constant 0 : i32
    %c0_i32_2 = arith.constant 0 : i32
    return %c0_i32, %c0_i32_0, %c0_i32_1 : i32, i32, i32
  }
  func.func @transform_8(%arg0: i32, %arg1: i32) -> (i32, i32) {
    %c0_i32 = arith.constant 0 : i32
    %c0_i32_0 = arith.constant 0 : i32
    %c0_i32_1 = arith.constant 0 : i32
    return %c0_i32, %c0_i32_0 : i32, i32
  }
  func.func @transform_9(%arg0: i32, %arg1: i32) -> (i32, i32) {
    %c0_i32 = arith.constant 0 : i32
    %c0_i32_0 = arith.constant 0 : i32
    %c0_i32_1 = arith.constant 0 : i32
    return %c0_i32, %c0_i32_0 : i32, i32
  }
  func.func @transform_10(%arg0: i32, %arg1: i32) -> (i32, i32) {
    %c0_i32 = arith.constant 0 : i32
    return %arg0, %arg1 : i32, i32
  }
  func.func @transform_11(%arg0: i32, %arg1: i32) -> (i32, i32) {
    %c0_i32 = arith.constant 0 : i32
    return %arg0, %arg1 : i32, i32
  }
  func.func @transform_12(%arg0: i32, %arg1: i32) -> (i32, i32) {
    %c0_i32 = arith.constant 0 : i32
    return %arg0, %arg1 : i32, i32
  }
}

</mosaic_0001>

<llo_original>
// kernel: squeeze.3
$region0: #{squeeze.3}
  %s0 = inlined_call_operand.vmem [shape: f32[1,32,128], index: 0, kind: input, shape index: {}]
  %s1 = inlined_call_operand.vmem [shape: f32[32,4,32], index: 1, kind: output, shape index: {}]
  $region1: #{squeeze.3} parent=0
    #allocation0 [shape = 'u8[131072]{0}', space=vmem, size = 0x20000, scoped, tag = 'scoped mem for output reshape']
    %v2 = vld [vmem:[%s0] sm:$0xff]
    %vm3 = vcmask 261120
    %4 = vst.msk [vmem:[#allocation0] ss:$8 sm:$0xf] %vm3, %v2
    %5 = vst.msk [vmem:[#allocation0] ss:$8 sm:$0xf0] %vm3, %v2
    %s6 = scalar_lea.vmem %s0, 8
    %v7 = vld [vmem:[%s6] sm:$0xff]
    %vm8 = vcmask 261120
    %s9 = scalar_lea.vmem [#allocation0], 64
    %10 = vst.msk [vmem:[%s9] ss:$8 sm:$0xf] %vm8, %v7
    %s11 = scalar_lea.vmem [#allocation0], 64
    %12 = vst.msk [vmem:[%s11] ss:$8 sm:$0xf0] %vm8, %v7
    %s13 = scalar_lea.vmem %s0, 16
    %v14 = vld [vmem:[%s13] sm:$0xff]
    %vm15 = vcmask 261120
    %s16 = scalar_lea.vmem [#allocation0], 128
    %17 = vst.msk [vmem:[%s16] ss:$8 sm:$0xf] %vm15, %v14
    %s18 = scalar_lea.vmem [#allocation0], 128
    %19 = vst.msk [vmem:[%s18] ss:$8 sm:$0xf0] %vm15, %v14
    %s20 = scalar_lea.vmem %s0, 24
    %v21 = vld [vmem:[%s20] sm:$0xff]
    %vm22 = vcmask 261120
    %s23 = scalar_lea.vmem [#allocation0], 192
    %24 = vst.msk [vmem:[%s23] ss:$8 sm:$0xf] %vm22, %v21
    %s25 = scalar_lea.vmem [#allocation0], 192
    %26 = vst.msk [vmem:[%s25] ss:$8 sm:$0xf0] %vm22, %v21
    %v27 = vld [vmem:[%s0] sm:$0xff]
    %28 = vrot.lane.b32.xlu0 %v27, 96
    %v29 = vpop.permute.xlu0 %28
    %vm30 = vcmask 261120
    %s31 = scalar_lea.vmem [#allocation0], 1
    %32 = vst.msk [vmem:[%s31] ss:$8 sm:$0xf] %vm30, %v29
    %s33 = scalar_lea.vmem [#allocation0], 1
    %34 = vst.msk [vmem:[%s33] ss:$8 sm:$0xf0] %vm30, %v29
    %s35 = scalar_lea.vmem %s0, 8
    %v36 = vld [vmem:[%s35] sm:$0xff]
    %37 = vrot.lane.b32.xlu0 %v36, 96
    %v38 = vpop.permute.xlu0 %37
    %vm39 = vcmask 261120
    %s40 = scalar_lea.vmem [#allocation0], 65
    %41 = vst.msk [vmem:[%s40] ss:$8 sm:$0xf] %vm39, %v38
    %s42 = scalar_lea.vmem [#allocation0], 65
    %43 = vst.msk [vmem:[%s42] ss:$8 sm:$0xf0] %vm39, %v38
    %s44 = scalar_lea.vmem %s0, 16
    %v45 = vld [vmem:[%s44] sm:$0xff]
    %46 = vrot.lane.b32.xlu0 %v45, 96
    %v47 = vpop.permute.xlu0 %46
    %vm48 = vcmask 261120
    %s49 = scalar_lea.vmem [#allocation0], 129
    %50 = vst.msk [vmem:[%s49] ss:$8 sm:$0xf] %vm48, %v47
    %s51 = scalar_lea.vmem [#allocation0], 129
    %52 = vst.msk [vmem:[%s51] ss:$8 sm:$0xf0] %vm48, %v47
    %s53 = scalar_lea.vmem %s0, 24
    %v54 = vld [vmem:[%s53] sm:$0xff]
    %55 = vrot.lane.b32.xlu0 %v54, 96
    %v56 = vpop.permute.xlu0 %55
    %vm57 = vcmask 261120
    %s58 = scalar_lea.vmem [#allocation0], 193
    %59 = vst.msk [vmem:[%s58] ss:$8 sm:$0xf] %vm57, %v56
    %s60 = scalar_lea.vmem [#allocation0], 193
    %61 = vst.msk [vmem:[%s60] ss:$8 sm:$0xf0] %vm57, %v56
    %v62 = vld [vmem:[%s0] sm:$0xff]
    %63 = vrot.lane.b32.xlu0 %v62, 64
    %v64 = vpop.permute.xlu0 %63
    %vm65 = vcmask 261120
    %s66 = scalar_lea.vmem [#allocation0], 2
    %67 = vst.msk [vmem:[%s66] ss:$8 sm:$0xf] %vm65, %v64
    %s68 = scalar_lea.vmem [#allocation0], 2
    %69 = vst.msk [vmem:[%s68] ss:$8 sm:$0xf0] %vm65, %v64
    %s70 = scalar_lea.vmem %s0, 8
    %v71 = vld [vmem:[%s70] sm:$0xff]
    %72 = vrot.lane.b32.xlu0 %v71, 64
    %v73 = vpop.permute.xlu0 %72
    %vm74 = vcmask 261120
    %s75 = scalar_lea.vmem [#allocation0], 66
    %76 = vst.msk [vmem:[%s75] ss:$8 sm:$0xf] %vm74, %v73
    %s77 = scalar_lea.vmem [#allocation0], 66
    %78 = vst.msk [vmem:[%s77] ss:$8 sm:$0xf0] %vm74, %v73
    %s79 = scalar_lea.vmem %s0, 16
    %v80 = vld [vmem:[%s79] sm:$0xff]
    %81 = vrot.lane.b32.xlu0 %v80, 64
    %v82 = vpop.permute.xlu0 %81
    %vm83 = vcmask 261120
    %s84 = scalar_lea.vmem [#allocation0], 130
    %85 = vst.msk [vmem:[%s84] ss:$8 sm:$0xf] %vm83, %v82
    %s86 = scalar_lea.vmem [#allocation0], 130
    %87 = vst.msk [vmem:[%s86] ss:$8 sm:$0xf0] %vm83, %v82
    %s88 = scalar_lea.vmem %s0, 24
    %v89 = vld [vmem:[%s88] sm:$0xff]
    %90 = vrot.lane.b32.xlu0 %v89, 64
    %v91 = vpop.permute.xlu0 %90
    %vm92 = vcmask 261120
    %s93 = scalar_lea.vmem [#allocation0], 194
    %94 = vst.msk [vmem:[%s93] ss:$8 sm:$0xf] %vm92, %v91
    %s95 = scalar_lea.vmem [#allocation0], 194
    %96 = vst.msk [vmem:[%s95] ss:$8 sm:$0xf0] %vm92, %v91
    %v97 = vld [vmem:[%s0] sm:$0xff]
    %98 = vrot.lane.b32.xlu0 %v97, 32
    %v99 = vpop.permute.xlu0 %98
    %vm100 = vcmask 261120
    %s101 = scalar_lea.vmem [#allocation0], 3
    %102 = vst.msk [vmem:[%s101] ss:$8 sm:$0xf] %vm100, %v99
    %s103 = scalar_lea.vmem [#allocation0], 3
    %104 = vst.msk [vmem:[%s103] ss:$8 sm:$0xf0] %vm100, %v99
    %s105 = scalar_lea.vmem %s0, 8
    %v106 = vld [vmem:[%s105] sm:$0xff]
    %107 = vrot.lane.b32.xlu0 %v106, 32
    %v108 = vpop.permute.xlu0 %107
    %vm109 = vcmask 261120
    %s110 = scalar_lea.vmem [#allocation0], 67
    %111 = vst.msk [vmem:[%s110] ss:$8 sm:$0xf] %vm109, %v108
    %s112 = scalar_lea.vmem [#allocation0], 67
    %113 = vst.msk [vmem:[%s112] ss:$8 sm:$0xf0] %vm109, %v108
    %s114 = scalar_lea.vmem %s0, 16
    %v115 = vld [vmem:[%s114] sm:$0xff]
    %116 = vrot.lane.b32.xlu0 %v115, 32
    %v117 = vpop.permute.xlu0 %116
    %vm118 = vcmask 261120
    %s119 = scalar_lea.vmem [#allocation0], 131
    %120 = vst.msk [vmem:[%s119] ss:$8 sm:$0xf] %vm118, %v117
    %s121 = scalar_lea.vmem [#allocation0], 131
    %122 = vst.msk [vmem:[%s121] ss:$8 sm:$0xf0] %vm118, %v117
    %s123 = scalar_lea.vmem %s0, 24
    %v124 = vld [vmem:[%s123] sm:$0xff]
    %125 = vrot.lane.b32.xlu0 %v124, 32
    %v126 = vpop.permute.xlu0 %125
    %vm127 = vcmask 261120
    %s128 = scalar_lea.vmem [#allocation0], 195
    %129 = vst.msk [vmem:[%s128] ss:$8 sm:$0xf] %vm127, %v126
    %s130 = scalar_lea.vmem [#allocation0], 195
    %131 = vst.msk [vmem:[%s130] ss:$8 sm:$0xf0] %vm127, %v126
    %s133 = sshllo.u32 0, 4
    %v135 = vld [vmem:[#allocation0] sm:%s133]
    %s136 = sshllo.u32 0, 4
    %137 = vst [vmem:[%s1] sm:%s136] %v135
    %s138 = scalar_lea.vmem [#allocation0], 8
    %v139 = vld [vmem:[%s138] sm:%s133]
    %s140 = sshllo.u32 0, 4
    %s141 = scalar_lea.vmem %s1, 4
    %142 = vst [vmem:[%s141] sm:%s140] %v139
    %s143 = scalar_lea.vmem [#allocation0], 16
    %v144 = vld [vmem:[%s143] sm:%s133]
    %s145 = sshllo.u32 0, 4
    %s146 = smul.addr 4, 2
    %s147 = scalar_lea.vmem %s1, %s146
    %148 = vst [vmem:[%s147] sm:%s145] %v144
    %s149 = scalar_lea.vmem [#allocation0], 24
    %v150 = vld [vmem:[%s149] sm:%s133]
    %s151 = sshllo.u32 0, 4
    %s152 = smul.addr 4, 3
    %s153 = scalar_lea.vmem %s1, %s152
    %154 = vst [vmem:[%s153] sm:%s151] %v150
    %s155 = scalar_lea.vmem [#allocation0], 32
    %v156 = vld [vmem:[%s155] sm:%s133]
    %s157 = sshllo.u32 0, 4
    %s158 = smul.addr 4, 4
    %s159 = scalar_lea.vmem %s1, %s158
    %160 = vst [vmem:[%s159] sm:%s157] %v156
    %s161 = scalar_lea.vmem [#allocation0], 40
    %v162 = vld [vmem:[%s161] sm:%s133]
    %s163 = sshllo.u32 0, 4
    %s164 = smul.addr 4, 5
    %s165 = scalar_lea.vmem %s1, %s164
    %166 = vst [vmem:[%s165] sm:%s163] %v162
    %s167 = scalar_lea.vmem [#allocation0], 48
    %v168 = vld [vmem:[%s167] sm:%s133]
    %s169 = sshllo.u32 0, 4
    %s170 = smul.addr 4, 6
    %s171 = scalar_lea.vmem %s1, %s170
    %172 = vst [vmem:[%s171] sm:%s169] %v168
    %s173 = scalar_lea.vmem [#allocation0], 56
    %v174 = vld [vmem:[%s173] sm:%s133]
    %s175 = sshllo.u32 0, 4
    %s176 = smul.addr 4, 7
    %s177 = scalar_lea.vmem %s1, %s176
    %178 = vst [vmem:[%s177] sm:%s175] %v174
    %s179 = scalar_lea.vmem [#allocation0], 64
    %v180 = vld [vmem:[%s179] sm:%s133]
    %s181 = sshllo.u32 0, 4
    %s182 = smul.addr 4, 8
    %s183 = scalar_lea.vmem %s1, %s182
    %184 = vst [vmem:[%s183] sm:%s181] %v180
    %s185 = scalar_lea.vmem [#allocation0], 72
    %v186 = vld [vmem:[%s185] sm:%s133]
    %s187 = sshllo.u32 0, 4
    %s188 = smul.addr 4, 9
    %s189 = scalar_lea.vmem %s1, %s188
    %190 = vst [vmem:[%s189] sm:%s187] %v186
    %s191 = scalar_lea.vmem [#allocation0], 80
    %v192 = vld [vmem:[%s191] sm:%s133]
    %s193 = sshllo.u32 0, 4
    %s194 = smul.addr 4, 10
    %s195 = scalar_lea.vmem %s1, %s194
    %196 = vst [vmem:[%s195] sm:%s193] %v192
    %s197 = scalar_lea.vmem [#allocation0], 88
    %v198 = vld [vmem:[%s197] sm:%s133]
    %s199 = sshllo.u32 0, 4
    %s200 = smul.addr 4, 11
    %s201 = scalar_lea.vmem %s1, %s200
    %202 = vst [vmem:[%s201] sm:%s199] %v198
    %s203 = scalar_lea.vmem [#allocation0], 96
    %v204 = vld [vmem:[%s203] sm:%s133]
    %s205 = sshllo.u32 0, 4
    %s206 = smul.addr 4, 12
    %s207 = scalar_lea.vmem %s1, %s206
    %208 = vst [vmem:[%s207] sm:%s205] %v204
    %s209 = scalar_lea.vmem [#allocation0], 104
    %v210 = vld [vmem:[%s209] sm:%s133]
    %s211 = sshllo.u32 0, 4
    %s212 = smul.addr 4, 13
    %s213 = scalar_lea.vmem %s1, %s212
    %214 = vst [vmem:[%s213] sm:%s211] %v210
    %s215 = scalar_lea.vmem [#allocation0], 112
    %v216 = vld [vmem:[%s215] sm:%s133]
    %s217 = sshllo.u32 0, 4
    %s218 = smul.addr 4, 14
    %s219 = scalar_lea.vmem %s1, %s218
    %220 = vst [vmem:[%s219] sm:%s217] %v216
    %s221 = scalar_lea.vmem [#allocation0], 120
    %v222 = vld [vmem:[%s221] sm:%s133]
    %s223 = sshllo.u32 0, 4
    %s224 = smul.addr 4, 15
    %s225 = scalar_lea.vmem %s1, %s224
    %226 = vst [vmem:[%s225] sm:%s223] %v222
    %s227 = scalar_lea.vmem [#allocation0], 128
    %v228 = vld [vmem:[%s227] sm:%s133]
    %s229 = sshllo.u32 0, 4
    %s230 = smul.addr 4, 16
    %s231 = scalar_lea.vmem %s1, %s230
    %232 = vst [vmem:[%s231] sm:%s229] %v228
    %s233 = scalar_lea.vmem [#allocation0], 136
    %v234 = vld [vmem:[%s233] sm:%s133]
    %s235 = sshllo.u32 0, 4
    %s236 = smul.addr 4, 17
    %s237 = scalar_lea.vmem %s1, %s236
    %238 = vst [vmem:[%s237] sm:%s235] %v234
    %s239 = scalar_lea.vmem [#allocation0], 144
    %v240 = vld [vmem:[%s239] sm:%s133]
    %s241 = sshllo.u32 0, 4
    %s242 = smul.addr 4, 18
    %s243 = scalar_lea.vmem %s1, %s242
    %244 = vst [vmem:[%s243] sm:%s241] %v240
    %s245 = scalar_lea.vmem [#allocation0], 152
    %v246 = vld [vmem:[%s245] sm:%s133]
    %s247 = sshllo.u32 0, 4
    %s248 = smul.addr 4, 19
    %s249 = scalar_lea.vmem %s1, %s248
    %250 = vst [vmem:[%s249] sm:%s247] %v246
    %s251 = scalar_lea.vmem [#allocation0], 160
    %v252 = vld [vmem:[%s251] sm:%s133]
    %s253 = sshllo.u32 0, 4
    %s254 = smul.addr 4, 20
    %s255 = scalar_lea.vmem %s1, %s254
    %256 = vst [vmem:[%s255] sm:%s253] %v252
    %s257 = scalar_lea.vmem [#allocation0], 168
    %v258 = vld [vmem:[%s257] sm:%s133]
    %s259 = sshllo.u32 0, 4
    %s260 = smul.addr 4, 21
    %s261 = scalar_lea.vmem %s1, %s260
    %262 = vst [vmem:[%s261] sm:%s259] %v258
    %s263 = scalar_lea.vmem [#allocation0], 176
    %v264 = vld [vmem:[%s263] sm:%s133]
    %s265 = sshllo.u32 0, 4
    %s266 = smul.addr 4, 22
    %s267 = scalar_lea.vmem %s1, %s266
    %268 = vst [vmem:[%s267] sm:%s265] %v264
    %s269 = scalar_lea.vmem [#allocation0], 184
    %v270 = vld [vmem:[%s269] sm:%s133]
    %s271 = sshllo.u32 0, 4
    %s272 = smul.addr 4, 23
    %s273 = scalar_lea.vmem %s1, %s272
    %274 = vst [vmem:[%s273] sm:%s271] %v270
    %s275 = scalar_lea.vmem [#allocation0], 192
    %v276 = vld [vmem:[%s275] sm:%s133]
    %s277 = sshllo.u32 0, 4
    %s278 = smul.addr 4, 24
    %s279 = scalar_lea.vmem %s1, %s278
    %280 = vst [vmem:[%s279] sm:%s277] %v276
    %s281 = scalar_lea.vmem [#allocation0], 200
    %v282 = vld [vmem:[%s281] sm:%s133]
    %s283 = sshllo.u32 0, 4
    %s284 = smul.addr 4, 25
    %s285 = scalar_lea.vmem %s1, %s284
    %286 = vst [vmem:[%s285] sm:%s283] %v282
    %s287 = scalar_lea.vmem [#allocation0], 208
    %v288 = vld [vmem:[%s287] sm:%s133]
    %s289 = sshllo.u32 0, 4
    %s290 = smul.addr 4, 26
    %s291 = scalar_lea.vmem %s1, %s290
    %292 = vst [vmem:[%s291] sm:%s289] %v288
    %s293 = scalar_lea.vmem [#allocation0], 216
    %v294 = vld [vmem:[%s293] sm:%s133]
    %s295 = sshllo.u32 0, 4
    %s296 = smul.addr 4, 27
    %s297 = scalar_lea.vmem %s1, %s296
    %298 = vst [vmem:[%s297] sm:%s295] %v294
    %s299 = scalar_lea.vmem [#allocation0], 224
    %v300 = vld [vmem:[%s299] sm:%s133]
    %s301 = sshllo.u32 0, 4
    %s302 = smul.addr 4, 28
    %s303 = scalar_lea.vmem %s1, %s302
    %304 = vst [vmem:[%s303] sm:%s301] %v300
    %s305 = scalar_lea.vmem [#allocation0], 232
    %v306 = vld [vmem:[%s305] sm:%s133]
    %s307 = sshllo.u32 0, 4
    %s308 = smul.addr 4, 29
    %s309 = scalar_lea.vmem %s1, %s308
    %310 = vst [vmem:[%s309] sm:%s307] %v306
    %s311 = scalar_lea.vmem [#allocation0], 240
    %v312 = vld [vmem:[%s311] sm:%s133]
    %s313 = sshllo.u32 0, 4
    %s314 = smul.addr 4, 30
    %s315 = scalar_lea.vmem %s1, %s314
    %316 = vst [vmem:[%s315] sm:%s313] %v312
    %s317 = scalar_lea.vmem [#allocation0], 248
    %v318 = vld [vmem:[%s317] sm:%s133]
    %s319 = sshllo.u32 0, 4
    %s320 = smul.addr 4, 31
    %s321 = scalar_lea.vmem %s1, %s320
    %322 = vst [vmem:[%s321] sm:%s319] %v318

// kernel: decoder_rnn_forward.1
$region0: #{decoder_rnn_forward.1}
  #allocation0 [shape = 'u32[]', space=smem, size = 0x4, offset = 0x4, fixed_abs, tag = 'smem constant byte address 0x4 - core index']
  #allocation1 [shape = 'u32[144,128]{1,0:T(1,128)}', space=vmem, size = 0x12000, scoped, tag = 'internal scratch']
  #allocation2 [shape = 'f32[2,8,128]{2,1,0:T(8,128)}', space=vmem, size = 0x2000, scoped, tag = 'scratch operand']
  #allocation3 [shape = 'f32[2,8,128]{2,1,0:T(8,128)}', space=vmem, size = 0x2000, scoped, tag = 'scratch operand']
  #allocation4 [shape = 'f32[8,128]{1,0:T(8,128)}', space=vmem, size = 0x1000, scoped, tag = 'scratch operand']
  %s0 = inlined_call_operand.vmem [shape: f32[1,8,128], index: 0, kind: input, shape index: {}]
  %s1 = inlined_call_operand.vmem [shape: f32[1,8,128], index: 1, kind: input, shape index: {}]
  %s2 = inlined_call_operand.vmem [shape: f32[8,128,128], index: 2, kind: input, shape index: {}]
  %s3 = inlined_call_operand.vmem [shape: f32[1,128], index: 3, kind: input, shape index: {}]
  %s4 = inlined_call_operand.vmem [shape: f32[128,128], index: 4, kind: input, shape index: {}]
  %s5 = inlined_call_operand.vmem [shape: f32[384,512], index: 5, kind: input, shape index: {}]
  %s6 = inlined_call_operand.vmem [shape: f32[1,256,512], index: 6, kind: input, shape index: {}]
  %s7 = inlined_call_operand.vmem [shape: f32[2,1,512], index: 7, kind: input, shape index: {}]
  %s8 = inlined_call_operand.vmem [shape: f32[128,128], index: 8, kind: input, shape index: {}]
  %s9 = inlined_call_operand.vmem [shape: f32[1,128], index: 9, kind: input, shape index: {}]
  %s10 = inlined_call_operand.vmem [shape: f32[8,1024], index: 10, kind: output, shape index: {0}]
  %s11 = inlined_call_operand.vmem [shape: f32[8,1024], index: 11, kind: output, shape index: {1}]
  %s12 = inlined_call_operand.vmem [shape: s32[8,1024], index: 12, kind: output, shape index: {2}]
  %13 = xla_tuple %s10, %s11, %s12
  %s14 = sld [smem:[#allocation0]]
  $region93: #{decoder_rnn_forward.1} parent=0
    _
  %s16 = ssub.s32 1, %s14
  %s17 = scalar_select 0, %s16, %s14
  loop: start=0, step=1, limit=10
  $region2: #{decoder_rnn_forward.1} parent=0 // loop_pre_header
    _
  $region3: #{decoder_rnn_forward.1} parent=0 // loop_header
    %s19 = sphi 0, %s23
    %p20 = scmp.ge.s32.totalorder %s19, 10
    %s26 = sphi 0, %s38
    %s27 = sphi 0, %s34
    %s28 = sphi 0, %s26
    %s29 = sphi 0, %s27
    %s30 = sphi 0, %s28
    %s31 = sphi 0, %s29
    %s41 = sphi 0, %s43
    %s44 = sphi 0, %s41
    %s45 = sphi 0, %s44
    %s61 = sphi 0, %s45
    %s67 = sphi 0, %s69
    %s70 = sphi 0, %s67
    %s71 = sphi 0, %s70
    %s87 = sphi 0, %s71
    %s93 = sphi 0, %s95
    %s96 = sphi 0, %s93
    %s97 = sphi 0, %s96
    %s113 = sphi 0, %s97
    %s117 = sphi 0, %s117
    %s119 = sphi 0, %s117
    %s120 = sphi 0, %s119
    %s134 = sphi 0, %s120
    %s138 = sphi 0, %s138
    %s140 = sphi 0, %s138
    %s141 = sphi 0, %s140
    %s155 = sphi 0, %s141
    %s159 = sphi 0, %s159
    %s161 = sphi 0, %s159
    %s162 = sphi 0, %s161
    %s176 = sphi 0, %s162
    %s180 = sphi 0, %s180
    %s182 = sphi 0, %s180
    %s183 = sphi 0, %s182
    %s197 = sphi 0, %s183
    %s201 = sphi 0, %s201
    %s203 = sphi 0, %s201
    %s204 = sphi 0, %s203
    %s218 = sphi 0, %s204
    %s222 = sphi 0, %s222
    %s224 = sphi 0, %s222
    %s225 = sphi 0, %s224
    %s239 = sphi 0, %s225
    %s243 = sphi 0, %s243
    %s245 = sphi 0, %s243
    %s246 = sphi 0, %s245
    %s260 = sphi 0, %s246
    %s268 = sphi 0, %s270
    %s271 = sphi 0, %s268
    %s272 = sphi 0, %s271
    %s288 = sphi 0, %s272
    %s296 = sphi 0, %s298
    %s299 = sphi 0, %s296
    %s300 = sphi 0, %s299
    %s316 = sphi 0, %s300
    %s324 = sphi 0, %s326
    %s327 = sphi 0, %s324
    %s328 = sphi 0, %s327
    %s344 = sphi 0, %s328
  $region4: #{decoder_rnn_forward.1} parent=0 // loop_header_branch
    %22 = sbr.rel (%p20) target = $region8
  $region5: #{decoder_rnn_forward.1} parent=0 // loop_body
    %s24 = ssub.s32 %s19, 1
    %s25 = ssub.s32 %s19, 2
    %s32 = sadd.s32 1, %s27
    %p33 = scmp.ge.s32.totalorder %s32, 8
    %s34 = scalar_select %p33, 0, %s32
    %s35 = sadd.s32 1, %s26
    %s36 = scalar_select %p33, %s35, %s26
    %p37 = scmp.ge.s32.totalorder %s36, 1
    %s38 = scalar_select %p37, 0, %s36
    %s39 = ssub.s32 %s26, %s38
    %p40 = scmp.eq.s32.totalorder %s39, 0
    %s42 = sadd.s32 %s41, 1
    %s43 = scalar_select %p40, %s41, %s42
    %p46 = pneg %p40
    %p47 = scmp.eq.s32.totalorder %s19, 7
    %p48 = por %p46, %p47
    %p49 = scmp.ne.s32.totalorder %s41, %s44
    %p50 = scmp.eq.s32.totalorder %s19, 0
    %p51 = por %p49, %p50
    %p52 = scmp.ne.s32.totalorder %s41, %s44
    %p53 = scmp.eq.s32.totalorder %s24, 7
    %p54 = por %p52, %p53
    %p55 = scmp.ne.s32.totalorder %s44, %s45
    %p56 = scmp.eq.s32.totalorder %s24, 0
    %p57 = por %p55, %p56
    %p58 = scmp.ne.s32.totalorder %s44, %s45
    %p59 = scmp.eq.s32.totalorder %s25, 7
    %p60 = por %p58, %p59
    %p62 = scmp.ne.s32.totalorder %s45, %s61
    %p63 = scmp.eq.s32.totalorder %s25, 0
    %p64 = por %p62, %p63
    %s65 = ssub.s32 %s26, %s38
    %p66 = scmp.eq.s32.totalorder %s65, 0
    %s68 = sadd.s32 %s67, 1
    %s69 = scalar_select %p66, %s67, %s68
    %p72 = pneg %p66
    %p73 = scmp.eq.s32.totalorder %s19, 7
    %p74 = por %p72, %p73
    %p75 = scmp.ne.s32.totalorder %s67, %s70
    %p76 = scmp.eq.s32.totalorder %s19, 0
    %p77 = por %p75, %p76
    %p78 = scmp.ne.s32.totalorder %s67, %s70
    %p79 = scmp.eq.s32.totalorder %s24, 7
    %p80 = por %p78, %p79
    %p81 = scmp.ne.s32.totalorder %s70, %s71
    %p82 = scmp.eq.s32.totalorder %s24, 0
    %p83 = por %p81, %p82
    %p84 = scmp.ne.s32.totalorder %s70, %s71
    %p85 = scmp.eq.s32.totalorder %s25, 7
    %p86 = por %p84, %p85
    %p88 = scmp.ne.s32.totalorder %s71, %s87
    %p89 = scmp.eq.s32.totalorder %s25, 0
    %p90 = por %p88, %p89
    %s91 = ssub.s32 %s26, %s38
    %p92 = scmp.eq.s32.totalorder %s91, 0
    %s94 = sadd.s32 %s93, 1
    %s95 = scalar_select %p92, %s93, %s94
    %p98 = pneg %p92
    %p99 = scmp.eq.s32.totalorder %s19, 7
    %p100 = por %p98, %p99
    %p101 = scmp.ne.s32.totalorder %s93, %s96
    %p102 = scmp.eq.s32.totalorder %s19, 0
    %p103 = por %p101, %p102
    %p104 = scmp.ne.s32.totalorder %s93, %s96
    %p105 = scmp.eq.s32.totalorder %s24, 7
    %p106 = por %p104, %p105
    %p107 = scmp.ne.s32.totalorder %s96, %s97
    %p108 = scmp.eq.s32.totalorder %s24, 0
    %p109 = por %p107, %p108
    %p110 = scmp.ne.s32.totalorder %s96, %s97
    %p111 = scmp.eq.s32.totalorder %s25, 7
    %p112 = por %p110, %p111
    %p114 = scmp.ne.s32.totalorder %s97, %s113
    %p115 = scmp.eq.s32.totalorder %s25, 0
    %p116 = por %p114, %p115
    %s118 = sadd.s32 %s117, 1
    %p121 = scmp.eq.s32.totalorder %s19, 7
    %p122 = scmp.ne.s32.totalorder %s117, %s119
    %p123 = scmp.eq.s32.totalorder %s19, 0
    %p124 = por %p122, %p123
    %p125 = scmp.ne.s32.totalorder %s117, %s119
    %p126 = scmp.eq.s32.totalorder %s24, 7
    %p127 = por %p125, %p126
    %p128 = scmp.ne.s32.totalorder %s119, %s120
    %p129 = scmp.eq.s32.totalorder %s24, 0
    %p130 = por %p128, %p129
    %p131 = scmp.ne.s32.totalorder %s119, %s120
    %p132 = scmp.eq.s32.totalorder %s25, 7
    %p133 = por %p131, %p132
    %p135 = scmp.ne.s32.totalorder %s120, %s134
    %p136 = scmp.eq.s32.totalorder %s25, 0
    %p137 = por %p135, %p136
    %s139 = sadd.s32 %s138, 1
    %p142 = scmp.eq.s32.totalorder %s19, 7
    %p143 = scmp.ne.s32.totalorder %s138, %s140
    %p144 = scmp.eq.s32.totalorder %s19, 0
    %p145 = por %p143, %p144
    %p146 = scmp.ne.s32.totalorder %s138, %s140
    %p147 = scmp.eq.s32.totalorder %s24, 7
    %p148 = por %p146, %p147
    %p149 = scmp.ne.s32.totalorder %s140, %s141
    %p150 = scmp.eq.s32.totalorder %s24, 0
    %p151 = por %p149, %p150
    %p152 = scmp.ne.s32.totalorder %s140, %s141
    %p153 = scmp.eq.s32.totalorder %s25, 7
    %p154 = por %p152, %p153
    %p156 = scmp.ne.s32.totalorder %s141, %s155
    %p157 = scmp.eq.s32.totalorder %s25, 0
    %p158 = por %p156, %p157
    %s160 = sadd.s32 %s159, 1
    %p163 = scmp.eq.s32.totalorder %s19, 7
    %p164 = scmp.ne.s32.totalorder %s159, %s161
    %p165 = scmp.eq.s32.totalorder %s19, 0
    %p166 = por %p164, %p165
    %p167 = scmp.ne.s32.totalorder %s159, %s161
    %p168 = scmp.eq.s32.totalorder %s24, 7
    %p169 = por %p167, %p168
    %p170 = scmp.ne.s32.totalorder %s161, %s162
    %p171 = scmp.eq.s32.totalorder %s24, 0
    %p172 = por %p170, %p171
    %p173 = scmp.ne.s32.totalorder %s161, %s162
    %p174 = scmp.eq.s32.totalorder %s25, 7
    %p175 = por %p173, %p174
    %p177 = scmp.ne.s32.totalorder %s162, %s176
    %p178 = scmp.eq.s32.totalorder %s25, 0
    %p179 = por %p177, %p178
    %s181 = sadd.s32 %s180, 1
    %p184 = scmp.eq.s32.totalorder %s19, 7
    %p185 = scmp.ne.s32.totalorder %s180, %s182
    %p186 = scmp.eq.s32.totalorder %s19, 0
    %p187 = por %p185, %p186
    %p188 = scmp.ne.s32.totalorder %s180, %s182
    %p189 = scmp.eq.s32.totalorder %s24, 7
    %p190 = por %p188, %p189
    %p191 = scmp.ne.s32.totalorder %s182, %s183
    %p192 = scmp.eq.s32.totalorder %s24, 0
    %p193 = por %p191, %p192
    %p194 = scmp.ne.s32.totalorder %s182, %s183
    %p195 = scmp.eq.s32.totalorder %s25, 7
    %p196 = por %p194, %p195
    %p198 = scmp.ne.s32.totalorder %s183, %s197
    %p199 = scmp.eq.s32.totalorder %s25, 0
    %p200 = por %p198, %p199
    %s202 = sadd.s32 %s201, 1
    %p205 = scmp.eq.s32.totalorder %s19, 7
    %p206 = scmp.ne.s32.totalorder %s201, %s203
    %p207 = scmp.eq.s32.totalorder %s19, 0
    %p208 = por %p206, %p207
    %p209 = scmp.ne.s32.totalorder %s201, %s203
    %p210 = scmp.eq.s32.totalorder %s24, 7
    %p211 = por %p209, %p210
    %p212 = scmp.ne.s32.totalorder %s203, %s204
    %p213 = scmp.eq.s32.totalorder %s24, 0
    %p214 = por %p212, %p213
    %p215 = scmp.ne.s32.totalorder %s203, %s204
    %p216 = scmp.eq.s32.totalorder %s25, 7
    %p217 = por %p215, %p216
    %p219 = scmp.ne.s32.totalorder %s204, %s218
    %p220 = scmp.eq.s32.totalorder %s25, 0
    %p221 = por %p219, %p220
    %s223 = sadd.s32 %s222, 1
    %p226 = scmp.eq.s32.totalorder %s19, 7
    %p227 = scmp.ne.s32.totalorder %s222, %s224
    %p228 = scmp.eq.s32.totalorder %s19, 0
    %p229 = por %p227, %p228
    %p230 = scmp.ne.s32.totalorder %s222, %s224
    %p231 = scmp.eq.s32.totalorder %s24, 7
    %p232 = por %p230, %p231
    %p233 = scmp.ne.s32.totalorder %s224, %s225
    %p234 = scmp.eq.s32.totalorder %s24, 0
    %p235 = por %p233, %p234
    %p236 = scmp.ne.s32.totalorder %s224, %s225
    %p237 = scmp.eq.s32.totalorder %s25, 7
    %p238 = por %p236, %p237
    %p240 = scmp.ne.s32.totalorder %s225, %s239
    %p241 = scmp.eq.s32.totalorder %s25, 0
    %p242 = por %p240, %p241
    %s244 = sadd.s32 %s243, 1
    %p247 = scmp.eq.s32.totalorder %s19, 7
    %p248 = scmp.ne.s32.totalorder %s243, %s245
    %p249 = scmp.eq.s32.totalorder %s19, 0
    %p250 = por %p248, %p249
    %p251 = scmp.ne.s32.totalorder %s243, %s245
    %p252 = scmp.eq.s32.totalorder %s24, 7
    %p253 = por %p251, %p252
    %p254 = scmp.ne.s32.totalorder %s245, %s246
    %p255 = scmp.eq.s32.totalorder %s24, 0
    %p256 = por %p254, %p255
    %p257 = scmp.ne.s32.totalorder %s245, %s246
    %p258 = scmp.eq.s32.totalorder %s25, 7
    %p259 = por %p257, %p258
    %p261 = scmp.ne.s32.totalorder %s246, %s260
    %p262 = scmp.eq.s32.totalorder %s25, 0
    %p263 = por %p261, %p262
    %s264 = ssub.s32 %s26, %s38
    %s265 = ssub.s32 %s27, %s34
    %s266 = sor.u32 %s264, %s265
    %p267 = scmp.eq.s32.totalorder %s266, 0
    %s269 = sadd.s32 %s268, 1
    %s270 = scalar_select %p267, %s268, %s269
    %p273 = pneg %p267
    %p274 = scmp.eq.s32.totalorder %s19, 7
    %p275 = por %p273, %p274
    %p276 = scmp.ne.s32.totalorder %s268, %s271
    %p277 = scmp.eq.s32.totalorder %s19, 0
    %p278 = por %p276, %p277
    %p279 = scmp.ne.s32.totalorder %s268, %s271
    %p280 = scmp.eq.s32.totalorder %s24, 7
    %p281 = por %p279, %p280
    %p282 = scmp.ne.s32.totalorder %s271, %s272
    %p283 = scmp.eq.s32.totalorder %s24, 0
    %p284 = por %p282, %p283
    %p285 = scmp.ne.s32.totalorder %s271, %s272
    %p286 = scmp.eq.s32.totalorder %s25, 7
    %p287 = por %p285, %p286
    %p289 = scmp.ne.s32.totalorder %s272, %s288
    %p290 = scmp.eq.s32.totalorder %s25, 0
    %p291 = por %p289, %p290
    %s292 = ssub.s32 %s26, %s38
    %s293 = ssub.s32 %s27, %s34
    %s294 = sor.u32 %s292, %s293
    %p295 = scmp.eq.s32.totalorder %s294, 0
    %s297 = sadd.s32 %s296, 1
    %s298 = scalar_select %p295, %s296, %s297
    %p301 = pneg %p295
    %p302 = scmp.eq.s32.totalorder %s19, 7
    %p303 = por %p301, %p302
    %p304 = scmp.ne.s32.totalorder %s296, %s299
    %p305 = scmp.eq.s32.totalorder %s19, 0
    %p306 = por %p304, %p305
    %p307 = scmp.ne.s32.totalorder %s296, %s299
    %p308 = scmp.eq.s32.totalorder %s24, 7
    %p309 = por %p307, %p308
    %p310 = scmp.ne.s32.totalorder %s299, %s300
    %p311 = scmp.eq.s32.totalorder %s24, 0
    %p312 = por %p310, %p311
    %p313 = scmp.ne.s32.totalorder %s299, %s300
    %p314 = scmp.eq.s32.totalorder %s25, 7
    %p315 = por %p313, %p314
    %p317 = scmp.ne.s32.totalorder %s300, %s316
    %p318 = scmp.eq.s32.totalorder %s25, 0
    %p319 = por %p317, %p318
    %s320 = ssub.s32 %s26, %s38
    %s321 = ssub.s32 %s27, %s34
    %s322 = sor.u32 %s320, %s321
    %p323 = scmp.eq.s32.totalorder %s322, 0
    %s325 = sadd.s32 %s324, 1
    %s326 = scalar_select %p323, %s324, %s325
    %p329 = pneg %p323
    %p330 = scmp.eq.s32.totalorder %s19, 7
    %p331 = por %p329, %p330
    %p332 = scmp.ne.s32.totalorder %s324, %s327
    %p333 = scmp.eq.s32.totalorder %s19, 0
    %p334 = por %p332, %p333
    %p335 = scmp.ne.s32.totalorder %s324, %s327
    %p336 = scmp.eq.s32.totalorder %s24, 7
    %p337 = por %p335, %p336
    %p338 = scmp.ne.s32.totalorder %s327, %s328
    %p339 = scmp.eq.s32.totalorder %s24, 0
    %p340 = por %p338, %p339
    %p341 = scmp.ne.s32.totalorder %s327, %s328
    %p342 = scmp.eq.s32.totalorder %s25, 7
    %p343 = por %p341, %p342
    %p345 = scmp.ne.s32.totalorder %s328, %s344
    %p346 = scmp.eq.s32.totalorder %s25, 0
    %p347 = por %p345, %p346
    %p348 = scmp.le.s32.totalorder 1, %s19
    %p349 = scmp.lt.s32.totalorder %s19, 9
    %p350 = pnand %p348, %p349
    %p351 = pneg %p350
    // Predicated region
    $region9: #{decoder_rnn_forward.1} parent=5 // pred_check
      _
    $region10: #{decoder_rnn_forward.1} parent=5 // pred_check_branch
      %353 = sbr.rel (%p350) target = $region12
    $region11: #{decoder_rnn_forward.1} parent=5 // pred_region
      %s354 = ssub.s32 %s19, 1
      // Predicated region
      $region13: #{decoder_rnn_forward.1} parent=11 // pred_check
        %p355 = pneg %p57
      $region14: #{decoder_rnn_forward.1} parent=11 // pred_check_branch
        %357 = sbr.rel (%p355) target = $region16
      $region15: #{decoder_rnn_forward.1} parent=11 // pred_region
        %p358 = scmp.lt.s32.totalorder %s28, 0
        %s359 = scalar_select %p358, %s28, 0
        %s360 = smul.addr %s359, 8
        %s361 = scalar_lea.vmem %s0, %s360
      $region16: #{decoder_rnn_forward.1} parent=11 // pred_fallthru
        _
      // Predicated region
      $region17: #{decoder_rnn_forward.1} parent=11 // pred_check
        %p362 = pneg %p83
      $region18: #{decoder_rnn_forward.1} parent=11 // pred_check_branch
        %364 = sbr.rel (%p362) target = $region20
      $region19: #{decoder_rnn_forward.1} parent=11 // pred_region
        %p365 = scmp.lt.s32.totalorder %s28, 0
        %s366 = scalar_select %p365, %s28, 0
        %s367 = smul.addr %s366, 8
        %s368 = scalar_lea.vmem %s1, %s367
      $region20: #{decoder_rnn_forward.1} parent=11 // pred_fallthru
        _
      // Predicated region
      $region21: #{decoder_rnn_forward.1} parent=11 // pred_check
        %p369 = pneg %p109
      $region22: #{decoder_rnn_forward.1} parent=11 // pred_check_branch
        %371 = sbr.rel (%p369) target = $region24
      $region23: #{decoder_rnn_forward.1} parent=11 // pred_region
        %s372 = smul.u32 8, %s28
        %p373 = scmp.lt.s32.totalorder %s372, 7
        %s374 = scalar_select %p373, %s372, 7
        %s375 = smul.addr %s374, 16
        %s376 = smul.addr %s375, 8
        %s377 = scalar_lea.vmem %s2, %s376
        %s378 = smul.u32 8, %s28
      $region24: #{decoder_rnn_forward.1} parent=11 // pred_fallthru
        _
      // Predicated region
      $region25: #{decoder_rnn_forward.1} parent=11 // pred_check
        %p379 = pneg %p130
      $region26: #{decoder_rnn_forward.1} parent=11 // pred_check_branch
        %381 = sbr.rel (%p379) target = $region28
      $region27: #{decoder_rnn_forward.1} parent=11 // pred_region
        _
      $region28: #{decoder_rnn_forward.1} parent=11 // pred_fallthru
        _
      // Predicated region
      $region29: #{decoder_rnn_forward.1} parent=11 // pred_check
        %p382 = pneg %p151
      $region30: #{decoder_rnn_forward.1} parent=11 // pred_check_branch
        %384 = sbr.rel (%p382) target = $region32
      $region31: #{decoder_rnn_forward.1} parent=11 // pred_region
        _
      $region32: #{decoder_rnn_forward.1} parent=11 // pred_fallthru
        _
      // Predicated region
      $region33: #{decoder_rnn_forward.1} parent=11 // pred_check
        %p385 = pneg %p172
      $region34: #{decoder_rnn_forward.1} parent=11 // pred_check_branch
        %387 = sbr.rel (%p385) target = $region36
      $region35: #{decoder_rnn_forward.1} parent=11 // pred_region
        _
      $region36: #{decoder_rnn_forward.1} parent=11 // pred_fallthru
        _
      // Predicated region
      $region37: #{decoder_rnn_forward.1} parent=11 // pred_check
        %p388 = pneg %p193
      $region38: #{decoder_rnn_forward.1} parent=11 // pred_check_branch
        %390 = sbr.rel (%p388) target = $region40
      $region39: #{decoder_rnn_forward.1} parent=11 // pred_region
        _
      $region40: #{decoder_rnn_forward.1} parent=11 // pred_fallthru
        _
      // Predicated region
      $region41: #{decoder_rnn_forward.1} parent=11 // pred_check
        %p391 = pneg %p214
      $region42: #{decoder_rnn_forward.1} parent=11 // pred_check_branch
        %393 = sbr.rel (%p391) target = $region44
      $region43: #{decoder_rnn_forward.1} parent=11 // pred_region
        _
      $region44: #{decoder_rnn_forward.1} parent=11 // pred_fallthru
        _
      // Predicated region
      $region45: #{decoder_rnn_forward.1} parent=11 // pred_check
        %p394 = pneg %p235
      $region46: #{decoder_rnn_forward.1} parent=11 // pred_check_branch
        %396 = sbr.rel (%p394) target = $region48
      $region47: #{decoder_rnn_forward.1} parent=11 // pred_region
        _
      $region48: #{decoder_rnn_forward.1} parent=11 // pred_fallthru
        _
      // Predicated region
      $region49: #{decoder_rnn_forward.1} parent=11 // pred_check
        %p397 = pneg %p256
      $region50: #{decoder_rnn_forward.1} parent=11 // pred_check_branch
        %399 = sbr.rel (%p397) target = $region52
      $region51: #{decoder_rnn_forward.1} parent=11 // pred_region
        _
      $region52: #{decoder_rnn_forward.1} parent=11 // pred_fallthru
        _
    $region12: #{decoder_rnn_forward.1} parent=5 // pred_fallthru
      _
    %p400 = scmp.lt.s32.totalorder %s19, 8
    // Predicated region
    $region53: #{decoder_rnn_forward.1} parent=5 // pred_check
      %p401 = pneg %p400
    $region54: #{decoder_rnn_forward.1} parent=5 // pred_check_branch
      %403 = sbr.rel (%p401) target = $region56
    $region55: #{decoder_rnn_forward.1} parent=5 // pred_region
      _
    $region56: #{decoder_rnn_forward.1} parent=5 // pred_fallthru
      _
    %p404 = scmp.le.s32.totalorder 1, %s19
    %p405 = scmp.lt.s32.totalorder %s19, 9
    %p406 = pnand %p404, %p405
    %p407 = pneg %p406
    // Predicated region
    $region57: #{decoder_rnn_forward.1} parent=5 // pred_check
      _
    $region58: #{decoder_rnn_forward.1} parent=5 // pred_check_branch
      %409 = sbr.rel (%p406) target = $region60
    $region59: #{decoder_rnn_forward.1} parent=5 // pred_region
      %s410 = ssub.s32 %s19, 1
      %p411 = scmp.lt.s32.totalorder %s28, 0
      %s412 = scalar_select %p411, %s28, 0
      %s413 = smul.addr %s412, 8
      %s414 = scalar_lea.vmem %s0, %s413
      %p415 = pneg %p57
      %p416 = pneg %p54
      %p417 = scmp.lt.s32.totalorder %s28, 0
      %s418 = scalar_select %p417, %s28, 0
      %s419 = smul.addr %s418, 8
      %s420 = scalar_lea.vmem %s1, %s419
      %p421 = pneg %p83
      %p422 = pneg %p80
      %s423 = smul.u32 8, %s28
      %p424 = scmp.lt.s32.totalorder %s423, 7
      %s425 = scalar_select %p424, %s423, 7
      %s426 = smul.addr %s425, 16
      %s427 = smul.addr %s426, 8
      %s428 = scalar_lea.vmem %s2, %s427
      %p429 = pneg %p109
      %p430 = pneg %p106
      %p431 = pneg %p130
      %p432 = pneg %p127
      %p433 = pneg %p151
      %p434 = pneg %p148
      %p435 = pneg %p172
      %p436 = pneg %p169
      %p437 = pneg %p193
      %p438 = pneg %p190
      %p439 = pneg %p214
      %p440 = pneg %p211
      %p441 = pneg %p235
      %p442 = pneg %p232
      %p443 = pneg %p256
      %p444 = pneg %p253
      %p445 = pneg %p284
      %p446 = pneg %p281
      %p447 = scmp.lt.s32.totalorder %s28, 0
      %s448 = scalar_select %p447, %s28, 0
      %p449 = scmp.lt.s32.totalorder %s29, 7
      %s450 = scalar_select %p449, %s29, 7
      %s451 = smul.addr %s448, 8
      %s452 = sadd.s32 %s450, %s451
      %s453 = smul.addr %s452, 8
      %s454 = scalar_lea.vmem %s10, %s453
      %p455 = pneg %p312
      %p456 = pneg %p309
      %p457 = scmp.lt.s32.totalorder %s28, 0
      %s458 = scalar_select %p457, %s28, 0
      %p459 = scmp.lt.s32.totalorder %s29, 7
      %s460 = scalar_select %p459, %s29, 7
      %s461 = smul.addr %s458, 8
      %s462 = sadd.s32 %s460, %s461
      %s463 = smul.addr %s462, 8
      %s464 = scalar_lea.vmem %s11, %s463
      %p465 = pneg %p340
      %p466 = pneg %p337
      %p467 = scmp.lt.s32.totalorder %s28, 0
      %s468 = scalar_select %p467, %s28, 0
      %p469 = scmp.lt.s32.totalorder %s29, 7
      %s470 = scalar_select %p469, %s29, 7
      %s471 = smul.addr %s468, 8
      %s472 = sadd.s32 %s470, %s471
      %s473 = smul.addr %s472, 8
      %s474 = scalar_lea.vmem %s12, %s473
      %p475 = scmp.lt.s32.totalorder %s28, 0
      %s476 = scalar_select %p475, %s28, 0
      %s477 = smul.addr %s476, 8
      %s478 = scalar_lea.vmem %s0, %s477
      %p479 = scmp.lt.s32.totalorder %s28, 0
      %s480 = scalar_select %p479, %s28, 0
      %s481 = smul.addr %s480, 8
      %s482 = scalar_lea.vmem %s1, %s481
      %s483 = smul.u32 8, %s28
      %p484 = scmp.lt.s32.totalorder %s483, 7
      %s485 = scalar_select %p484, %s483, 7
      %s486 = smul.addr %s485, 16
      %s487 = smul.addr %s486, 8
      %s488 = scalar_lea.vmem %s2, %s487
      %s489 = smul.u32 8, %s28
      %p490 = scmp.lt.s32.totalorder %s28, 0
      %s491 = scalar_select %p490, %s28, 0
      %p492 = scmp.lt.s32.totalorder %s29, 7
      %s493 = scalar_select %p492, %s29, 7
      %s494 = smul.addr %s491, 8
      %s495 = sadd.s32 %s493, %s494
      %s496 = smul.addr %s495, 8
      %s497 = scalar_lea.vmem %s10, %s496
      %p498 = scmp.lt.s32.totalorder %s28, 0
      %s499 = scalar_select %p498, %s28, 0
      %p500 = scmp.lt.s32.totalorder %s29, 7
      %s501 = scalar_select %p500, %s29, 7
      %s502 = smul.addr %s499, 8
      %s503 = sadd.s32 %s501, %s502
      %s504 = smul.addr %s503, 8
      %s505 = scalar_lea.vmem %s11, %s504
      %p506 = scmp.lt.s32.totalorder %s28, 0
      %s507 = scalar_select %p506, %s28, 0
      %p508 = scmp.lt.s32.totalorder %s29, 7
      %s509 = scalar_select %p508, %s29, 7
      %s510 = smul.addr %s507, 8
      %s511 = sadd.s32 %s509, %s510
      %s512 = smul.addr %s511, 8
      %s513 = scalar_lea.vmem %s12, %s512
      %p514 = scmp.eq.s32.totalorder %s29, 0
      // Predicated region
      $region61: #{decoder_rnn_forward.1} parent=59 // pred_check
        %p515 = pneg %p514
      $region62: #{decoder_rnn_forward.1} parent=59 // pred_check_branch
        %517 = sbr.rel (%p515) target = $region64
      $region63: #{decoder_rnn_forward.1} parent=59 // pred_region
        %v518 = vld [vmem:[%s478] sm:$0xff]
        %519 = vst [vmem:[#allocation2] sm:$0xff] %v518
        %v520 = vld [vmem:[%s482] sm:$0xff]
        %521 = vst [vmem:[#allocation3] sm:$0xff] %v520
        %v522 = vld [vmem:[%s478] sm:$0xff]
        %s523 = scalar_lea.vmem [#allocation2], 8
        %524 = vst [vmem:[%s523] sm:$0xff] %v522
        %v525 = vld [vmem:[%s482] sm:$0xff]
        %s526 = scalar_lea.vmem [#allocation3], 8
        %527 = vst [vmem:[%s526] sm:$0xff] %v525
        %v528 = vlaneseq
        %v529 = vand.u32 %v528, 127
        %vm530 = vcmp.eq.s32.totalorder %v529, 1
        %v531 = vsel %vm530, 1, 0
        %v532 = vcvt.s32.f32 %v531
        %533 = vst [vmem:[#allocation4] sm:$0xff] %v532
      $region64: #{decoder_rnn_forward.1} parent=59 // pred_fallthru
        _
      %v534 = vld [vmem:[#allocation4] sm:$0xff]
      %v535 = vld [vmem:[%s4] sm:$0xff]
      %v536 = vld [vmem:[%s4 + $0x8] sm:$0xff]
      %v537 = vld [vmem:[%s4 + $0x10] sm:$0xff]
      %v538 = vld [vmem:[%s4 + $0x18] sm:$0xff]
      %v539 = vld [vmem:[%s4 + $0x20] sm:$0xff]
      %v540 = vld [vmem:[%s4 + $0x28] sm:$0xff]
      %v541 = vld [vmem:[%s4 + $0x30] sm:$0xff]
      %v542 = vld [vmem:[%s4 + $0x38] sm:$0xff]
      %v543 = vld [vmem:[%s4 + $0x40] sm:$0xff]
      %v544 = vld [vmem:[%s4 + $0x48] sm:$0xff]
      %v545 = vld [vmem:[%s4 + $0x50] sm:$0xff]
      %v546 = vld [vmem:[%s4 + $0x58] sm:$0xff]
      %v547 = vld [vmem:[%s4 + $0x60] sm:$0xff]
      %v548 = vld [vmem:[%s4 + $0x68] sm:$0xff]
      %v549 = vld [vmem:[%s4 + $0x70] sm:$0xff]
      %v550 = vld [vmem:[%s4 + $0x78] sm:$0xff]
      %551 = vmatprep.subr.mxu0 0.0
      %552 = vmatpush1.msra.mxu0 %v535
      %553 = vmatprep.subr.mxu0 0.0
      %554 = vmatpush1.msra.mxu0 %v536
      %555 = vmatprep.subr.mxu0 0.0
      %556 = vmatpush1.msra.mxu0 %v537
      %557 = vmatprep.subr.mxu0 0.0
      %558 = vmatpush1.msra.mxu0 %v538
      %559 = vmatprep.subr.mxu0 0.0
      %560 = vmatpush1.msra.mxu0 %v539
      %561 = vmatprep.subr.mxu0 0.0
      %562 = vmatpush1.msra.mxu0 %v540
      %563 = vmatprep.subr.mxu0 0.0
      %564 = vmatpush1.msra.mxu0 %v541
      %565 = vmatprep.subr.mxu0 0.0
      %566 = vmatpush1.msra.mxu0 %v542
      %567 = vmatprep.subr.mxu0 0.0
      %568 = vmatpush1.msra.mxu0 %v543
      %569 = vmatprep.subr.mxu0 0.0
      %570 = vmatpush1.msra.mxu0 %v544
      %571 = vmatprep.subr.mxu0 0.0
      %572 = vmatpush1.msra.mxu0 %v545
      %573 = vmatprep.subr.mxu0 0.0
      %574 = vmatpush1.msra.mxu0 %v546
      %575 = vmatprep.subr.mxu0 0.0
      %576 = vmatpush1.msra.mxu0 %v547
      %577 = vmatprep.subr.mxu0 0.0
      %578 = vmatpush1.msra.mxu0 %v548
      %579 = vmatprep.subr.mxu0 0.0
      %580 = vmatpush1.msra.mxu0 %v549
      %581 = vmatprep.subr.mxu0 0.0
      %582 = vmatpush1.msra.mxu0 %v550
      %583 = vmatprep.subr.mxu0 0.0
      %584 = vmatpush1.msra.mxu0 0.0
      %585 = vmatprep.subr.mxu0 0.0
      %586 = vmatpush1.msra.mxu0 0.0
      %587 = vmatprep.subr.mxu0 0.0
      %588 = vmatpush1.msra.mxu0 0.0
      %589 = vmatprep.subr.mxu0 0.0
      %590 = vmatpush1.msra.mxu0 0.0
      %591 = vmatprep.subr.mxu0 0.0
      %592 = vmatpush1.msra.mxu0 0.0
      %593 = vmatprep.subr.mxu0 0.0
      %594 = vmatpush1.msra.mxu0 0.0
      %595 = vmatprep.subr.mxu0 0.0
      %596 = vmatpush1.msra.mxu0 0.0
      %597 = vmatprep.subr.mxu0 0.0
      %598 = vmatpush1.msra.mxu0 0.0
      %599 = vmatprep.subr.mxu0 0.0
      %600 = vmatpush1.msra.mxu0 0.0
      %601 = vmatprep.subr.mxu0 0.0
      %602 = vmatpush1.msra.mxu0 0.0
      %603 = vmatprep.subr.mxu0 0.0
      %604 = vmatpush1.msra.mxu0 0.0
      %605 = vmatprep.subr.mxu0 0.0
      %606 = vmatpush1.msra.mxu0 0.0
      %607 = vmatprep.subr.mxu0 0.0
      %608 = vmatpush1.msra.mxu0 0.0
      %609 = vmatprep.subr.mxu0 0.0
      %610 = vmatpush1.msra.mxu0 0.0
      %611 = vmatprep.subr.mxu0 0.0
      %612 = vmatpush1.msra.mxu0 0.0
      %613 = vmatprep.subr.mxu0 0.0
      %614 = vmatpush1.msra.mxu0 0.0
      %615 = vmatprep.mubr.f32.mxu0 0.0
      %616 = vmatmul.mubr.f32.gmra.mrb[0].mxu0 %v534
      %v617 = vpop.f32.mrb[0].mxu0
      %v618 = vadd.f32 0.0, %v617
      %v619 = vpop.f32.mrb[0].mxu0
      %620 = vdwg.mxu0
      %s621 = scalar_lea.vmem [#allocation2], 8
      %v622 = vld [vmem:[%s621] sm:$0xff]
      %v624 = vcombine.high %v622, %v622
      %v626 = vunpack.c.l.s4 1966171168
      %v627 = vunpack.c.0.s8 %v626
      %v628 = vlaneseq
      %v629 = vshrl.u32 %v628, 7
      %v630 = vsub.s32 %v627, %v629
      %v631 = vrot.slane %v622, %v630
      %v633 = vunpack.c.l.s4 1966171168
      %v634 = vunpack.c.0.s8 %v633
      %v635 = vlaneseq
      %v636 = vshrl.u32 %v635, 7
      %v637 = vsub.s32 %v634, %v636
      %v638 = vrot.slane %v624, %v637
      %v639 = vcombine.high %v631, %v631
      %v640 = vcombine.high %v638, %v638
      %v642 = vunpack.c.l.s4 1966171168
      %v643 = vunpack.c.0.s8 %v642
      %v644 = vlaneseq
      %v645 = vshrl.u32 %v644, 7
      %v646 = vsub.s32 %v643, %v645
      %v647 = vrot.slane %v631, %v646
      %v649 = vunpack.c.l.s4 1966171168
      %v650 = vunpack.c.0.s8 %v649
      %v651 = vlaneseq
      %v652 = vshrl.u32 %v651, 7
      %v653 = vsub.s32 %v650, %v652
      %v654 = vrot.slane %v638, %v653
      %v656 = vunpack.c.l.s4 1966171168
      %v657 = vunpack.c.0.s8 %v656
      %v658 = vlaneseq
      %v659 = vshrl.u32 %v658, 7
      %v660 = vsub.s32 %v657, %v659
      %v661 = vrot.slane %v639, %v660
      %v663 = vunpack.c.l.s4 1966171168
      %v664 = vunpack.c.0.s8 %v663
      %v665 = vlaneseq
      %v666 = vshrl.u32 %v665, 7
      %v667 = vsub.s32 %v664, %v666
      %v668 = vrot.slane %v640, %v667
      %v669 = vcombine.high %v647, %v647
      %v670 = vcombine.high %v654, %v654
      %v671 = vcombine.high %v661, %v661
      %v672 = vcombine.high %v668, %v668
      %v681 = vld [vmem:[%s488] sm:$0xff]
      %v682 = vld [vmem:[%s488 + $0x8] sm:$0xff]
      %v683 = vld [vmem:[%s488 + $0x10] sm:$0xff]
      %v684 = vld [vmem:[%s488 + $0x18] sm:$0xff]
      %v685 = vld [vmem:[%s488 + $0x20] sm:$0xff]
      %v686 = vld [vmem:[%s488 + $0x28] sm:$0xff]
      %v687 = vld [vmem:[%s488 + $0x30] sm:$0xff]
      %v688 = vld [vmem:[%s488 + $0x38] sm:$0xff]
      %v689 = vld [vmem:[%s488 + $0x40] sm:$0xff]
      %v690 = vld [vmem:[%s488 + $0x48] sm:$0xff]
      %v691 = vld [vmem:[%s488 + $0x50] sm:$0xff]
      %v692 = vld [vmem:[%s488 + $0x58] sm:$0xff]
      %v693 = vld [vmem:[%s488 + $0x60] sm:$0xff]
      %v694 = vld [vmem:[%s488 + $0x68] sm:$0xff]
      %v695 = vld [vmem:[%s488 + $0x70] sm:$0xff]
      %v696 = vld [vmem:[%s488 + $0x78] sm:$0xff]
      %v697 = vld [vmem:[%s488 + $0x80] sm:$0xff]
      %v698 = vld [vmem:[%s488 + $0x88] sm:$0xff]
      %v699 = vld [vmem:[%s488 + $0x90] sm:$0xff]
      %v700 = vld [vmem:[%s488 + $0x98] sm:$0xff]
      %v701 = vld [vmem:[%s488 + $0xa0] sm:$0xff]
      %v702 = vld [vmem:[%s488 + $0xa8] sm:$0xff]
      %v703 = vld [vmem:[%s488 + $0xb0] sm:$0xff]
      %v704 = vld [vmem:[%s488 + $0xb8] sm:$0xff]
      %v705 = vld [vmem:[%s488 + $0xc0] sm:$0xff]
      %v706 = vld [vmem:[%s488 + $0xc8] sm:$0xff]
      %v707 = vld [vmem:[%s488 + $0xd0] sm:$0xff]
      %v708 = vld [vmem:[%s488 + $0xd8] sm:$0xff]
      %v709 = vld [vmem:[%s488 + $0xe0] sm:$0xff]
      %v710 = vld [vmem:[%s488 + $0xe8] sm:$0xff]
      %v711 = vld [vmem:[%s488 + $0xf0] sm:$0xff]
      %v712 = vld [vmem:[%s488 + $0xf8] sm:$0xff]
      %v713 = vld [vmem:[%s488 + $0x100] sm:$0xff]
      %v714 = vld [vmem:[%s488 + $0x108] sm:$0xff]
      %v715 = vld [vmem:[%s488 + $0x110] sm:$0xff]
      %v716 = vld [vmem:[%s488 + $0x118] sm:$0xff]
      %v717 = vld [vmem:[%s488 + $0x120] sm:$0xff]
      %v718 = vld [vmem:[%s488 + $0x128] sm:$0xff]
      %v719 = vld [vmem:[%s488 + $0x130] sm:$0xff]
      %v720 = vld [vmem:[%s488 + $0x138] sm:$0xff]
      %v721 = vld [vmem:[%s488 + $0x140] sm:$0xff]
      %v722 = vld [vmem:[%s488 + $0x148] sm:$0xff]
      %v723 = vld [vmem:[%s488 + $0x150] sm:$0xff]
      %v724 = vld [vmem:[%s488 + $0x158] sm:$0xff]
      %v725 = vld [vmem:[%s488 + $0x160] sm:$0xff]
      %v726 = vld [vmem:[%s488 + $0x168] sm:$0xff]
      %v727 = vld [vmem:[%s488 + $0x170] sm:$0xff]
      %v728 = vld [vmem:[%s488 + $0x178] sm:$0xff]
      %v729 = vld [vmem:[%s488 + $0x180] sm:$0xff]
      %v730 = vld [vmem:[%s488 + $0x188] sm:$0xff]
      %v731 = vld [vmem:[%s488 + $0x190] sm:$0xff]
      %v732 = vld [vmem:[%s488 + $0x198] sm:$0xff]
      %v733 = vld [vmem:[%s488 + $0x1a0] sm:$0xff]
      %v734 = vld [vmem:[%s488 + $0x1a8] sm:$0xff]
      %v735 = vld [vmem:[%s488 + $0x1b0] sm:$0xff]
      %v736 = vld [vmem:[%s488 + $0x1b8] sm:$0xff]
      %v737 = vld [vmem:[%s488 + $0x1c0] sm:$0xff]
      %v738 = vld [vmem:[%s488 + $0x1c8] sm:$0xff]
      %v739 = vld [vmem:[%s488 + $0x1d0] sm:$0xff]
      %v740 = vld [vmem:[%s488 + $0x1d8] sm:$0xff]
      %v741 = vld [vmem:[%s488 + $0x1e0] sm:$0xff]
      %v742 = vld [vmem:[%s488 + $0x1e8] sm:$0xff]
      %v743 = vld [vmem:[%s488 + $0x1f0] sm:$0xff]
      %v744 = vld [vmem:[%s488 + $0x1f8] sm:$0xff]
      %v745 = vld [vmem:[%s488 + $0x200] sm:$0xff]
      %v746 = vld [vmem:[%s488 + $0x208] sm:$0xff]
      %v747 = vld [vmem:[%s488 + $0x210] sm:$0xff]
      %v748 = vld [vmem:[%s488 + $0x218] sm:$0xff]
      %v749 = vld [vmem:[%s488 + $0x220] sm:$0xff]
      %v750 = vld [vmem:[%s488 + $0x228] sm:$0xff]
      %v751 = vld [vmem:[%s488 + $0x230] sm:$0xff]
      %v752 = vld [vmem:[%s488 + $0x238] sm:$0xff]
      %v753 = vld [vmem:[%s488 + $0x240] sm:$0xff]
      %v754 = vld [vmem:[%s488 + $0x248] sm:$0xff]
      %v755 = vld [vmem:[%s488 + $0x250] sm:$0xff]
      %v756 = vld [vmem:[%s488 + $0x258] sm:$0xff]
      %v757 = vld [vmem:[%s488 + $0x260] sm:$0xff]
      %v758 = vld [vmem:[%s488 + $0x268] sm:$0xff]
      %v759 = vld [vmem:[%s488 + $0x270] sm:$0xff]
      %v760 = vld [vmem:[%s488 + $0x278] sm:$0xff]
      %v761 = vld [vmem:[%s488 + $0x280] sm:$0xff]
      %v762 = vld [vmem:[%s488 + $0x288] sm:$0xff]
      %v763 = vld [vmem:[%s488 + $0x290] sm:$0xff]
      %v764 = vld [vmem:[%s488 + $0x298] sm:$0xff]
      %v765 = vld [vmem:[%s488 + $0x2a0] sm:$0xff]
      %v766 = vld [vmem:[%s488 + $0x2a8] sm:$0xff]
      %v767 = vld [vmem:[%s488 + $0x2b0] sm:$0xff]
      %v768 = vld [vmem:[%s488 + $0x2b8] sm:$0xff]
      %v769 = vld [vmem:[%s488 + $0x2c0] sm:$0xff]
      %v770 = vld [vmem:[%s488 + $0x2c8] sm:$0xff]
      %v771 = vld [vmem:[%s488 + $0x2d0] sm:$0xff]
      %v772 = vld [vmem:[%s488 + $0x2d8] sm:$0xff]
      %v773 = vld [vmem:[%s488 + $0x2e0] sm:$0xff]
      %v774 = vld [vmem:[%s488 + $0x2e8] sm:$0xff]
      %v775 = vld [vmem:[%s488 + $0x2f0] sm:$0xff]
      %v776 = vld [vmem:[%s488 + $0x2f8] sm:$0xff]
      %v777 = vld [vmem:[%s488 + $0x300] sm:$0xff]
      %v778 = vld [vmem:[%s488 + $0x308] sm:$0xff]
      %v779 = vld [vmem:[%s488 + $0x310] sm:$0xff]
      %v780 = vld [vmem:[%s488 + $0x318] sm:$0xff]
      %v781 = vld [vmem:[%s488 + $0x320] sm:$0xff]
      %v782 = vld [vmem:[%s488 + $0x328] sm:$0xff]
      %v783 = vld [vmem:[%s488 + $0x330] sm:$0xff]
      %v784 = vld [vmem:[%s488 + $0x338] sm:$0xff]
      %v785 = vld [vmem:[%s488 + $0x340] sm:$0xff]
      %v786 = vld [vmem:[%s488 + $0x348] sm:$0xff]
      %v787 = vld [vmem:[%s488 + $0x350] sm:$0xff]
      %v788 = vld [vmem:[%s488 + $0x358] sm:$0xff]
      %v789 = vld [vmem:[%s488 + $0x360] sm:$0xff]
      %v790 = vld [vmem:[%s488 + $0x368] sm:$0xff]
      %v791 = vld [vmem:[%s488 + $0x370] sm:$0xff]
      %v792 = vld [vmem:[%s488 + $0x378] sm:$0xff]
      %v793 = vld [vmem:[%s488 + $0x380] sm:$0xff]
      %v794 = vld [vmem:[%s488 + $0x388] sm:$0xff]
      %v795 = vld [vmem:[%s488 + $0x390] sm:$0xff]
      %v796 = vld [vmem:[%s488 + $0x398] sm:$0xff]
      %v797 = vld [vmem:[%s488 + $0x3a0] sm:$0xff]
      %v798 = vld [vmem:[%s488 + $0x3a8] sm:$0xff]
      %v799 = vld [vmem:[%s488 + $0x3b0] sm:$0xff]
      %v800 = vld [vmem:[%s488 + $0x3b8] sm:$0xff]
      %v801 = vld [vmem:[%s488 + $0x3c0] sm:$0xff]
      %v802 = vld [vmem:[%s488 + $0x3c8] sm:$0xff]
      %v803 = vld [vmem:[%s488 + $0x3d0] sm:$0xff]
      %v804 = vld [vmem:[%s488 + $0x3d8] sm:$0xff]
      %v805 = vld [vmem:[%s488 + $0x3e0] sm:$0xff]
      %v806 = vld [vmem:[%s488 + $0x3e8] sm:$0xff]
      %v807 = vld [vmem:[%s488 + $0x3f0] sm:$0xff]
      %v808 = vld [vmem:[%s488 + $0x3f8] sm:$0xff]
      %809 = vmatprep.subr.mxu0 0.0
      %810 = vmatpush1.xpose.msra.mxu0 %v681
      %811 = vmatprep.subr.mxu0 0.0
      %812 = vmatpush1.xpose.msra.mxu0 %v682
      %813 = vmatprep.subr.mxu0 0.0
      %814 = vmatpush1.xpose.msra.mxu0 %v683
      %815 = vmatprep.subr.mxu0 0.0
      %816 = vmatpush1.xpose.msra.mxu0 %v684
      %817 = vmatprep.subr.mxu0 0.0
      %818 = vmatpush1.xpose.msra.mxu0 %v685
      %819 = vmatprep.subr.mxu0 0.0
      %820 = vmatpush1.xpose.msra.mxu0 %v686
      %821 = vmatprep.subr.mxu0 0.0
      %822 = vmatpush1.xpose.msra.mxu0 %v687
      %823 = vmatprep.subr.mxu0 0.0
      %824 = vmatpush1.xpose.msra.mxu0 %v688
      %825 = vmatprep.subr.mxu0 0.0
      %826 = vmatpush1.xpose.msra.mxu0 %v689
      %827 = vmatprep.subr.mxu0 0.0
      %828 = vmatpush1.xpose.msra.mxu0 %v690
      %829 = vmatprep.subr.mxu0 0.0
      %830 = vmatpush1.xpose.msra.mxu0 %v691
      %831 = vmatprep.subr.mxu0 0.0
      %832 = vmatpush1.xpose.msra.mxu0 %v692
      %833 = vmatprep.subr.mxu0 0.0
      %834 = vmatpush1.xpose.msra.mxu0 %v693
      %835 = vmatprep.subr.mxu0 0.0
      %836 = vmatpush1.xpose.msra.mxu0 %v694
      %837 = vmatprep.subr.mxu0 0.0
      %838 = vmatpush1.xpose.msra.mxu0 %v695
      %839 = vmatprep.subr.mxu0 0.0
      %840 = vmatpush1.xpose.msra.mxu0 %v696
      %841 = vmatprep.subr.mxu0 0.0
      %842 = vmatpush1.xpose.msra.mxu0 0.0
      %843 = vmatprep.subr.mxu0 0.0
      %844 = vmatpush1.xpose.msra.mxu0 0.0
      %845 = vmatprep.subr.mxu0 0.0
      %846 = vmatpush1.xpose.msra.mxu0 0.0
      %847 = vmatprep.subr.mxu0 0.0
      %848 = vmatpush1.xpose.msra.mxu0 0.0
      %849 = vmatprep.subr.mxu0 0.0
      %850 = vmatpush1.xpose.msra.mxu0 0.0
      %851 = vmatprep.subr.mxu0 0.0
      %852 = vmatpush1.xpose.msra.mxu0 0.0
      %853 = vmatprep.subr.mxu0 0.0
      %854 = vmatpush1.xpose.msra.mxu0 0.0
      %855 = vmatprep.subr.mxu0 0.0
      %856 = vmatpush1.xpose.msra.mxu0 0.0
      %857 = vmatprep.subr.mxu0 0.0
      %858 = vmatpush1.xpose.msra.mxu0 0.0
      %859 = vmatprep.subr.mxu0 0.0
      %860 = vmatpush1.xpose.msra.mxu0 0.0
      %861 = vmatprep.subr.mxu0 0.0
      %862 = vmatpush1.xpose.msra.mxu0 0.0
      %863 = vmatprep.subr.mxu0 0.0
      %864 = vmatpush1.xpose.msra.mxu0 0.0
      %865 = vmatprep.subr.mxu0 0.0
      %866 = vmatpush1.xpose.msra.mxu0 0.0
      %867 = vmatprep.subr.mxu0 0.0
      %868 = vmatpush1.xpose.msra.mxu0 0.0
      %869 = vmatprep.subr.mxu0 0.0
      %870 = vmatpush1.xpose.msra.mxu0 0.0
      %871 = vmatprep.subr.mxu0 0.0
      %872 = vmatpush1.xpose.msra.mxu0 0.0
      %873 = vmatprep.mubr.f32.mxu0 0.0
      %874 = vmatmul.mubr.f32.gmra.mrb[0].mxu0 %v647
      %v875 = vpop.f32.mrb[0].mxu0
      %v876 = vadd.f32 0.0, %v875
      %v877 = vpop.f32.mrb[0].mxu0
      %878 = vdwg.mxu0
      %879 = vmatprep.subr.mxu0 0.0
      %880 = vmatpush1.xpose.msra.mxu0 %v697
      %881 = vmatprep.subr.mxu0 0.0
      %882 = vmatpush1.xpose.msra.mxu0 %v698
      %883 = vmatprep.subr.mxu0 0.0
      %884 = vmatpush1.xpose.msra.mxu0 %v699
      %885 = vmatprep.subr.mxu0 0.0
      %886 = vmatpush1.xpose.msra.mxu0 %v700
      %887 = vmatprep.subr.mxu0 0.0
      %888 = vmatpush1.xpose.msra.mxu0 %v701
      %889 = vmatprep.subr.mxu0 0.0
      %890 = vmatpush1.xpose.msra.mxu0 %v702
      %891 = vmatprep.subr.mxu0 0.0
      %892 = vmatpush1.xpose.msra.mxu0 %v703
      %893 = vmatprep.subr.mxu0 0.0
      %894 = vmatpush1.xpose.msra.mxu0 %v704
      %895 = vmatprep.subr.mxu0 0.0
      %896 = vmatpush1.xpose.msra.mxu0 %v705
      %897 = vmatprep.subr.mxu0 0.0
      %898 = vmatpush1.xpose.msra.mxu0 %v706
      %899 = vmatprep.subr.mxu0 0.0
      %900 = vmatpush1.xpose.msra.mxu0 %v707
      %901 = vmatprep.subr.mxu0 0.0
      %902 = vmatpush1.xpose.msra.mxu0 %v708
      %903 = vmatprep.subr.mxu0 0.0
      %904 = vmatpush1.xpose.msra.mxu0 %v709
      %905 = vmatprep.subr.mxu0 0.0
      %906 = vmatpush1.xpose.msra.mxu0 %v710
      %907 = vmatprep.subr.mxu0 0.0
      %908 = vmatpush1.xpose.msra.mxu0 %v711
      %909 = vmatprep.subr.mxu0 0.0
      %910 = vmatpush1.xpose.msra.mxu0 %v712
      %911 = vmatprep.subr.mxu0 0.0
      %912 = vmatpush1.xpose.msra.mxu0 0.0
      %913 = vmatprep.subr.mxu0 0.0
      %914 = vmatpush1.xpose.msra.mxu0 0.0
      %915 = vmatprep.subr.mxu0 0.0
      %916 = vmatpush1.xpose.msra.mxu0 0.0
      %917 = vmatprep.subr.mxu0 0.0
      %918 = vmatpush1.xpose.msra.mxu0 0.0
      %919 = vmatprep.subr.mxu0 0.0
      %920 = vmatpush1.xpose.msra.mxu0 0.0
      %921 = vmatprep.subr.mxu0 0.0
      %922 = vmatpush1.xpose.msra.mxu0 0.0
      %923 = vmatprep.subr.mxu0 0.0
      %924 = vmatpush1.xpose.msra.mxu0 0.0
      %925 = vmatprep.subr.mxu0 0.0
      %926 = vmatpush1.xpose.msra.mxu0 0.0
      %927 = vmatprep.subr.mxu0 0.0
      %928 = vmatpush1.xpose.msra.mxu0 0.0
      %929 = vmatprep.subr.mxu0 0.0
      %930 = vmatpush1.xpose.msra.mxu0 0.0
      %931 = vmatprep.subr.mxu0 0.0
      %932 = vmatpush1.xpose.msra.mxu0 0.0
      %933 = vmatprep.subr.mxu0 0.0
      %934 = vmatpush1.xpose.msra.mxu0 0.0
      %935 = vmatprep.subr.mxu0 0.0
      %936 = vmatpush1.xpose.msra.mxu0 0.0
      %937 = vmatprep.subr.mxu0 0.0
      %938 = vmatpush1.xpose.msra.mxu0 0.0
      %939 = vmatprep.subr.mxu0 0.0
      %940 = vmatpush1.xpose.msra.mxu0 0.0
      %941 = vmatprep.subr.mxu0 0.0
      %942 = vmatpush1.xpose.msra.mxu0 0.0
      %943 = vmatprep.mubr.f32.mxu0 0.0
      %944 = vmatmul.mubr.f32.gmra.mrb[0].mxu0 %v661
      %v945 = vpop.f32.mrb[0].mxu0
      %v946 = vadd.f32 0.0, %v945
      %v947 = vpop.f32.mrb[0].mxu0
      %948 = vdwg.mxu0
      %949 = vmatprep.subr.mxu0 0.0
      %950 = vmatpush1.xpose.msra.mxu0 %v713
      %951 = vmatprep.subr.mxu0 0.0
      %952 = vmatpush1.xpose.msra.mxu0 %v714
      %953 = vmatprep.subr.mxu0 0.0
      %954 = vmatpush1.xpose.msra.mxu0 %v715
      %955 = vmatprep.subr.mxu0 0.0
      %956 = vmatpush1.xpose.msra.mxu0 %v716
      %957 = vmatprep.subr.mxu0 0.0
      %958 = vmatpush1.xpose.msra.mxu0 %v717
      %959 = vmatprep.subr.mxu0 0.0
      %960 = vmatpush1.xpose.msra.mxu0 %v718
      %961 = vmatprep.subr.mxu0 0.0
      %962 = vmatpush1.xpose.msra.mxu0 %v719
      %963 = vmatprep.subr.mxu0 0.0
      %964 = vmatpush1.xpose.msra.mxu0 %v720
      %965 = vmatprep.subr.mxu0 0.0
      %966 = vmatpush1.xpose.msra.mxu0 %v721
      %967 = vmatprep.subr.mxu0 0.0
      %968 = vmatpush1.xpose.msra.mxu0 %v722
      %969 = vmatprep.subr.mxu0 0.0
      %970 = vmatpush1.xpose.msra.mxu0 %v723
      %971 = vmatprep.subr.mxu0 0.0
      %972 = vmatpush1.xpose.msra.mxu0 %v724
      %973 = vmatprep.subr.mxu0 0.0
      %974 = vmatpush1.xpose.msra.mxu0 %v725
      %975 = vmatprep.subr.mxu0 0.0
      %976 = vmatpush1.xpose.msra.mxu0 %v726
      %977 = vmatprep.subr.mxu0 0.0
      %978 = vmatpush1.xpose.msra.mxu0 %v727
      %979 = vmatprep.subr.mxu0 0.0
      %980 = vmatpush1.xpose.msra.mxu0 %v728
      %981 = vmatprep.subr.mxu0 0.0
      %982 = vmatpush1.xpose.msra.mxu0 0.0
      %983 = vmatprep.subr.mxu0 0.0
      %984 = vmatpush1.xpose.msra.mxu0 0.0
      %985 = vmatprep.subr.mxu0 0.0
      %986 = vmatpush1.xpose.msra.mxu0 0.0
      %987 = vmatprep.subr.mxu0 0.0
      %988 = vmatpush1.xpose.msra.mxu0 0.0
      %989 = vmatprep.subr.mxu0 0.0
      %990 = vmatpush1.xpose.msra.mxu0 0.0
      %991 = vmatprep.subr.mxu0 0.0
      %992 = vmatpush1.xpose.msra.mxu0 0.0
      %993 = vmatprep.subr.mxu0 0.0
      %994 = vmatpush1.xpose.msra.mxu0 0.0
      %995 = vmatprep.subr.mxu0 0.0
      %996 = vmatpush1.xpose.msra.mxu0 0.0
      %997 = vmatprep.subr.mxu0 0.0
      %998 = vmatpush1.xpose.msra.mxu0 0.0
      %999 = vmatprep.subr.mxu0 0.0
      %1000 = vmatpush1.xpose.msra.mxu0 0.0
      %1001 = vmatprep.subr.mxu0 0.0
      %1002 = vmatpush1.xpose.msra.mxu0 0.0
      %1003 = vmatprep.subr.mxu0 0.0
      %1004 = vmatpush1.xpose.msra.mxu0 0.0
      %1005 = vmatprep.subr.mxu0 0.0
      %1006 = vmatpush1.xpose.msra.mxu0 0.0
      %1007 = vmatprep.subr.mxu0 0.0
      %1008 = vmatpush1.xpose.msra.mxu0 0.0
      %1009 = vmatprep.subr.mxu0 0.0
      %1010 = vmatpush1.xpose.msra.mxu0 0.0
      %1011 = vmatprep.subr.mxu0 0.0
      %1012 = vmatpush1.xpose.msra.mxu0 0.0
      %1013 = vmatprep.mubr.f32.mxu0 0.0
      %1014 = vmatmul.mubr.f32.gmra.mrb[0].mxu0 %v669
      %v1015 = vpop.f32.mrb[0].mxu0
      %v1016 = vadd.f32 0.0, %v1015
      %v1017 = vpop.f32.mrb[0].mxu0
      %1018 = vdwg.mxu0
      %1019 = vmatprep.subr.mxu0 0.0
      %1020 = vmatpush1.xpose.msra.mxu0 %v729
      %1021 = vmatprep.subr.mxu0 0.0
      %1022 = vmatpush1.xpose.msra.mxu0 %v730
      %1023 = vmatprep.subr.mxu0 0.0
      %1024 = vmatpush1.xpose.msra.mxu0 %v731
      %1025 = vmatprep.subr.mxu0 0.0
      %1026 = vmatpush1.xpose.msra.mxu0 %v732
      %1027 = vmatprep.subr.mxu0 0.0
      %1028 = vmatpush1.xpose.msra.mxu0 %v733
      %1029 = vmatprep.subr.mxu0 0.0
      %1030 = vmatpush1.xpose.msra.mxu0 %v734
      %1031 = vmatprep.subr.mxu0 0.0
      %1032 = vmatpush1.xpose.msra.mxu0 %v735
      %1033 = vmatprep.subr.mxu0 0.0
      %1034 = vmatpush1.xpose.msra.mxu0 %v736
      %1035 = vmatprep.subr.mxu0 0.0
      %1036 = vmatpush1.xpose.msra.mxu0 %v737
      %1037 = vmatprep.subr.mxu0 0.0
      %1038 = vmatpush1.xpose.msra.mxu0 %v738
      %1039 = vmatprep.subr.mxu0 0.0
      %1040 = vmatpush1.xpose.msra.mxu0 %v739
      %1041 = vmatprep.subr.mxu0 0.0
      %1042 = vmatpush1.xpose.msra.mxu0 %v740
      %1043 = vmatprep.subr.mxu0 0.0
      %1044 = vmatpush1.xpose.msra.mxu0 %v741
      %1045 = vmatprep.subr.mxu0 0.0
      %1046 = vmatpush1.xpose.msra.mxu0 %v742
      %1047 = vmatprep.subr.mxu0 0.0
      %1048 = vmatpush1.xpose.msra.mxu0 %v743
      %1049 = vmatprep.subr.mxu0 0.0
      %1050 = vmatpush1.xpose.msra.mxu0 %v744
      %1051 = vmatprep.subr.mxu0 0.0
      %1052 = vmatpush1.xpose.msra.mxu0 0.0
      %1053 = vmatprep.subr.mxu0 0.0
      %1054 = vmatpush1.xpose.msra.mxu0 0.0
      %1055 = vmatprep.subr.mxu0 0.0
      %1056 = vmatpush1.xpose.msra.mxu0 0.0
      %1057 = vmatprep.subr.mxu0 0.0
      %1058 = vmatpush1.xpose.msra.mxu0 0.0
      %1059 = vmatprep.subr.mxu0 0.0
      %1060 = vmatpush1.xpose.msra.mxu0 0.0
      %1061 = vmatprep.subr.mxu0 0.0
      %1062 = vmatpush1.xpose.msra.mxu0 0.0
      %1063 = vmatprep.subr.mxu0 0.0
      %1064 = vmatpush1.xpose.msra.mxu0 0.0
      %1065 = vmatprep.subr.mxu0 0.0
      %1066 = vmatpush1.xpose.msra.mxu0 0.0
      %1067 = vmatprep.subr.mxu0 0.0
      %1068 = vmatpush1.xpose.msra.mxu0 0.0
      %1069 = vmatprep.subr.mxu0 0.0
      %1070 = vmatpush1.xpose.msra.mxu0 0.0
      %1071 = vmatprep.subr.mxu0 0.0
      %1072 = vmatpush1.xpose.msra.mxu0 0.0
      %1073 = vmatprep.subr.mxu0 0.0
      %1074 = vmatpush1.xpose.msra.mxu0 0.0
      %1075 = vmatprep.subr.mxu0 0.0
      %1076 = vmatpush1.xpose.msra.mxu0 0.0
      %1077 = vmatprep.subr.mxu0 0.0
      %1078 = vmatpush1.xpose.msra.mxu0 0.0
      %1079 = vmatprep.subr.mxu0 0.0
      %1080 = vmatpush1.xpose.msra.mxu0 0.0
      %1081 = vmatprep.subr.mxu0 0.0
      %1082 = vmatpush1.xpose.msra.mxu0 0.0
      %1083 = vmatprep.mubr.f32.mxu0 0.0
      %1084 = vmatmul.mubr.f32.gmra.mrb[0].mxu0 %v671
      %v1085 = vpop.f32.mrb[0].mxu0
      %v1086 = vadd.f32 0.0, %v1085
      %v1087 = vpop.f32.mrb[0].mxu0
      %1088 = vdwg.mxu0
      %1089 = vmatprep.subr.mxu0 0.0
      %1090 = vmatpush1.xpose.msra.mxu0 %v745
      %1091 = vmatprep.subr.mxu0 0.0
      %1092 = vmatpush1.xpose.msra.mxu0 %v746
      %1093 = vmatprep.subr.mxu0 0.0
      %1094 = vmatpush1.xpose.msra.mxu0 %v747
      %1095 = vmatprep.subr.mxu0 0.0
      %1096 = vmatpush1.xpose.msra.mxu0 %v748
      %1097 = vmatprep.subr.mxu0 0.0
      %1098 = vmatpush1.xpose.msra.mxu0 %v749
      %1099 = vmatprep.subr.mxu0 0.0
      %1100 = vmatpush1.xpose.msra.mxu0 %v750
      %1101 = vmatprep.subr.mxu0 0.0
      %1102 = vmatpush1.xpose.msra.mxu0 %v751
      %1103 = vmatprep.subr.mxu0 0.0
      %1104 = vmatpush1.xpose.msra.mxu0 %v752
      %1105 = vmatprep.subr.mxu0 0.0
      %1106 = vmatpush1.xpose.msra.mxu0 %v753
      %1107 = vmatprep.subr.mxu0 0.0
      %1108 = vmatpush1.xpose.msra.mxu0 %v754
      %1109 = vmatprep.subr.mxu0 0.0
      %1110 = vmatpush1.xpose.msra.mxu0 %v755
      %1111 = vmatprep.subr.mxu0 0.0
      %1112 = vmatpush1.xpose.msra.mxu0 %v756
      %1113 = vmatprep.subr.mxu0 0.0
      %1114 = vmatpush1.xpose.msra.mxu0 %v757
      %1115 = vmatprep.subr.mxu0 0.0
      %1116 = vmatpush1.xpose.msra.mxu0 %v758
      %1117 = vmatprep.subr.mxu0 0.0
      %1118 = vmatpush1.xpose.msra.mxu0 %v759
      %1119 = vmatprep.subr.mxu0 0.0
      %1120 = vmatpush1.xpose.msra.mxu0 %v760
      %1121 = vmatprep.subr.mxu0 0.0
      %1122 = vmatpush1.xpose.msra.mxu0 0.0
      %1123 = vmatprep.subr.mxu0 0.0
      %1124 = vmatpush1.xpose.msra.mxu0 0.0
      %1125 = vmatprep.subr.mxu0 0.0
      %1126 = vmatpush1.xpose.msra.mxu0 0.0
      %1127 = vmatprep.subr.mxu0 0.0
      %1128 = vmatpush1.xpose.msra.mxu0 0.0
      %1129 = vmatprep.subr.mxu0 0.0
      %1130 = vmatpush1.xpose.msra.mxu0 0.0
      %1131 = vmatprep.subr.mxu0 0.0
      %1132 = vmatpush1.xpose.msra.mxu0 0.0
      %1133 = vmatprep.subr.mxu0 0.0
      %1134 = vmatpush1.xpose.msra.mxu0 0.0
      %1135 = vmatprep.subr.mxu0 0.0
      %1136 = vmatpush1.xpose.msra.mxu0 0.0
      %1137 = vmatprep.subr.mxu0 0.0
      %1138 = vmatpush1.xpose.msra.mxu0 0.0
      %1139 = vmatprep.subr.mxu0 0.0
      %1140 = vmatpush1.xpose.msra.mxu0 0.0
      %1141 = vmatprep.subr.mxu0 0.0
      %1142 = vmatpush1.xpose.msra.mxu0 0.0
      %1143 = vmatprep.subr.mxu0 0.0
      %1144 = vmatpush1.xpose.msra.mxu0 0.0
      %1145 = vmatprep.subr.mxu0 0.0
      %1146 = vmatpush1.xpose.msra.mxu0 0.0
      %1147 = vmatprep.subr.mxu0 0.0
      %1148 = vmatpush1.xpose.msra.mxu0 0.0
      %1149 = vmatprep.subr.mxu0 0.0
      %1150 = vmatpush1.xpose.msra.mxu0 0.0
      %1151 = vmatprep.subr.mxu0 0.0
      %1152 = vmatpush1.xpose.msra.mxu0 0.0
      %1153 = vmatprep.mubr.f32.mxu0 0.0
      %1154 = vmatmul.mubr.f32.gmra.mrb[0].mxu0 %v654
      %v1155 = vpop.f32.mrb[0].mxu0
      %v1156 = vadd.f32 0.0, %v1155
      %v1157 = vpop.f32.mrb[0].mxu0
      %1158 = vdwg.mxu0
      %1159 = vmatprep.subr.mxu0 0.0
      %1160 = vmatpush1.xpose.msra.mxu0 %v761
      %1161 = vmatprep.subr.mxu0 0.0
      %1162 = vmatpush1.xpose.msra.mxu0 %v762
      %1163 = vmatprep.subr.mxu0 0.0
      %1164 = vmatpush1.xpose.msra.mxu0 %v763
      %1165 = vmatprep.subr.mxu0 0.0
      %1166 = vmatpush1.xpose.msra.mxu0 %v764
      %1167 = vmatprep.subr.mxu0 0.0
      %1168 = vmatpush1.xpose.msra.mxu0 %v765
      %1169 = vmatprep.subr.mxu0 0.0
      %1170 = vmatpush1.xpose.msra.mxu0 %v766
      %1171 = vmatprep.subr.mxu0 0.0
      %1172 = vmatpush1.xpose.msra.mxu0 %v767
      %1173 = vmatprep.subr.mxu0 0.0
      %1174 = vmatpush1.xpose.msra.mxu0 %v768
      %1175 = vmatprep.subr.mxu0 0.0
      %1176 = vmatpush1.xpose.msra.mxu0 %v769
      %1177 = vmatprep.subr.mxu0 0.0
      %1178 = vmatpush1.xpose.msra.mxu0 %v770
      %1179 = vmatprep.subr.mxu0 0.0
      %1180 = vmatpush1.xpose.msra.mxu0 %v771
      %1181 = vmatprep.subr.mxu0 0.0
      %1182 = vmatpush1.xpose.msra.mxu0 %v772
      %1183 = vmatprep.subr.mxu0 0.0
      %1184 = vmatpush1.xpose.msra.mxu0 %v773
      %1185 = vmatprep.subr.mxu0 0.0
      %1186 = vmatpush1.xpose.msra.mxu0 %v774
      %1187 = vmatprep.subr.mxu0 0.0
      %1188 = vmatpush1.xpose.msra.mxu0 %v775
      %1189 = vmatprep.subr.mxu0 0.0
      %1190 = vmatpush1.xpose.msra.mxu0 %v776
      %1191 = vmatprep.subr.mxu0 0.0
      %1192 = vmatpush1.xpose.msra.mxu0 0.0
      %1193 = vmatprep.subr.mxu0 0.0
      %1194 = vmatpush1.xpose.msra.mxu0 0.0
      %1195 = vmatprep.subr.mxu0 0.0
      %1196 = vmatpush1.xpose.msra.mxu0 0.0
      %1197 = vmatprep.subr.mxu0 0.0
      %1198 = vmatpush1.xpose.msra.mxu0 0.0
      %1199 = vmatprep.subr.mxu0 0.0
      %1200 = vmatpush1.xpose.msra.mxu0 0.0
      %1201 = vmatprep.subr.mxu0 0.0
      %1202 = vmatpush1.xpose.msra.mxu0 0.0
      %1203 = vmatprep.subr.mxu0 0.0
      %1204 = vmatpush1.xpose.msra.mxu0 0.0
      %1205 = vmatprep.subr.mxu0 0.0
      %1206 = vmatpush1.xpose.msra.mxu0 0.0
      %1207 = vmatprep.subr.mxu0 0.0
      %1208 = vmatpush1.xpose.msra.mxu0 0.0
      %1209 = vmatprep.subr.mxu0 0.0
      %1210 = vmatpush1.xpose.msra.mxu0 0.0
      %1211 = vmatprep.subr.mxu0 0.0
      %1212 = vmatpush1.xpose.msra.mxu0 0.0
      %1213 = vmatprep.subr.mxu0 0.0
      %1214 = vmatpush1.xpose.msra.mxu0 0.0
      %1215 = vmatprep.subr.mxu0 0.0
      %1216 = vmatpush1.xpose.msra.mxu0 0.0
      %1217 = vmatprep.subr.mxu0 0.0
      %1218 = vmatpush1.xpose.msra.mxu0 0.0
      %1219 = vmatprep.subr.mxu0 0.0
      %1220 = vmatpush1.xpose.msra.mxu0 0.0
      %1221 = vmatprep.subr.mxu0 0.0
      %1222 = vmatpush1.xpose.msra.mxu0 0.0
      %1223 = vmatprep.mubr.f32.mxu0 0.0
      %1224 = vmatmul.mubr.f32.gmra.mrb[0].mxu0 %v668
      %v1225 = vpop.f32.mrb[0].mxu0
      %v1226 = vadd.f32 0.0, %v1225
      %v1227 = vpop.f32.mrb[0].mxu0
      %1228 = vdwg.mxu0
      %1229 = vmatprep.subr.mxu0 0.0
      %1230 = vmatpush1.xpose.msra.mxu0 %v777
      %1231 = vmatprep.subr.mxu0 0.0
      %1232 = vmatpush1.xpose.msra.mxu0 %v778
      %1233 = vmatprep.subr.mxu0 0.0
      %1234 = vmatpush1.xpose.msra.mxu0 %v779
      %1235 = vmatprep.subr.mxu0 0.0
      %1236 = vmatpush1.xpose.msra.mxu0 %v780
      %1237 = vmatprep.subr.mxu0 0.0
      %1238 = vmatpush1.xpose.msra.mxu0 %v781
      %1239 = vmatprep.subr.mxu0 0.0
      %1240 = vmatpush1.xpose.msra.mxu0 %v782
      %1241 = vmatprep.subr.mxu0 0.0
      %1242 = vmatpush1.xpose.msra.mxu0 %v783
      %1243 = vmatprep.subr.mxu0 0.0
      %1244 = vmatpush1.xpose.msra.mxu0 %v784
      %1245 = vmatprep.subr.mxu0 0.0
      %1246 = vmatpush1.xpose.msra.mxu0 %v785
      %1247 = vmatprep.subr.mxu0 0.0
      %1248 = vmatpush1.xpose.msra.mxu0 %v786
      %1249 = vmatprep.subr.mxu0 0.0
      %1250 = vmatpush1.xpose.msra.mxu0 %v787
      %1251 = vmatprep.subr.mxu0 0.0
      %1252 = vmatpush1.xpose.msra.mxu0 %v788
      %1253 = vmatprep.subr.mxu0 0.0
      %1254 = vmatpush1.xpose.msra.mxu0 %v789
      %1255 = vmatprep.subr.mxu0 0.0
      %1256 = vmatpush1.xpose.msra.mxu0 %v790
      %1257 = vmatprep.subr.mxu0 0.0
      %1258 = vmatpush1.xpose.msra.mxu0 %v791
      %1259 = vmatprep.subr.mxu0 0.0
      %1260 = vmatpush1.xpose.msra.mxu0 %v792
      %1261 = vmatprep.subr.mxu0 0.0
      %1262 = vmatpush1.xpose.msra.mxu0 0.0
      %1263 = vmatprep.subr.mxu0 0.0
      %1264 = vmatpush1.xpose.msra.mxu0 0.0
      %1265 = vmatprep.subr.mxu0 0.0
      %1266 = vmatpush1.xpose.msra.mxu0 0.0
      %1267 = vmatprep.subr.mxu0 0.0
      %1268 = vmatpush1.xpose.msra.mxu0 0.0
      %1269 = vmatprep.subr.mxu0 0.0
      %1270 = vmatpush1.xpose.msra.mxu0 0.0
      %1271 = vmatprep.subr.mxu0 0.0
      %1272 = vmatpush1.xpose.msra.mxu0 0.0
      %1273 = vmatprep.subr.mxu0 0.0
      %1274 = vmatpush1.xpose.msra.mxu0 0.0
      %1275 = vmatprep.subr.mxu0 0.0
      %1276 = vmatpush1.xpose.msra.mxu0 0.0
      %1277 = vmatprep.subr.mxu0 0.0
      %1278 = vmatpush1.xpose.msra.mxu0 0.0
      %1279 = vmatprep.subr.mxu0 0.0
      %1280 = vmatpush1.xpose.msra.mxu0 0.0
      %1281 = vmatprep.subr.mxu0 0.0
      %1282 = vmatpush1.xpose.msra.mxu0 0.0
      %1283 = vmatprep.subr.mxu0 0.0
      %1284 = vmatpush1.xpose.msra.mxu0 0.0
      %1285 = vmatprep.subr.mxu0 0.0
      %1286 = vmatpush1.xpose.msra.mxu0 0.0
      %1287 = vmatprep.subr.mxu0 0.0
      %1288 = vmatpush1.xpose.msra.mxu0 0.0
      %1289 = vmatprep.subr.mxu0 0.0
      %1290 = vmatpush1.xpose.msra.mxu0 0.0
      %1291 = vmatprep.subr.mxu0 0.0
      %1292 = vmatpush1.xpose.msra.mxu0 0.0
      %1293 = vmatprep.mubr.f32.mxu0 0.0
      %1294 = vmatmul.mubr.f32.gmra.mrb[0].mxu0 %v670
      %v1295 = vpop.f32.mrb[0].mxu0
      %v1296 = vadd.f32 0.0, %v1295
      %v1297 = vpop.f32.mrb[0].mxu0
      %1298 = vdwg.mxu0
      %1299 = vmatprep.subr.mxu0 0.0
      %1300 = vmatpush1.xpose.msra.mxu0 %v793
      %1301 = vmatprep.subr.mxu0 0.0
      %1302 = vmatpush1.xpose.msra.mxu0 %v794
      %1303 = vmatprep.subr.mxu0 0.0
      %1304 = vmatpush1.xpose.msra.mxu0 %v795
      %1305 = vmatprep.subr.mxu0 0.0
      %1306 = vmatpush1.xpose.msra.mxu0 %v796
      %1307 = vmatprep.subr.mxu0 0.0
      %1308 = vmatpush1.xpose.msra.mxu0 %v797
      %1309 = vmatprep.subr.mxu0 0.0
      %1310 = vmatpush1.xpose.msra.mxu0 %v798
      %1311 = vmatprep.subr.mxu0 0.0
      %1312 = vmatpush1.xpose.msra.mxu0 %v799
      %1313 = vmatprep.subr.mxu0 0.0
      %1314 = vmatpush1.xpose.msra.mxu0 %v800
      %1315 = vmatprep.subr.mxu0 0.0
      %1316 = vmatpush1.xpose.msra.mxu0 %v801
      %1317 = vmatprep.subr.mxu0 0.0
      %1318 = vmatpush1.xpose.msra.mxu0 %v802
      %1319 = vmatprep.subr.mxu0 0.0
      %1320 = vmatpush1.xpose.msra.mxu0 %v803
      %1321 = vmatprep.subr.mxu0 0.0
      %1322 = vmatpush1.xpose.msra.mxu0 %v804
      %1323 = vmatprep.subr.mxu0 0.0
      %1324 = vmatpush1.xpose.msra.mxu0 %v805
      %1325 = vmatprep.subr.mxu0 0.0
      %1326 = vmatpush1.xpose.msra.mxu0 %v806
      %1327 = vmatprep.subr.mxu0 0.0
      %1328 = vmatpush1.xpose.msra.mxu0 %v807
      %1329 = vmatprep.subr.mxu0 0.0
      %1330 = vmatpush1.xpose.msra.mxu0 %v808
      %1331 = vmatprep.subr.mxu0 0.0
      %1332 = vmatpush1.xpose.msra.mxu0 0.0
      %1333 = vmatprep.subr.mxu0 0.0
      %1334 = vmatpush1.xpose.msra.mxu0 0.0
      %1335 = vmatprep.subr.mxu0 0.0
      %1336 = vmatpush1.xpose.msra.mxu0 0.0
      %1337 = vmatprep.subr.mxu0 0.0
      %1338 = vmatpush1.xpose.msra.mxu0 0.0
      %1339 = vmatprep.subr.mxu0 0.0
      %1340 = vmatpush1.xpose.msra.mxu0 0.0
      %1341 = vmatprep.subr.mxu0 0.0
      %1342 = vmatpush1.xpose.msra.mxu0 0.0
      %1343 = vmatprep.subr.mxu0 0.0
      %1344 = vmatpush1.xpose.msra.mxu0 0.0
      %1345 = vmatprep.subr.mxu0 0.0
      %1346 = vmatpush1.xpose.msra.mxu0 0.0
      %1347 = vmatprep.subr.mxu0 0.0
      %1348 = vmatpush1.xpose.msra.mxu0 0.0
      %1349 = vmatprep.subr.mxu0 0.0
      %1350 = vmatpush1.xpose.msra.mxu0 0.0
      %1351 = vmatprep.subr.mxu0 0.0
      %1352 = vmatpush1.xpose.msra.mxu0 0.0
      %1353 = vmatprep.subr.mxu0 0.0
      %1354 = vmatpush1.xpose.msra.mxu0 0.0
      %1355 = vmatprep.subr.mxu0 0.0
      %1356 = vmatpush1.xpose.msra.mxu0 0.0
      %1357 = vmatprep.subr.mxu0 0.0
      %1358 = vmatpush1.xpose.msra.mxu0 0.0
      %1359 = vmatprep.subr.mxu0 0.0
      %1360 = vmatpush1.xpose.msra.mxu0 0.0
      %1361 = vmatprep.subr.mxu0 0.0
      %1362 = vmatpush1.xpose.msra.mxu0 0.0
      %1363 = vmatprep.mubr.f32.mxu0 0.0
      %1364 = vmatmul.mubr.f32.gmra.mrb[0].mxu0 %v672
      %v1365 = vpop.f32.mrb[0].mxu0
      %v1366 = vadd.f32 0.0, %v1365
      %v1367 = vpop.f32.mrb[0].mxu0
      %1368 = vdwg.mxu0
      %v1369 = vld [vmem:[%s3] sm:$0x1]
      %v1371 = vlaneseq
      %v1372 = vshrl.u32 %v1371, 7
      %v1373 = vsub.s32 0, %v1372
      %v1374 = vrot.slane %v1369, %v1373
      %v1376 = vadd.f32 %v876, %v1374
      %v1377 = vadd.f32 %v946, %v1374
      %v1378 = vadd.f32 %v1016, %v1374
      %v1379 = vadd.f32 %v1086, %v1374
      %v1380 = vadd.f32 %v1156, %v1374
      %v1381 = vadd.f32 %v1226, %v1374
      %v1382 = vadd.f32 %v1296, %v1374
      %v1383 = vadd.f32 %v1366, %v1374
      %v1392 = vrot.slane %v1377, 7
      %vm1393 = vcmask 1041409
      %v1394 = vsel %vm1393, %v1392, %v1376
      %v1395 = vrot.slane %v1378, 6
      %vm1396 = vcmask 1042434
      %v1397 = vsel %vm1396, %v1395, %v1394
      %v1398 = vrot.slane %v1379, 5
      %vm1399 = vcmask 1043459
      %v1400 = vsel %vm1399, %v1398, %v1397
      %v1401 = vrot.slane %v1380, 4
      %vm1402 = vcmask 1044484
      %v1403 = vsel %vm1402, %v1401, %v1400
      %v1404 = vrot.slane %v1381, 3
      %vm1405 = vcmask 1045509
      %v1406 = vsel %vm1405, %v1404, %v1403
      %v1407 = vrot.slane %v1382, 2
      %vm1408 = vcmask 1046534
      %v1409 = vsel %vm1408, %v1407, %v1406
      %v1410 = vrot.slane %v1383, 1
      %vm1411 = vcmask 1047559
      %v1412 = vsel %vm1411, %v1410, %v1409
      %1414 = vmax.xlane.f32.xlu0 %v1412
      %v1415 = vpop.xlane.xlu0 %1414
      %v1417 = vrot.slane %v1415, 1
      %v1418 = vrot.slane %v1415, 2
      %v1419 = vrot.slane %v1415, 3
      %v1420 = vrot.slane %v1415, 4
      %v1421 = vrot.slane %v1415, 5
      %v1422 = vrot.slane %v1415, 6
      %v1423 = vrot.slane %v1415, 7
      %v1432 = vsub.f32 %v1376, %v1415
      %v1433 = vsub.f32 %v1377, %v1417
      %v1434 = vsub.f32 %v1378, %v1418
      %v1435 = vsub.f32 %v1379, %v1419
      %v1436 = vsub.f32 %v1380, %v1420
      %v1437 = vsub.f32 %v1381, %v1421
      %v1438 = vsub.f32 %v1382, %v1422
      %v1439 = vsub.f32 %v1383, %v1423
      %v1440 = vmul.f32 %v1432, 1.442695
      %v1441 = vpow.pop %v1440
      %v1442 = vmul.f32 %v1433, 1.442695
      %v1443 = vpow.pop %v1442
      %v1444 = vmul.f32 %v1434, 1.442695
      %v1445 = vpow.pop %v1444
      %v1446 = vmul.f32 %v1435, 1.442695
      %v1447 = vpow.pop %v1446
      %v1448 = vmul.f32 %v1436, 1.442695
      %v1449 = vpow.pop %v1448
      %v1450 = vmul.f32 %v1437, 1.442695
      %v1451 = vpow.pop %v1450
      %v1452 = vmul.f32 %v1438, 1.442695
      %v1453 = vpow.pop %v1452
      %v1454 = vmul.f32 %v1439, 1.442695
      %v1455 = vpow.pop %v1454
      %v1464 = vrot.slane %v1443, 7
      %v1465 = vsel %vm1393, %v1464, %v1441
      %v1466 = vrot.slane %v1445, 6
      %v1467 = vsel %vm1396, %v1466, %v1465
      %v1468 = vrot.slane %v1447, 5
      %v1469 = vsel %vm1399, %v1468, %v1467
      %v1470 = vrot.slane %v1449, 4
      %v1471 = vsel %vm1402, %v1470, %v1469
      %v1472 = vrot.slane %v1451, 3
      %v1473 = vsel %vm1405, %v1472, %v1471
      %v1474 = vrot.slane %v1453, 2
      %v1475 = vsel %vm1408, %v1474, %v1473
      %v1476 = vrot.slane %v1455, 1
      %v1477 = vsel %vm1411, %v1476, %v1475
      %1479 = vadd.xlane.f32.xlu0 %v1477
      %v1480 = vpop.xlane.xlu0 %1479
      %v1482 = vrot.slane %v1480, 1
      %v1483 = vrot.slane %v1480, 2
      %v1484 = vrot.slane %v1480, 3
      %v1485 = vrot.slane %v1480, 4
      %v1486 = vrot.slane %v1480, 5
      %v1487 = vrot.slane %v1480, 6
      %v1488 = vrot.slane %v1480, 7
      %v1497 = vrcp.pop %v1480
      %v1498 = vmul.f32 %v1441, %v1497
      %v1499 = vrcp.pop %v1482
      %v1500 = vmul.f32 %v1443, %v1499
      %v1501 = vrcp.pop %v1483
      %v1502 = vmul.f32 %v1445, %v1501
      %v1503 = vrcp.pop %v1484
      %v1504 = vmul.f32 %v1447, %v1503
      %v1505 = vrcp.pop %v1485
      %v1506 = vmul.f32 %v1449, %v1505
      %v1507 = vrcp.pop %v1486
      %v1508 = vmul.f32 %v1451, %v1507
      %v1509 = vrcp.pop %v1487
      %v1510 = vmul.f32 %v1453, %v1509
      %v1511 = vrcp.pop %v1488
      %v1512 = vmul.f32 %v1455, %v1511
      %v1513 = vld [vmem:[%s488] sm:$0xff]
      %v1514 = vld [vmem:[%s488 + $0x8] sm:$0xff]
      %v1515 = vld [vmem:[%s488 + $0x10] sm:$0xff]
      %v1516 = vld [vmem:[%s488 + $0x18] sm:$0xff]
      %v1517 = vld [vmem:[%s488 + $0x20] sm:$0xff]
      %v1518 = vld [vmem:[%s488 + $0x28] sm:$0xff]
      %v1519 = vld [vmem:[%s488 + $0x30] sm:$0xff]
      %v1520 = vld [vmem:[%s488 + $0x38] sm:$0xff]
      %v1521 = vld [vmem:[%s488 + $0x40] sm:$0xff]
      %v1522 = vld [vmem:[%s488 + $0x48] sm:$0xff]
      %v1523 = vld [vmem:[%s488 + $0x50] sm:$0xff]
      %v1524 = vld [vmem:[%s488 + $0x58] sm:$0xff]
      %v1525 = vld [vmem:[%s488 + $0x60] sm:$0xff]
      %v1526 = vld [vmem:[%s488 + $0x68] sm:$0xff]
      %v1527 = vld [vmem:[%s488 + $0x70] sm:$0xff]
      %v1528 = vld [vmem:[%s488 + $0x78] sm:$0xff]
      %v1529 = vld [vmem:[%s488 + $0x80] sm:$0xff]
      %v1530 = vld [vmem:[%s488 + $0x88] sm:$0xff]
      %v1531 = vld [vmem:[%s488 + $0x90] sm:$0xff]
      %v1532 = vld [vmem:[%s488 + $0x98] sm:$0xff]
      %v1533 = vld [vmem:[%s488 + $0xa0] sm:$0xff]
      %v1534 = vld [vmem:[%s488 + $0xa8] sm:$0xff]
      %v1535 = vld [vmem:[%s488 + $0xb0] sm:$0xff]
      %v1536 = vld [vmem:[%s488 + $0xb8] sm:$0xff]
      %v1537 = vld [vmem:[%s488 + $0xc0] sm:$0xff]
      %v1538 = vld [vmem:[%s488 + $0xc8] sm:$0xff]
      %v1539 = vld [vmem:[%s488 + $0xd0] sm:$0xff]
      %v1540 = vld [vmem:[%s488 + $0xd8] sm:$0xff]
      %v1541 = vld [vmem:[%s488 + $0xe0] sm:$0xff]
      %v1542 = vld [vmem:[%s488 + $0xe8] sm:$0xff]
      %v1543 = vld [vmem:[%s488 + $0xf0] sm:$0xff]
      %v1544 = vld [vmem:[%s488 + $0xf8] sm:$0xff]
      %v1545 = vld [vmem:[%s488 + $0x100] sm:$0xff]
      %v1546 = vld [vmem:[%s488 + $0x108] sm:$0xff]
      %v1547 = vld [vmem:[%s488 + $0x110] sm:$0xff]
      %v1548 = vld [vmem:[%s488 + $0x118] sm:$0xff]
      %v1549 = vld [vmem:[%s488 + $0x120] sm:$0xff]
      %v1550 = vld [vmem:[%s488 + $0x128] sm:$0xff]
      %v1551 = vld [vmem:[%s488 + $0x130] sm:$0xff]
      %v1552 = vld [vmem:[%s488 + $0x138] sm:$0xff]
      %v1553 = vld [vmem:[%s488 + $0x140] sm:$0xff]
      %v1554 = vld [vmem:[%s488 + $0x148] sm:$0xff]
      %v1555 = vld [vmem:[%s488 + $0x150] sm:$0xff]
      %v1556 = vld [vmem:[%s488 + $0x158] sm:$0xff]
      %v1557 = vld [vmem:[%s488 + $0x160] sm:$0xff]
      %v1558 = vld [vmem:[%s488 + $0x168] sm:$0xff]
      %v1559 = vld [vmem:[%s488 + $0x170] sm:$0xff]
      %v1560 = vld [vmem:[%s488 + $0x178] sm:$0xff]
      %v1561 = vld [vmem:[%s488 + $0x180] sm:$0xff]
      %v1562 = vld [vmem:[%s488 + $0x188] sm:$0xff]
      %v1563 = vld [vmem:[%s488 + $0x190] sm:$0xff]
      %v1564 = vld [vmem:[%s488 + $0x198] sm:$0xff]
      %v1565 = vld [vmem:[%s488 + $0x1a0] sm:$0xff]
      %v1566 = vld [vmem:[%s488 + $0x1a8] sm:$0xff]
      %v1567 = vld [vmem:[%s488 + $0x1b0] sm:$0xff]
      %v1568 = vld [vmem:[%s488 + $0x1b8] sm:$0xff]
      %v1569 = vld [vmem:[%s488 + $0x1c0] sm:$0xff]
      %v1570 = vld [vmem:[%s488 + $0x1c8] sm:$0xff]
      %v1571 = vld [vmem:[%s488 + $0x1d0] sm:$0xff]
      %v1572 = vld [vmem:[%s488 + $0x1d8] sm:$0xff]
      %v1573 = vld [vmem:[%s488 + $0x1e0] sm:$0xff]
      %v1574 = vld [vmem:[%s488 + $0x1e8] sm:$0xff]
      %v1575 = vld [vmem:[%s488 + $0x1f0] sm:$0xff]
      %v1576 = vld [vmem:[%s488 + $0x1f8] sm:$0xff]
      %v1577 = vld [vmem:[%s488 + $0x200] sm:$0xff]
      %v1578 = vld [vmem:[%s488 + $0x208] sm:$0xff]
      %v1579 = vld [vmem:[%s488 + $0x210] sm:$0xff]
      %v1580 = vld [vmem:[%s488 + $0x218] sm:$0xff]
      %v1581 = vld [vmem:[%s488 + $0x220] sm:$0xff]
      %v1582 = vld [vmem:[%s488 + $0x228] sm:$0xff]
      %v1583 = vld [vmem:[%s488 + $0x230] sm:$0xff]
      %v1584 = vld [vmem:[%s488 + $0x238] sm:$0xff]
      %v1585 = vld [vmem:[%s488 + $0x240] sm:$0xff]
      %v1586 = vld [vmem:[%s488 + $0x248] sm:$0xff]
      %v1587 = vld [vmem:[%s488 + $0x250] sm:$0xff]
      %v1588 = vld [vmem:[%s488 + $0x258] sm:$0xff]
      %v1589 = vld [vmem:[%s488 + $0x260] sm:$0xff]
      %v1590 = vld [vmem:[%s488 + $0x268] sm:$0xff]
      %v1591 = vld [vmem:[%s488 + $0x270] sm:$0xff]
      %v1592 = vld [vmem:[%s488 + $0x278] sm:$0xff]
      %v1593 = vld [vmem:[%s488 + $0x280] sm:$0xff]
      %v1594 = vld [vmem:[%s488 + $0x288] sm:$0xff]
      %v1595 = vld [vmem:[%s488 + $0x290] sm:$0xff]
      %v1596 = vld [vmem:[%s488 + $0x298] sm:$0xff]
      %v1597 = vld [vmem:[%s488 + $0x2a0] sm:$0xff]
      %v1598 = vld [vmem:[%s488 + $0x2a8] sm:$0xff]
      %v1599 = vld [vmem:[%s488 + $0x2b0] sm:$0xff]
      %v1600 = vld [vmem:[%s488 + $0x2b8] sm:$0xff]
      %v1601 = vld [vmem:[%s488 + $0x2c0] sm:$0xff]
      %v1602 = vld [vmem:[%s488 + $0x2c8] sm:$0xff]
      %v1603 = vld [vmem:[%s488 + $0x2d0] sm:$0xff]
      %v1604 = vld [vmem:[%s488 + $0x2d8] sm:$0xff]
      %v1605 = vld [vmem:[%s488 + $0x2e0] sm:$0xff]
      %v1606 = vld [vmem:[%s488 + $0x2e8] sm:$0xff]
      %v1607 = vld [vmem:[%s488 + $0x2f0] sm:$0xff]
      %v1608 = vld [vmem:[%s488 + $0x2f8] sm:$0xff]
      %v1609 = vld [vmem:[%s488 + $0x300] sm:$0xff]
      %v1610 = vld [vmem:[%s488 + $0x308] sm:$0xff]
      %v1611 = vld [vmem:[%s488 + $0x310] sm:$0xff]
      %v1612 = vld [vmem:[%s488 + $0x318] sm:$0xff]
      %v1613 = vld [vmem:[%s488 + $0x320] sm:$0xff]
      %v1614 = vld [vmem:[%s488 + $0x328] sm:$0xff]
      %v1615 = vld [vmem:[%s488 + $0x330] sm:$0xff]
      %v1616 = vld [vmem:[%s488 + $0x338] sm:$0xff]
      %v1617 = vld [vmem:[%s488 + $0x340] sm:$0xff]
      %v1618 = vld [vmem:[%s488 + $0x348] sm:$0xff]
      %v1619 = vld [vmem:[%s488 + $0x350] sm:$0xff]
      %v1620 = vld [vmem:[%s488 + $0x358] sm:$0xff]
      %v1621 = vld [vmem:[%s488 + $0x360] sm:$0xff]
      %v1622 = vld [vmem:[%s488 + $0x368] sm:$0xff]
      %v1623 = vld [vmem:[%s488 + $0x370] sm:$0xff]
      %v1624 = vld [vmem:[%s488 + $0x378] sm:$0xff]
      %v1625 = vld [vmem:[%s488 + $0x380] sm:$0xff]
      %v1626 = vld [vmem:[%s488 + $0x388] sm:$0xff]
      %v1627 = vld [vmem:[%s488 + $0x390] sm:$0xff]
      %v1628 = vld [vmem:[%s488 + $0x398] sm:$0xff]
      %v1629 = vld [vmem:[%s488 + $0x3a0] sm:$0xff]
      %v1630 = vld [vmem:[%s488 + $0x3a8] sm:$0xff]
      %v1631 = vld [vmem:[%s488 + $0x3b0] sm:$0xff]
      %v1632 = vld [vmem:[%s488 + $0x3b8] sm:$0xff]
      %v1633 = vld [vmem:[%s488 + $0x3c0] sm:$0xff]
      %v1634 = vld [vmem:[%s488 + $0x3c8] sm:$0xff]
      %v1635 = vld [vmem:[%s488 + $0x3d0] sm:$0xff]
      %v1636 = vld [vmem:[%s488 + $0x3d8] sm:$0xff]
      %v1637 = vld [vmem:[%s488 + $0x3e0] sm:$0xff]
      %v1638 = vld [vmem:[%s488 + $0x3e8] sm:$0xff]
      %v1639 = vld [vmem:[%s488 + $0x3f0] sm:$0xff]
      %v1640 = vld [vmem:[%s488 + $0x3f8] sm:$0xff]
      %1641 = vmatprep.subr.mxu0 0.0
      %1642 = vmatpush1.msra.mxu0 %v1513
      %1643 = vmatprep.subr.mxu0 0.0
      %1644 = vmatpush1.msra.mxu0 %v1514
      %1645 = vmatprep.subr.mxu0 0.0
      %1646 = vmatpush1.msra.mxu0 %v1515
      %1647 = vmatprep.subr.mxu0 0.0
      %1648 = vmatpush1.msra.mxu0 %v1516
      %1649 = vmatprep.subr.mxu0 0.0
      %1650 = vmatpush1.msra.mxu0 %v1517
      %1651 = vmatprep.subr.mxu0 0.0
      %1652 = vmatpush1.msra.mxu0 %v1518
      %1653 = vmatprep.subr.mxu0 0.0
      %1654 = vmatpush1.msra.mxu0 %v1519
      %1655 = vmatprep.subr.mxu0 0.0
      %1656 = vmatpush1.msra.mxu0 %v1520
      %1657 = vmatprep.subr.mxu0 0.0
      %1658 = vmatpush1.msra.mxu0 %v1521
      %1659 = vmatprep.subr.mxu0 0.0
      %1660 = vmatpush1.msra.mxu0 %v1522
      %1661 = vmatprep.subr.mxu0 0.0
      %1662 = vmatpush1.msra.mxu0 %v1523
      %1663 = vmatprep.subr.mxu0 0.0
      %1664 = vmatpush1.msra.mxu0 %v1524
      %1665 = vmatprep.subr.mxu0 0.0
      %1666 = vmatpush1.msra.mxu0 %v1525
      %1667 = vmatprep.subr.mxu0 0.0
      %1668 = vmatpush1.msra.mxu0 %v1526
      %1669 = vmatprep.subr.mxu0 0.0
      %1670 = vmatpush1.msra.mxu0 %v1527
      %1671 = vmatprep.subr.mxu0 0.0
      %1672 = vmatpush1.msra.mxu0 %v1528
      %1673 = vmatprep.subr.mxu0 0.0
      %1674 = vmatpush1.msra.mxu0 0.0
      %1675 = vmatprep.subr.mxu0 0.0
      %1676 = vmatpush1.msra.mxu0 0.0
      %1677 = vmatprep.subr.mxu0 0.0
      %1678 = vmatpush1.msra.mxu0 0.0
      %1679 = vmatprep.subr.mxu0 0.0
      %1680 = vmatpush1.msra.mxu0 0.0
      %1681 = vmatprep.subr.mxu0 0.0
      %1682 = vmatpush1.msra.mxu0 0.0
      %1683 = vmatprep.subr.mxu0 0.0
      %1684 = vmatpush1.msra.mxu0 0.0
      %1685 = vmatprep.subr.mxu0 0.0
      %1686 = vmatpush1.msra.mxu0 0.0
      %1687 = vmatprep.subr.mxu0 0.0
      %1688 = vmatpush1.msra.mxu0 0.0
      %1689 = vmatprep.subr.mxu0 0.0
      %1690 = vmatpush1.msra.mxu0 0.0
      %1691 = vmatprep.subr.mxu0 0.0
      %1692 = vmatpush1.msra.mxu0 0.0
      %1693 = vmatprep.subr.mxu0 0.0
      %1694 = vmatpush1.msra.mxu0 0.0
      %1695 = vmatprep.subr.mxu0 0.0
      %1696 = vmatpush1.msra.mxu0 0.0
      %1697 = vmatprep.subr.mxu0 0.0
      %1698 = vmatpush1.msra.mxu0 0.0
      %1699 = vmatprep.subr.mxu0 0.0
      %1700 = vmatpush1.msra.mxu0 0.0
      %1701 = vmatprep.subr.mxu0 0.0
      %1702 = vmatpush1.msra.mxu0 0.0
      %1703 = vmatprep.subr.mxu0 0.0
      %1704 = vmatpush1.msra.mxu0 0.0
      %1705 = vmatprep.mubr.f32.mxu0 0.0
      %1706 = vmatmul.mubr.f32.gmra.mrb[0].mxu0 %v1498
      %v1707 = vpop.f32.mrb[0].mxu0
      %v1708 = vadd.f32 0.0, %v1707
      %v1709 = vpop.f32.mrb[0].mxu0
      %1710 = vdwg.mxu0
      %1711 = vmatprep.subr.mxu0 0.0
      %1712 = vmatpush1.msra.mxu0 %v1529
      %1713 = vmatprep.subr.mxu0 0.0
      %1714 = vmatpush1.msra.mxu0 %v1530
      %1715 = vmatprep.subr.mxu0 0.0
      %1716 = vmatpush1.msra.mxu0 %v1531
      %1717 = vmatprep.subr.mxu0 0.0
      %1718 = vmatpush1.msra.mxu0 %v1532
      %1719 = vmatprep.subr.mxu0 0.0
      %1720 = vmatpush1.msra.mxu0 %v1533
      %1721 = vmatprep.subr.mxu0 0.0
      %1722 = vmatpush1.msra.mxu0 %v1534
      %1723 = vmatprep.subr.mxu0 0.0
      %1724 = vmatpush1.msra.mxu0 %v1535
      %1725 = vmatprep.subr.mxu0 0.0
      %1726 = vmatpush1.msra.mxu0 %v1536
      %1727 = vmatprep.subr.mxu0 0.0
      %1728 = vmatpush1.msra.mxu0 %v1537
      %1729 = vmatprep.subr.mxu0 0.0
      %1730 = vmatpush1.msra.mxu0 %v1538
      %1731 = vmatprep.subr.mxu0 0.0
      %1732 = vmatpush1.msra.mxu0 %v1539
      %1733 = vmatprep.subr.mxu0 0.0
      %1734 = vmatpush1.msra.mxu0 %v1540
      %1735 = vmatprep.subr.mxu0 0.0
      %1736 = vmatpush1.msra.mxu0 %v1541
      %1737 = vmatprep.subr.mxu0 0.0
      %1738 = vmatpush1.msra.mxu0 %v1542
      %1739 = vmatprep.subr.mxu0 0.0
      %1740 = vmatpush1.msra.mxu0 %v1543
      %1741 = vmatprep.subr.mxu0 0.0
      %1742 = vmatpush1.msra.mxu0 %v1544
      %1743 = vmatprep.subr.mxu0 0.0
      %1744 = vmatpush1.msra.mxu0 0.0
      %1745 = vmatprep.subr.mxu0 0.0
      %1746 = vmatpush1.msra.mxu0 0.0
      %1747 = vmatprep.subr.mxu0 0.0
      %1748 = vmatpush1.msra.mxu0 0.0
      %1749 = vmatprep.subr.mxu0 0.0
      %1750 = vmatpush1.msra.mxu0 0.0
      %1751 = vmatprep.subr.mxu0 0.0
      %1752 = vmatpush1.msra.mxu0 0.0
      %1753 = vmatprep.subr.mxu0 0.0
      %1754 = vmatpush1.msra.mxu0 0.0
      %1755 = vmatprep.subr.mxu0 0.0
      %1756 = vmatpush1.msra.mxu0 0.0
      %1757 = vmatprep.subr.mxu0 0.0
      %1758 = vmatpush1.msra.mxu0 0.0
      %1759 = vmatprep.subr.mxu0 0.0
      %1760 = vmatpush1.msra.mxu0 0.0
      %1761 = vmatprep.subr.mxu0 0.0
      %1762 = vmatpush1.msra.mxu0 0.0
      %1763 = vmatprep.subr.mxu0 0.0
      %1764 = vmatpush1.msra.mxu0 0.0
      %1765 = vmatprep.subr.mxu0 0.0
      %1766 = vmatpush1.msra.mxu0 0.0
      %1767 = vmatprep.subr.mxu0 0.0
      %1768 = vmatpush1.msra.mxu0 0.0
      %1769 = vmatprep.subr.mxu0 0.0
      %1770 = vmatpush1.msra.mxu0 0.0
      %1771 = vmatprep.subr.mxu0 0.0
      %1772 = vmatpush1.msra.mxu0 0.0
      %1773 = vmatprep.subr.mxu0 0.0
      %1774 = vmatpush1.msra.mxu0 0.0
      %1775 = vmatprep.mubr.f32.mxu0 0.0
      %1776 = vmatmul.mubr.f32.gmra.mrb[0].mxu0 %v1500
      %v1777 = vpop.f32.mrb[0].mxu0
      %v1778 = vadd.f32 0.0, %v1777
      %v1779 = vpop.f32.mrb[0].mxu0
      %1780 = vdwg.mxu0
      %1781 = vmatprep.subr.mxu0 0.0
      %1782 = vmatpush1.msra.mxu0 %v1545
      %1783 = vmatprep.subr.mxu0 0.0
      %1784 = vmatpush1.msra.mxu0 %v1546
      %1785 = vmatprep.subr.mxu0 0.0
      %1786 = vmatpush1.msra.mxu0 %v1547
      %1787 = vmatprep.subr.mxu0 0.0
      %1788 = vmatpush1.msra.mxu0 %v1548
      %1789 = vmatprep.subr.mxu0 0.0
      %1790 = vmatpush1.msra.mxu0 %v1549
      %1791 = vmatprep.subr.mxu0 0.0
      %1792 = vmatpush1.msra.mxu0 %v1550
      %1793 = vmatprep.subr.mxu0 0.0
      %1794 = vmatpush1.msra.mxu0 %v1551
      %1795 = vmatprep.subr.mxu0 0.0
      %1796 = vmatpush1.msra.mxu0 %v1552
      %1797 = vmatprep.subr.mxu0 0.0
      %1798 = vmatpush1.msra.mxu0 %v1553
      %1799 = vmatprep.subr.mxu0 0.0
      %1800 = vmatpush1.msra.mxu0 %v1554
      %1801 = vmatprep.subr.mxu0 0.0
      %1802 = vmatpush1.msra.mxu0 %v1555
      %1803 = vmatprep.subr.mxu0 0.0
      %1804 = vmatpush1.msra.mxu0 %v1556
      %1805 = vmatprep.subr.mxu0 0.0
      %1806 = vmatpush1.msra.mxu0 %v1557
      %1807 = vmatprep.subr.mxu0 0.0
      %1808 = vmatpush1.msra.mxu0 %v1558
      %1809 = vmatprep.subr.mxu0 0.0
      %1810 = vmatpush1.msra.mxu0 %v1559
      %1811 = vmatprep.subr.mxu0 0.0
      %1812 = vmatpush1.msra.mxu0 %v1560
      %1813 = vmatprep.subr.mxu0 0.0
      %1814 = vmatpush1.msra.mxu0 0.0
      %1815 = vmatprep.subr.mxu0 0.0
      %1816 = vmatpush1.msra.mxu0 0.0
      %1817 = vmatprep.subr.mxu0 0.0
      %1818 = vmatpush1.msra.mxu0 0.0
      %1819 = vmatprep.subr.mxu0 0.0
      %1820 = vmatpush1.msra.mxu0 0.0
      %1821 = vmatprep.subr.mxu0 0.0
      %1822 = vmatpush1.msra.mxu0 0.0
      %1823 = vmatprep.subr.mxu0 0.0
      %1824 = vmatpush1.msra.mxu0 0.0
      %1825 = vmatprep.subr.mxu0 0.0
      %1826 = vmatpush1.msra.mxu0 0.0
      %1827 = vmatprep.subr.mxu0 0.0
      %1828 = vmatpush1.msra.mxu0 0.0
      %1829 = vmatprep.subr.mxu0 0.0
      %1830 = vmatpush1.msra.mxu0 0.0
      %1831 = vmatprep.subr.mxu0 0.0
      %1832 = vmatpush1.msra.mxu0 0.0
      %1833 = vmatprep.subr.mxu0 0.0
      %1834 = vmatpush1.msra.mxu0 0.0
      %1835 = vmatprep.subr.mxu0 0.0
      %1836 = vmatpush1.msra.mxu0 0.0
      %1837 = vmatprep.subr.mxu0 0.0
      %1838 = vmatpush1.msra.mxu0 0.0
      %1839 = vmatprep.subr.mxu0 0.0
      %1840 = vmatpush1.msra.mxu0 0.0
      %1841 = vmatprep.subr.mxu0 0.0
      %1842 = vmatpush1.msra.mxu0 0.0
      %1843 = vmatprep.subr.mxu0 0.0
      %1844 = vmatpush1.msra.mxu0 0.0
      %1845 = vmatprep.mubr.f32.mxu0 0.0
      %1846 = vmatmul.mubr.f32.gmra.mrb[0].mxu0 %v1502
      %v1847 = vpop.f32.mrb[0].mxu0
      %v1848 = vadd.f32 0.0, %v1847
      %v1849 = vpop.f32.mrb[0].mxu0
      %1850 = vdwg.mxu0
      %1851 = vmatprep.subr.mxu0 0.0
      %1852 = vmatpush1.msra.mxu0 %v1561
      %1853 = vmatprep.subr.mxu0 0.0
      %1854 = vmatpush1.msra.mxu0 %v1562
      %1855 = vmatprep.subr.mxu0 0.0
      %1856 = vmatpush1.msra.mxu0 %v1563
      %1857 = vmatprep.subr.mxu0 0.0
      %1858 = vmatpush1.msra.mxu0 %v1564
      %1859 = vmatprep.subr.mxu0 0.0
      %1860 = vmatpush1.msra.mxu0 %v1565
      %1861 = vmatprep.subr.mxu0 0.0
      %1862 = vmatpush1.msra.mxu0 %v1566
      %1863 = vmatprep.subr.mxu0 0.0
      %1864 = vmatpush1.msra.mxu0 %v1567
      %1865 = vmatprep.subr.mxu0 0.0
      %1866 = vmatpush1.msra.mxu0 %v1568
      %1867 = vmatprep.subr.mxu0 0.0
      %1868 = vmatpush1.msra.mxu0 %v1569
      %1869 = vmatprep.subr.mxu0 0.0
      %1870 = vmatpush1.msra.mxu0 %v1570
      %1871 = vmatprep.subr.mxu0 0.0
      %1872 = vmatpush1.msra.mxu0 %v1571
      %1873 = vmatprep.subr.mxu0 0.0
      %1874 = vmatpush1.msra.mxu0 %v1572
      %1875 = vmatprep.subr.mxu0 0.0
      %1876 = vmatpush1.msra.mxu0 %v1573
      %1877 = vmatprep.subr.mxu0 0.0
      %1878 = vmatpush1.msra.mxu0 %v1574
      %1879 = vmatprep.subr.mxu0 0.0
      %1880 = vmatpush1.msra.mxu0 %v1575
      %1881 = vmatprep.subr.mxu0 0.0
      %1882 = vmatpush1.msra.mxu0 %v1576
      %1883 = vmatprep.subr.mxu0 0.0
      %1884 = vmatpush1.msra.mxu0 0.0
      %1885 = vmatprep.subr.mxu0 0.0
      %1886 = vmatpush1.msra.mxu0 0.0
      %1887 = vmatprep.subr.mxu0 0.0
      %1888 = vmatpush1.msra.mxu0 0.0
      %1889 = vmatprep.subr.mxu0 0.0
      %1890 = vmatpush1.msra.mxu0 0.0
      %1891 = vmatprep.subr.mxu0 0.0
      %1892 = vmatpush1.msra.mxu0 0.0
      %1893 = vmatprep.subr.mxu0 0.0
      %1894 = vmatpush1.msra.mxu0 0.0
      %1895 = vmatprep.subr.mxu0 0.0
      %1896 = vmatpush1.msra.mxu0 0.0
      %1897 = vmatprep.subr.mxu0 0.0
      %1898 = vmatpush1.msra.mxu0 0.0
      %1899 = vmatprep.subr.mxu0 0.0
      %1900 = vmatpush1.msra.mxu0 0.0
      %1901 = vmatprep.subr.mxu0 0.0
      %1902 = vmatpush1.msra.mxu0 0.0
      %1903 = vmatprep.subr.mxu0 0.0
      %1904 = vmatpush1.msra.mxu0 0.0
      %1905 = vmatprep.subr.mxu0 0.0
      %1906 = vmatpush1.msra.mxu0 0.0
      %1907 = vmatprep.subr.mxu0 0.0
      %1908 = vmatpush1.msra.mxu0 0.0
      %1909 = vmatprep.subr.mxu0 0.0
      %1910 = vmatpush1.msra.mxu0 0.0
      %1911 = vmatprep.subr.mxu0 0.0
      %1912 = vmatpush1.msra.mxu0 0.0
      %1913 = vmatprep.subr.mxu0 0.0
      %1914 = vmatpush1.msra.mxu0 0.0
      %1915 = vmatprep.mubr.f32.mxu0 0.0
      %1916 = vmatmul.mubr.f32.gmra.mrb[0].mxu0 %v1504
      %v1917 = vpop.f32.mrb[0].mxu0
      %v1918 = vadd.f32 0.0, %v1917
      %v1919 = vpop.f32.mrb[0].mxu0
      %1920 = vdwg.mxu0
      %1921 = vmatprep.subr.mxu0 0.0
      %1922 = vmatpush1.msra.mxu0 %v1577
      %1923 = vmatprep.subr.mxu0 0.0
      %1924 = vmatpush1.msra.mxu0 %v1578
      %1925 = vmatprep.subr.mxu0 0.0
      %1926 = vmatpush1.msra.mxu0 %v1579
      %1927 = vmatprep.subr.mxu0 0.0
      %1928 = vmatpush1.msra.mxu0 %v1580
      %1929 = vmatprep.subr.mxu0 0.0
      %1930 = vmatpush1.msra.mxu0 %v1581
      %1931 = vmatprep.subr.mxu0 0.0
      %1932 = vmatpush1.msra.mxu0 %v1582
      %1933 = vmatprep.subr.mxu0 0.0
      %1934 = vmatpush1.msra.mxu0 %v1583
      %1935 = vmatprep.subr.mxu0 0.0
      %1936 = vmatpush1.msra.mxu0 %v1584
      %1937 = vmatprep.subr.mxu0 0.0
      %1938 = vmatpush1.msra.mxu0 %v1585
      %1939 = vmatprep.subr.mxu0 0.0
      %1940 = vmatpush1.msra.mxu0 %v1586
      %1941 = vmatprep.subr.mxu0 0.0
      %1942 = vmatpush1.msra.mxu0 %v1587
      %1943 = vmatprep.subr.mxu0 0.0
      %1944 = vmatpush1.msra.mxu0 %v1588
      %1945 = vmatprep.subr.mxu0 0.0
      %1946 = vmatpush1.msra.mxu0 %v1589
      %1947 = vmatprep.subr.mxu0 0.0
      %1948 = vmatpush1.msra.mxu0 %v1590
      %1949 = vmatprep.subr.mxu0 0.0
      %1950 = vmatpush1.msra.mxu0 %v1591
      %1951 = vmatprep.subr.mxu0 0.0
      %1952 = vmatpush1.msra.mxu0 %v1592
      %1953 = vmatprep.subr.mxu0 0.0
      %1954 = vmatpush1.msra.mxu0 0.0
      %1955 = vmatprep.subr.mxu0 0.0
      %1956 = vmatpush1.msra.mxu0 0.0
      %1957 = vmatprep.subr.mxu0 0.0
      %1958 = vmatpush1.msra.mxu0 0.0
      %1959 = vmatprep.subr.mxu0 0.0
      %1960 = vmatpush1.msra.mxu0 0.0
      %1961 = vmatprep.subr.mxu0 0.0
      %1962 = vmatpush1.msra.mxu0 0.0
      %1963 = vmatprep.subr.mxu0 0.0
      %1964 = vmatpush1.msra.mxu0 0.0
      %1965 = vmatprep.subr.mxu0 0.0
      %1966 = vmatpush1.msra.mxu0 0.0
      %1967 = vmatprep.subr.mxu0 0.0
      %1968 = vmatpush1.msra.mxu0 0.0
      %1969 = vmatprep.subr.mxu0 0.0
      %1970 = vmatpush1.msra.mxu0 0.0
      %1971 = vmatprep.subr.mxu0 0.0
      %1972 = vmatpush1.msra.mxu0 0.0
      %1973 = vmatprep.subr.mxu0 0.0
      %1974 = vmatpush1.msra.mxu0 0.0
      %1975 = vmatprep.subr.mxu0 0.0
      %1976 = vmatpush1.msra.mxu0 0.0
      %1977 = vmatprep.subr.mxu0 0.0
      %1978 = vmatpush1.msra.mxu0 0.0
      %1979 = vmatprep.subr.mxu0 0.0
      %1980 = vmatpush1.msra.mxu0 0.0
      %1981 = vmatprep.subr.mxu0 0.0
      %1982 = vmatpush1.msra.mxu0 0.0
      %1983 = vmatprep.subr.mxu0 0.0
      %1984 = vmatpush1.msra.mxu0 0.0
      %1985 = vmatprep.mubr.f32.mxu0 0.0
      %1986 = vmatmul.mubr.f32.gmra.mrb[0].mxu0 %v1506
      %v1987 = vpop.f32.mrb[0].mxu0
      %v1988 = vadd.f32 0.0, %v1987
      %v1989 = vpop.f32.mrb[0].mxu0
      %1990 = vdwg.mxu0
      %1991 = vmatprep.subr.mxu0 0.0
      %1992 = vmatpush1.msra.mxu0 %v1593
      %1993 = vmatprep.subr.mxu0 0.0
      %1994 = vmatpush1.msra.mxu0 %v1594
      %1995 = vmatprep.subr.mxu0 0.0
      %1996 = vmatpush1.msra.mxu0 %v1595
      %1997 = vmatprep.subr.mxu0 0.0
      %1998 = vmatpush1.msra.mxu0 %v1596
      %1999 = vmatprep.subr.mxu0 0.0
      %2000 = vmatpush1.msra.mxu0 %v1597
      %2001 = vmatprep.subr.mxu0 0.0
      %2002 = vmatpush1.msra.mxu0 %v1598
      %2003 = vmatprep.subr.mxu0 0.0
      %2004 = vmatpush1.msra.mxu0 %v1599
      %2005 = vmatprep.subr.mxu0 0.0
      %2006 = vmatpush1.msra.mxu0 %v1600
      %2007 = vmatprep.subr.mxu0 0.0
      %2008 = vmatpush1.msra.mxu0 %v1601
      %2009 = vmatprep.subr.mxu0 0.0
      %2010 = vmatpush1.msra.mxu0 %v1602
      %2011 = vmatprep.subr.mxu0 0.0
      %2012 = vmatpush1.msra.mxu0 %v1603
      %2013 = vmatprep.subr.mxu0 0.0
      %2014 = vmatpush1.msra.mxu0 %v1604
      %2015 = vmatprep.subr.mxu0 0.0
      %2016 = vmatpush1.msra.mxu0 %v1605
      %2017 = vmatprep.subr.mxu0 0.0
      %2018 = vmatpush1.msra.mxu0 %v1606
      %2019 = vmatprep.subr.mxu0 0.0
      %2020 = vmatpush1.msra.mxu0 %v1607
      %2021 = vmatprep.subr.mxu0 0.0
      %2022 = vmatpush1.msra.mxu0 %v1608
      %2023 = vmatprep.subr.mxu0 0.0
      %2024 = vmatpush1.msra.mxu0 0.0
      %2025 = vmatprep.subr.mxu0 0.0
      %2026 = vmatpush1.msra.mxu0 0.0
      %2027 = vmatprep.subr.mxu0 0.0
      %2028 = vmatpush1.msra.mxu0 0.0
      %2029 = vmatprep.subr.mxu0 0.0
      %2030 = vmatpush1.msra.mxu0 0.0
      %2031 = vmatprep.subr.mxu0 0.0
      %2032 = vmatpush1.msra.mxu0 0.0
      %2033 = vmatprep.subr.mxu0 0.0
      %2034 = vmatpush1.msra.mxu0 0.0
      %2035 = vmatprep.subr.mxu0 0.0
      %2036 = vmatpush1.msra.mxu0 0.0
      %2037 = vmatprep.subr.mxu0 0.0
      %2038 = vmatpush1.msra.mxu0 0.0
      %2039 = vmatprep.subr.mxu0 0.0
      %2040 = vmatpush1.msra.mxu0 0.0
      %2041 = vmatprep.subr.mxu0 0.0
      %2042 = vmatpush1.msra.mxu0 0.0
      %2043 = vmatprep.subr.mxu0 0.0
      %2044 = vmatpush1.msra.mxu0 0.0
      %2045 = vmatprep.subr.mxu0 0.0
      %2046 = vmatpush1.msra.mxu0 0.0
      %2047 = vmatprep.subr.mxu0 0.0
      %2048 = vmatpush1.msra.mxu0 0.0
      %2049 = vmatprep.subr.mxu0 0.0
      %2050 = vmatpush1.msra.mxu0 0.0
      %2051 = vmatprep.subr.mxu0 0.0
      %2052 = vmatpush1.msra.mxu0 0.0
      %2053 = vmatprep.subr.mxu0 0.0
      %2054 = vmatpush1.msra.mxu0 0.0
      %2055 = vmatprep.mubr.f32.mxu0 0.0
      %2056 = vmatmul.mubr.f32.gmra.mrb[0].mxu0 %v1508
      %v2057 = vpop.f32.mrb[0].mxu0
      %v2058 = vadd.f32 0.0, %v2057
      %v2059 = vpop.f32.mrb[0].mxu0
      %2060 = vdwg.mxu0
      %2061 = vmatprep.subr.mxu0 0.0
      %2062 = vmatpush1.msra.mxu0 %v1609
      %2063 = vmatprep.subr.mxu0 0.0
      %2064 = vmatpush1.msra.mxu0 %v1610
      %2065 = vmatprep.subr.mxu0 0.0
      %2066 = vmatpush1.msra.mxu0 %v1611
      %2067 = vmatprep.subr.mxu0 0.0
      %2068 = vmatpush1.msra.mxu0 %v1612
      %2069 = vmatprep.subr.mxu0 0.0
      %2070 = vmatpush1.msra.mxu0 %v1613
      %2071 = vmatprep.subr.mxu0 0.0
      %2072 = vmatpush1.msra.mxu0 %v1614
      %2073 = vmatprep.subr.mxu0 0.0
      %2074 = vmatpush1.msra.mxu0 %v1615
      %2075 = vmatprep.subr.mxu0 0.0
      %2076 = vmatpush1.msra.mxu0 %v1616
      %2077 = vmatprep.subr.mxu0 0.0
      %2078 = vmatpush1.msra.mxu0 %v1617
      %2079 = vmatprep.subr.mxu0 0.0
      %2080 = vmatpush1.msra.mxu0 %v1618
      %2081 = vmatprep.subr.mxu0 0.0
      %2082 = vmatpush1.msra.mxu0 %v1619
      %2083 = vmatprep.subr.mxu0 0.0
      %2084 = vmatpush1.msra.mxu0 %v1620
      %2085 = vmatprep.subr.mxu0 0.0
      %2086 = vmatpush1.msra.mxu0 %v1621
      %2087 = vmatprep.subr.mxu0 0.0
      %2088 = vmatpush1.msra.mxu0 %v1622
      %2089 = vmatprep.subr.mxu0 0.0
      %2090 = vmatpush1.msra.mxu0 %v1623
      %2091 = vmatprep.subr.mxu0 0.0
      %2092 = vmatpush1.msra.mxu0 %v1624
      %2093 = vmatprep.subr.mxu0 0.0
      %2094 = vmatpush1.msra.mxu0 0.0
      %2095 = vmatprep.subr.mxu0 0.0
      %2096 = vmatpush1.msra.mxu0 0.0
      %2097 = vmatprep.subr.mxu0 0.0
      %2098 = vmatpush1.msra.mxu0 0.0
      %2099 = vmatprep.subr.mxu0 0.0
      %2100 = vmatpush1.msra.mxu0 0.0
      %2101 = vmatprep.subr.mxu0 0.0
      %2102 = vmatpush1.msra.mxu0 0.0
      %2103 = vmatprep.subr.mxu0 0.0
      %2104 = vmatpush1.msra.mxu0 0.0
      %2105 = vmatprep.subr.mxu0 0.0
      %2106 = vmatpush1.msra.mxu0 0.0
      %2107 = vmatprep.subr.mxu0 0.0
      %2108 = vmatpush1.msra.mxu0 0.0
      %2109 = vmatprep.subr.mxu0 0.0
      %2110 = vmatpush1.msra.mxu0 0.0
      %2111 = vmatprep.subr.mxu0 0.0
      %2112 = vmatpush1.msra.mxu0 0.0
      %2113 = vmatprep.subr.mxu0 0.0
      %2114 = vmatpush1.msra.mxu0 0.0
      %2115 = vmatprep.subr.mxu0 0.0
      %2116 = vmatpush1.msra.mxu0 0.0
      %2117 = vmatprep.subr.mxu0 0.0
      %2118 = vmatpush1.msra.mxu0 0.0
      %2119 = vmatprep.subr.mxu0 0.0
      %2120 = vmatpush1.msra.mxu0 0.0
      %2121 = vmatprep.subr.mxu0 0.0
      %2122 = vmatpush1.msra.mxu0 0.0
      %2123 = vmatprep.subr.mxu0 0.0
      %2124 = vmatpush1.msra.mxu0 0.0
      %2125 = vmatprep.mubr.f32.mxu0 0.0
      %2126 = vmatmul.mubr.f32.gmra.mrb[0].mxu0 %v1510
      %v2127 = vpop.f32.mrb[0].mxu0
      %v2128 = vadd.f32 0.0, %v2127
      %v2129 = vpop.f32.mrb[0].mxu0
      %2130 = vdwg.mxu0
      %2131 = vmatprep.subr.mxu0 0.0
      %2132 = vmatpush1.msra.mxu0 %v1625
      %2133 = vmatprep.subr.mxu0 0.0
      %2134 = vmatpush1.msra.mxu0 %v1626
      %2135 = vmatprep.subr.mxu0 0.0
      %2136 = vmatpush1.msra.mxu0 %v1627
      %2137 = vmatprep.subr.mxu0 0.0
      %2138 = vmatpush1.msra.mxu0 %v1628
      %2139 = vmatprep.subr.mxu0 0.0
      %2140 = vmatpush1.msra.mxu0 %v1629
      %2141 = vmatprep.subr.mxu0 0.0
      %2142 = vmatpush1.msra.mxu0 %v1630
      %2143 = vmatprep.subr.mxu0 0.0
      %2144 = vmatpush1.msra.mxu0 %v1631
      %2145 = vmatprep.subr.mxu0 0.0
      %2146 = vmatpush1.msra.mxu0 %v1632
      %2147 = vmatprep.subr.mxu0 0.0
      %2148 = vmatpush1.msra.mxu0 %v1633
      %2149 = vmatprep.subr.mxu0 0.0
      %2150 = vmatpush1.msra.mxu0 %v1634
      %2151 = vmatprep.subr.mxu0 0.0
      %2152 = vmatpush1.msra.mxu0 %v1635
      %2153 = vmatprep.subr.mxu0 0.0
      %2154 = vmatpush1.msra.mxu0 %v1636
      %2155 = vmatprep.subr.mxu0 0.0
      %2156 = vmatpush1.msra.mxu0 %v1637
      %2157 = vmatprep.subr.mxu0 0.0
      %2158 = vmatpush1.msra.mxu0 %v1638
      %2159 = vmatprep.subr.mxu0 0.0
      %2160 = vmatpush1.msra.mxu0 %v1639
      %2161 = vmatprep.subr.mxu0 0.0
      %2162 = vmatpush1.msra.mxu0 %v1640
      %2163 = vmatprep.subr.mxu0 0.0
      %2164 = vmatpush1.msra.mxu0 0.0
      %2165 = vmatprep.subr.mxu0 0.0
      %2166 = vmatpush1.msra.mxu0 0.0
      %2167 = vmatprep.subr.mxu0 0.0
      %2168 = vmatpush1.msra.mxu0 0.0
      %2169 = vmatprep.subr.mxu0 0.0
      %2170 = vmatpush1.msra.mxu0 0.0
      %2171 = vmatprep.subr.mxu0 0.0
      %2172 = vmatpush1.msra.mxu0 0.0
      %2173 = vmatprep.subr.mxu0 0.0
      %2174 = vmatpush1.msra.mxu0 0.0
      %2175 = vmatprep.subr.mxu0 0.0
      %2176 = vmatpush1.msra.mxu0 0.0
      %2177 = vmatprep.subr.mxu0 0.0
      %2178 = vmatpush1.msra.mxu0 0.0
      %2179 = vmatprep.subr.mxu0 0.0
      %2180 = vmatpush1.msra.mxu0 0.0
      %2181 = vmatprep.subr.mxu0 0.0
      %2182 = vmatpush1.msra.mxu0 0.0
      %2183 = vmatprep.subr.mxu0 0.0
      %2184 = vmatpush1.msra.mxu0 0.0
      %2185 = vmatprep.subr.mxu0 0.0
      %2186 = vmatpush1.msra.mxu0 0.0
      %2187 = vmatprep.subr.mxu0 0.0
      %2188 = vmatpush1.msra.mxu0 0.0
      %2189 = vmatprep.subr.mxu0 0.0
      %2190 = vmatpush1.msra.mxu0 0.0
      %2191 = vmatprep.subr.mxu0 0.0
      %2192 = vmatpush1.msra.mxu0 0.0
      %2193 = vmatprep.subr.mxu0 0.0
      %2194 = vmatpush1.msra.mxu0 0.0
      %2195 = vmatprep.mubr.f32.mxu0 0.0
      %2196 = vmatmul.mubr.f32.gmra.mrb[0].mxu0 %v1512
      %v2197 = vpop.f32.mrb[0].mxu0
      %v2198 = vadd.f32 0.0, %v2197
      %v2199 = vpop.f32.mrb[0].mxu0
      %2200 = vdwg.mxu0
      %v2201 = vld [vmem:[#allocation2] sm:$0xff]
      %v2210 = vrot.slane %v1778, 7
      %v2211 = vsel %vm1393, %v2210, %v1708
      %v2212 = vrot.slane %v1848, 6
      %v2213 = vsel %vm1396, %v2212, %v2211
      %v2214 = vrot.slane %v1918, 5
      %v2215 = vsel %vm1399, %v2214, %v2213
      %v2216 = vrot.slane %v1988, 4
      %v2217 = vsel %vm1402, %v2216, %v2215
      %v2218 = vrot.slane %v2058, 3
      %v2219 = vsel %vm1405, %v2218, %v2217
      %v2220 = vrot.slane %v2128, 2
      %v2221 = vsel %vm1408, %v2220, %v2219
      %v2222 = vrot.slane %v2198, 1
      %v2223 = vsel %vm1411, %v2222, %v2221
      %v2225 = vld [vmem:[%s5] sm:$0xff]
      %v2226 = vld [vmem:[%s5 + $0x8] sm:$0xff]
      %v2227 = vld [vmem:[%s5 + $0x10] sm:$0xff]
      %v2228 = vld [vmem:[%s5 + $0x18] sm:$0xff]
      %v2229 = vld [vmem:[%s5 + $0x20] sm:$0xff]
      %v2230 = vld [vmem:[%s5 + $0x28] sm:$0xff]
      %v2231 = vld [vmem:[%s5 + $0x30] sm:$0xff]
      %v2232 = vld [vmem:[%s5 + $0x38] sm:$0xff]
      %v2233 = vld [vmem:[%s5 + $0x40] sm:$0xff]
      %v2234 = vld [vmem:[%s5 + $0x48] sm:$0xff]
      %v2235 = vld [vmem:[%s5 + $0x50] sm:$0xff]
      %v2236 = vld [vmem:[%s5 + $0x58] sm:$0xff]
      %v2237 = vld [vmem:[%s5 + $0x60] sm:$0xff]
      %v2238 = vld [vmem:[%s5 + $0x68] sm:$0xff]
      %v2239 = vld [vmem:[%s5 + $0x70] sm:$0xff]
      %v2240 = vld [vmem:[%s5 + $0x78] sm:$0xff]
      %v2241 = vld [vmem:[%s5 + $0x80] sm:$0xff]
      %v2242 = vld [vmem:[%s5 + $0x88] sm:$0xff]
      %v2243 = vld [vmem:[%s5 + $0x90] sm:$0xff]
      %v2244 = vld [vmem:[%s5 + $0x98] sm:$0xff]
      %v2245 = vld [vmem:[%s5 + $0xa0] sm:$0xff]
      %v2246 = vld [vmem:[%s5 + $0xa8] sm:$0xff]
      %v2247 = vld [vmem:[%s5 + $0xb0] sm:$0xff]
      %v2248 = vld [vmem:[%s5 + $0xb8] sm:$0xff]
      %v2249 = vld [vmem:[%s5 + $0xc0] sm:$0xff]
      %v2250 = vld [vmem:[%s5 + $0xc8] sm:$0xff]
      %v2251 = vld [vmem:[%s5 + $0xd0] sm:$0xff]
      %v2252 = vld [vmem:[%s5 + $0xd8] sm:$0xff]
      %v2253 = vld [vmem:[%s5 + $0xe0] sm:$0xff]
      %v2254 = vld [vmem:[%s5 + $0xe8] sm:$0xff]
      %v2255 = vld [vmem:[%s5 + $0xf0] sm:$0xff]
      %v2256 = vld [vmem:[%s5 + $0xf8] sm:$0xff]
      %v2257 = vld [vmem:[%s5 + $0x100] sm:$0xff]
      %v2258 = vld [vmem:[%s5 + $0x108] sm:$0xff]
      %v2259 = vld [vmem:[%s5 + $0x110] sm:$0xff]
      %v2260 = vld [vmem:[%s5 + $0x118] sm:$0xff]
      %v2261 = vld [vmem:[%s5 + $0x120] sm:$0xff]
      %v2262 = vld [vmem:[%s5 + $0x128] sm:$0xff]
      %v2263 = vld [vmem:[%s5 + $0x130] sm:$0xff]
      %v2264 = vld [vmem:[%s5 + $0x138] sm:$0xff]
      %v2265 = vld [vmem:[%s5 + $0x140] sm:$0xff]
      %v2266 = vld [vmem:[%s5 + $0x148] sm:$0xff]
      %v2267 = vld [vmem:[%s5 + $0x150] sm:$0xff]
      %v2268 = vld [vmem:[%s5 + $0x158] sm:$0xff]
      %v2269 = vld [vmem:[%s5 + $0x160] sm:$0xff]
      %v2270 = vld [vmem:[%s5 + $0x168] sm:$0xff]
      %v2271 = vld [vmem:[%s5 + $0x170] sm:$0xff]
      %v2272 = vld [vmem:[%s5 + $0x178] sm:$0xff]
      %v2273 = vld [vmem:[%s5 + $0x180] sm:$0xff]
      %v2274 = vld [vmem:[%s5 + $0x188] sm:$0xff]
      %v2275 = vld [vmem:[%s5 + $0x190] sm:$0xff]
      %v2276 = vld [vmem:[%s5 + $0x198] sm:$0xff]
      %v2277 = vld [vmem:[%s5 + $0x1a0] sm:$0xff]
      %v2278 = vld [vmem:[%s5 + $0x1a8] sm:$0xff]
      %v2279 = vld [vmem:[%s5 + $0x1b0] sm:$0xff]
      %v2280 = vld [vmem:[%s5 + $0x1b8] sm:$0xff]
      %v2281 = vld [vmem:[%s5 + $0x1c0] sm:$0xff]
      %v2282 = vld [vmem:[%s5 + $0x1c8] sm:$0xff]
      %v2283 = vld [vmem:[%s5 + $0x1d0] sm:$0xff]
      %v2284 = vld [vmem:[%s5 + $0x1d8] sm:$0xff]
      %v2285 = vld [vmem:[%s5 + $0x1e0] sm:$0xff]
      %v2286 = vld [vmem:[%s5 + $0x1e8] sm:$0xff]
      %v2287 = vld [vmem:[%s5 + $0x1f0] sm:$0xff]
      %v2288 = vld [vmem:[%s5 + $0x1f8] sm:$0xff]
      %v2289 = vld [vmem:[%s5 + $0x200] sm:$0xff]
      %v2290 = vld [vmem:[%s5 + $0x208] sm:$0xff]
      %v2291 = vld [vmem:[%s5 + $0x210] sm:$0xff]
      %v2292 = vld [vmem:[%s5 + $0x218] sm:$0xff]
      %v2293 = vld [vmem:[%s5 + $0x220] sm:$0xff]
      %v2294 = vld [vmem:[%s5 + $0x228] sm:$0xff]
      %v2295 = vld [vmem:[%s5 + $0x230] sm:$0xff]
      %v2296 = vld [vmem:[%s5 + $0x238] sm:$0xff]
      %v2297 = vld [vmem:[%s5 + $0x240] sm:$0xff]
      %v2298 = vld [vmem:[%s5 + $0x248] sm:$0xff]
      %v2299 = vld [vmem:[%s5 + $0x250] sm:$0xff]
      %v2300 = vld [vmem:[%s5 + $0x258] sm:$0xff]
      %v2301 = vld [vmem:[%s5 + $0x260] sm:$0xff]
      %v2302 = vld [vmem:[%s5 + $0x268] sm:$0xff]
      %v2303 = vld [vmem:[%s5 + $0x270] sm:$0xff]
      %v2304 = vld [vmem:[%s5 + $0x278] sm:$0xff]
      %v2305 = vld [vmem:[%s5 + $0x280] sm:$0xff]
      %v2306 = vld [vmem:[%s5 + $0x288] sm:$0xff]
      %v2307 = vld [vmem:[%s5 + $0x290] sm:$0xff]
      %v2308 = vld [vmem:[%s5 + $0x298] sm:$0xff]
      %v2309 = vld [vmem:[%s5 + $0x2a0] sm:$0xff]
      %v2310 = vld [vmem:[%s5 + $0x2a8] sm:$0xff]
      %v2311 = vld [vmem:[%s5 + $0x2b0] sm:$0xff]
      %v2312 = vld [vmem:[%s5 + $0x2b8] sm:$0xff]
      %v2313 = vld [vmem:[%s5 + $0x2c0] sm:$0xff]
      %v2314 = vld [vmem:[%s5 + $0x2c8] sm:$0xff]
      %v2315 = vld [vmem:[%s5 + $0x2d0] sm:$0xff]
      %v2316 = vld [vmem:[%s5 + $0x2d8] sm:$0xff]
      %v2317 = vld [vmem:[%s5 + $0x2e0] sm:$0xff]
      %v2318 = vld [vmem:[%s5 + $0x2e8] sm:$0xff]
      %v2319 = vld [vmem:[%s5 + $0x2f0] sm:$0xff]
      %v2320 = vld [vmem:[%s5 + $0x2f8] sm:$0xff]
      %v2321 = vld [vmem:[%s5 + $0x300] sm:$0xff]
      %v2322 = vld [vmem:[%s5 + $0x308] sm:$0xff]
      %v2323 = vld [vmem:[%s5 + $0x310] sm:$0xff]
      %v2324 = vld [vmem:[%s5 + $0x318] sm:$0xff]
      %v2325 = vld [vmem:[%s5 + $0x320] sm:$0xff]
      %v2326 = vld [vmem:[%s5 + $0x328] sm:$0xff]
      %v2327 = vld [vmem:[%s5 + $0x330] sm:$0xff]
      %v2328 = vld [vmem:[%s5 + $0x338] sm:$0xff]
      %v2329 = vld [vmem:[%s5 + $0x340] sm:$0xff]
      %v2330 = vld [vmem:[%s5 + $0x348] sm:$0xff]
      %v2331 = vld [vmem:[%s5 + $0x350] sm:$0xff]
      %v2332 = vld [vmem:[%s5 + $0x358] sm:$0xff]
      %v2333 = vld [vmem:[%s5 + $0x360] sm:$0xff]
      %v2334 = vld [vmem:[%s5 + $0x368] sm:$0xff]
      %v2335 = vld [vmem:[%s5 + $0x370] sm:$0xff]
      %v2336 = vld [vmem:[%s5 + $0x378] sm:$0xff]
      %v2337 = vld [vmem:[%s5 + $0x380] sm:$0xff]
      %v2338 = vld [vmem:[%s5 + $0x388] sm:$0xff]
      %v2339 = vld [vmem:[%s5 + $0x390] sm:$0xff]
      %v2340 = vld [vmem:[%s5 + $0x398] sm:$0xff]
      %v2341 = vld [vmem:[%s5 + $0x3a0] sm:$0xff]
      %v2342 = vld [vmem:[%s5 + $0x3a8] sm:$0xff]
      %v2343 = vld [vmem:[%s5 + $0x3b0] sm:$0xff]
      %v2344 = vld [vmem:[%s5 + $0x3b8] sm:$0xff]
      %v2345 = vld [vmem:[%s5 + $0x3c0] sm:$0xff]
      %v2346 = vld [vmem:[%s5 + $0x3c8] sm:$0xff]
      %v2347 = vld [vmem:[%s5 + $0x3d0] sm:$0xff]
      %v2348 = vld [vmem:[%s5 + $0x3d8] sm:$0xff]
      %v2349 = vld [vmem:[%s5 + $0x3e0] sm:$0xff]
      %v2350 = vld [vmem:[%s5 + $0x3e8] sm:$0xff]
      %v2351 = vld [vmem:[%s5 + $0x3f0] sm:$0xff]
      %v2352 = vld [vmem:[%s5 + $0x3f8] sm:$0xff]
      %v2353 = vld [vmem:[%s5 + $0x400] sm:$0xff]
      %v2354 = vld [vmem:[%s5 + $0x408] sm:$0xff]
      %v2355 = vld [vmem:[%s5 + $0x410] sm:$0xff]
      %v2356 = vld [vmem:[%s5 + $0x418] sm:$0xff]
      %v2357 = vld [vmem:[%s5 + $0x420] sm:$0xff]
      %v2358 = vld [vmem:[%s5 + $0x428] sm:$0xff]
      %v2359 = vld [vmem:[%s5 + $0x430] sm:$0xff]
      %v2360 = vld [vmem:[%s5 + $0x438] sm:$0xff]
      %v2361 = vld [vmem:[%s5 + $0x440] sm:$0xff]
      %v2362 = vld [vmem:[%s5 + $0x448] sm:$0xff]
      %v2363 = vld [vmem:[%s5 + $0x450] sm:$0xff]
      %v2364 = vld [vmem:[%s5 + $0x458] sm:$0xff]
      %v2365 = vld [vmem:[%s5 + $0x460] sm:$0xff]
      %v2366 = vld [vmem:[%s5 + $0x468] sm:$0xff]
      %v2367 = vld [vmem:[%s5 + $0x470] sm:$0xff]
      %v2368 = vld [vmem:[%s5 + $0x478] sm:$0xff]
      %v2369 = vld [vmem:[%s5 + $0x480] sm:$0xff]
      %v2370 = vld [vmem:[%s5 + $0x488] sm:$0xff]
      %v2371 = vld [vmem:[%s5 + $0x490] sm:$0xff]
      %v2372 = vld [vmem:[%s5 + $0x498] sm:$0xff]
      %v2373 = vld [vmem:[%s5 + $0x4a0] sm:$0xff]
      %v2374 = vld [vmem:[%s5 + $0x4a8] sm:$0xff]
      %v2375 = vld [vmem:[%s5 + $0x4b0] sm:$0xff]
      %v2376 = vld [vmem:[%s5 + $0x4b8] sm:$0xff]
      %v2377 = vld [vmem:[%s5 + $0x4c0] sm:$0xff]
      %v2378 = vld [vmem:[%s5 + $0x4c8] sm:$0xff]
      %v2379 = vld [vmem:[%s5 + $0x4d0] sm:$0xff]
      %v2380 = vld [vmem:[%s5 + $0x4d8] sm:$0xff]
      %v2381 = vld [vmem:[%s5 + $0x4e0] sm:$0xff]
      %v2382 = vld [vmem:[%s5 + $0x4e8] sm:$0xff]
      %v2383 = vld [vmem:[%s5 + $0x4f0] sm:$0xff]
      %v2384 = vld [vmem:[%s5 + $0x4f8] sm:$0xff]
      %v2385 = vld [vmem:[%s5 + $0x500] sm:$0xff]
      %v2386 = vld [vmem:[%s5 + $0x508] sm:$0xff]
      %v2387 = vld [vmem:[%s5 + $0x510] sm:$0xff]
      %v2388 = vld [vmem:[%s5 + $0x518] sm:$0xff]
      %v2389 = vld [vmem:[%s5 + $0x520] sm:$0xff]
      %v2390 = vld [vmem:[%s5 + $0x528] sm:$0xff]
      %v2391 = vld [vmem:[%s5 + $0x530] sm:$0xff]
      %v2392 = vld [vmem:[%s5 + $0x538] sm:$0xff]
      %v2393 = vld [vmem:[%s5 + $0x540] sm:$0xff]
      %v2394 = vld [vmem:[%s5 + $0x548] sm:$0xff]
      %v2395 = vld [vmem:[%s5 + $0x550] sm:$0xff]
      %v2396 = vld [vmem:[%s5 + $0x558] sm:$0xff]
      %v2397 = vld [vmem:[%s5 + $0x560] sm:$0xff]
      %v2398 = vld [vmem:[%s5 + $0x568] sm:$0xff]
      %v2399 = vld [vmem:[%s5 + $0x570] sm:$0xff]
      %v2400 = vld [vmem:[%s5 + $0x578] sm:$0xff]
      %v2401 = vld [vmem:[%s5 + $0x580] sm:$0xff]
      %v2402 = vld [vmem:[%s5 + $0x588] sm:$0xff]
      %v2403 = vld [vmem:[%s5 + $0x590] sm:$0xff]
      %v2404 = vld [vmem:[%s5 + $0x598] sm:$0xff]
      %v2405 = vld [vmem:[%s5 + $0x5a0] sm:$0xff]
      %v2406 = vld [vmem:[%s5 + $0x5a8] sm:$0xff]
      %v2407 = vld [vmem:[%s5 + $0x5b0] sm:$0xff]
      %v2408 = vld [vmem:[%s5 + $0x5b8] sm:$0xff]
      %v2409 = vld [vmem:[%s5 + $0x5c0] sm:$0xff]
      %v2410 = vld [vmem:[%s5 + $0x5c8] sm:$0xff]
      %v2411 = vld [vmem:[%s5 + $0x5d0] sm:$0xff]
      %v2412 = vld [vmem:[%s5 + $0x5d8] sm:$0xff]
      %v2413 = vld [vmem:[%s5 + $0x5e0] sm:$0xff]
      %v2414 = vld [vmem:[%s5 + $0x5e8] sm:$0xff]
      %v2415 = vld [vmem:[%s5 + $0x5f0] sm:$0xff]
      %v2416 = vld [vmem:[%s5 + $0x5f8] sm:$0xff]
      %v2417 = vld [vmem:[%s7] sm:$0xf]
      %v2419 = vlaneseq
      %v2420 = vshrl.u32 %v2419, 7
      %v2421 = vsub.s32 0, %v2420
      %v2422 = vrot.slane %v2417, %v2421
      %v2423 = vlaneseq
      %v2424 = vshrl.u32 %v2423, 7
      %v2425 = vsub.s32 1, %v2424
      %v2426 = vrot.slane %v2417, %v2425
      %v2427 = vlaneseq
      %v2428 = vshrl.u32 %v2427, 7
      %v2429 = vsub.s32 2, %v2428
      %v2430 = vrot.slane %v2417, %v2429
      %v2431 = vlaneseq
      %v2432 = vshrl.u32 %v2431, 7
      %v2433 = vsub.s32 3, %v2432
      %v2434 = vrot.slane %v2417, %v2433
      %2439 = vmatprep.subr.mxu0 %v2226
      %2440 = vmatpush1.msra.mxu0 %v2225
      %2441 = vmatprep.subr.mxu0 %v2230
      %2442 = vmatpush1.msra.mxu0 %v2229
      %2443 = vmatprep.subr.mxu0 %v2234
      %2444 = vmatpush1.msra.mxu0 %v2233
      %2445 = vmatprep.subr.mxu0 %v2238
      %2446 = vmatpush1.msra.mxu0 %v2237
      %2447 = vmatprep.subr.mxu0 %v2242
      %2448 = vmatpush1.msra.mxu0 %v2241
      %2449 = vmatprep.subr.mxu0 %v2246
      %2450 = vmatpush1.msra.mxu0 %v2245
      %2451 = vmatprep.subr.mxu0 %v2250
      %2452 = vmatpush1.msra.mxu0 %v2249
      %2453 = vmatprep.subr.mxu0 %v2254
      %2454 = vmatpush1.msra.mxu0 %v2253
      %2455 = vmatprep.subr.mxu0 %v2258
      %2456 = vmatpush1.msra.mxu0 %v2257
      %2457 = vmatprep.subr.mxu0 %v2262
      %2458 = vmatpush1.msra.mxu0 %v2261
      %2459 = vmatprep.subr.mxu0 %v2266
      %2460 = vmatpush1.msra.mxu0 %v2265
      %2461 = vmatprep.subr.mxu0 %v2270
      %2462 = vmatpush1.msra.mxu0 %v2269
      %2463 = vmatprep.subr.mxu0 %v2274
      %2464 = vmatpush1.msra.mxu0 %v2273
      %2465 = vmatprep.subr.mxu0 %v2278
      %2466 = vmatpush1.msra.mxu0 %v2277
      %2467 = vmatprep.subr.mxu0 %v2282
      %2468 = vmatpush1.msra.mxu0 %v2281
      %2469 = vmatprep.subr.mxu0 %v2286
      %2470 = vmatpush1.msra.mxu0 %v2285
      %2471 = vmatprep.subr.mxu0 %v2290
      %2472 = vmatpush1.msra.mxu0 %v2289
      %2473 = vmatprep.subr.mxu0 %v2294
      %2474 = vmatpush1.msra.mxu0 %v2293
      %2475 = vmatprep.subr.mxu0 %v2298
      %2476 = vmatpush1.msra.mxu0 %v2297
      %2477 = vmatprep.subr.mxu0 %v2302
      %2478 = vmatpush1.msra.mxu0 %v2301
      %2479 = vmatprep.subr.mxu0 %v2306
      %2480 = vmatpush1.msra.mxu0 %v2305
      %2481 = vmatprep.subr.mxu0 %v2310
      %2482 = vmatpush1.msra.mxu0 %v2309
      %2483 = vmatprep.subr.mxu0 %v2314
      %2484 = vmatpush1.msra.mxu0 %v2313
      %2485 = vmatprep.subr.mxu0 %v2318
      %2486 = vmatpush1.msra.mxu0 %v2317
      %2487 = vmatprep.subr.mxu0 %v2322
      %2488 = vmatpush1.msra.mxu0 %v2321
      %2489 = vmatprep.subr.mxu0 %v2326
      %2490 = vmatpush1.msra.mxu0 %v2325
      %2491 = vmatprep.subr.mxu0 %v2330
      %2492 = vmatpush1.msra.mxu0 %v2329
      %2493 = vmatprep.subr.mxu0 %v2334
      %2494 = vmatpush1.msra.mxu0 %v2333
      %2495 = vmatprep.subr.mxu0 %v2338
      %2496 = vmatpush1.msra.mxu0 %v2337
      %2497 = vmatprep.subr.mxu0 %v2342
      %2498 = vmatpush1.msra.mxu0 %v2341
      %2499 = vmatprep.subr.mxu0 %v2346
      %2500 = vmatpush1.msra.mxu0 %v2345
      %2501 = vmatprep.subr.mxu0 %v2350
      %2502 = vmatpush1.msra.mxu0 %v2349
      %2503 = vmatprep.mubr.f32.mxu0 %v2223
      %2504 = vmatmul.mubr.f32.gmra.mrb[0].mxu0 %v618
      %v2505 = vpop.f32.mrb[0].mxu0
      %v2506 = vadd.f32 %v2422, %v2505
      %v2507 = vpop.f32.mrb[0].mxu0
      %v2508 = vadd.f32 %v2426, %v2507
      %2509 = vdwg.mxu0
      %2510 = vmatprep.subr.mxu0 %v2354
      %2511 = vmatpush1.msra.mxu0 %v2353
      %2512 = vmatprep.subr.mxu0 %v2358
      %2513 = vmatpush1.msra.mxu0 %v2357
      %2514 = vmatprep.subr.mxu0 %v2362
      %2515 = vmatpush1.msra.mxu0 %v2361
      %2516 = vmatprep.subr.mxu0 %v2366
      %2517 = vmatpush1.msra.mxu0 %v2365
      %2518 = vmatprep.subr.mxu0 %v2370
      %2519 = vmatpush1.msra.mxu0 %v2369
      %2520 = vmatprep.subr.mxu0 %v2374
      %2521 = vmatpush1.msra.mxu0 %v2373
      %2522 = vmatprep.subr.mxu0 %v2378
      %2523 = vmatpush1.msra.mxu0 %v2377
      %2524 = vmatprep.subr.mxu0 %v2382
      %2525 = vmatpush1.msra.mxu0 %v2381
      %2526 = vmatprep.subr.mxu0 %v2386
      %2527 = vmatpush1.msra.mxu0 %v2385
      %2528 = vmatprep.subr.mxu0 %v2390
      %2529 = vmatpush1.msra.mxu0 %v2389
      %2530 = vmatprep.subr.mxu0 %v2394
      %2531 = vmatpush1.msra.mxu0 %v2393
      %2532 = vmatprep.subr.mxu0 %v2398
      %2533 = vmatpush1.msra.mxu0 %v2397
      %2534 = vmatprep.subr.mxu0 %v2402
      %2535 = vmatpush1.msra.mxu0 %v2401
      %2536 = vmatprep.subr.mxu0 %v2406
      %2537 = vmatpush1.msra.mxu0 %v2405
      %2538 = vmatprep.subr.mxu0 %v2410
      %2539 = vmatpush1.msra.mxu0 %v2409
      %2540 = vmatprep.subr.mxu0 %v2414
      %2541 = vmatpush1.msra.mxu0 %v2413
      %2542 = vmatprep.subr.mxu0 0.0
      %2543 = vmatpush1.msra.mxu0 0.0
      %2544 = vmatprep.subr.mxu0 0.0
      %2545 = vmatpush1.msra.mxu0 0.0
      %2546 = vmatprep.subr.mxu0 0.0
      %2547 = vmatpush1.msra.mxu0 0.0
      %2548 = vmatprep.subr.mxu0 0.0
      %2549 = vmatpush1.msra.mxu0 0.0
      %2550 = vmatprep.subr.mxu0 0.0
      %2551 = vmatpush1.msra.mxu0 0.0
      %2552 = vmatprep.subr.mxu0 0.0
      %2553 = vmatpush1.msra.mxu0 0.0
      %2554 = vmatprep.subr.mxu0 0.0
      %2555 = vmatpush1.msra.mxu0 0.0
      %2556 = vmatprep.subr.mxu0 0.0
      %2557 = vmatpush1.msra.mxu0 0.0
      %2558 = vmatprep.subr.mxu0 0.0
      %2559 = vmatpush1.msra.mxu0 0.0
      %2560 = vmatprep.subr.mxu0 0.0
      %2561 = vmatpush1.msra.mxu0 0.0
      %2562 = vmatprep.subr.mxu0 0.0
      %2563 = vmatpush1.msra.mxu0 0.0
      %2564 = vmatprep.subr.mxu0 0.0
      %2565 = vmatpush1.msra.mxu0 0.0
      %2566 = vmatprep.subr.mxu0 0.0
      %2567 = vmatpush1.msra.mxu0 0.0
      %2568 = vmatprep.subr.mxu0 0.0
      %2569 = vmatpush1.msra.mxu0 0.0
      %2570 = vmatprep.subr.mxu0 0.0
      %2571 = vmatpush1.msra.mxu0 0.0
      %2572 = vmatprep.subr.mxu0 0.0
      %2573 = vmatpush1.msra.mxu0 0.0
      %2574 = vmatprep.mubr.f32.mxu0 0.0
      %2575 = vmatmul.mubr.f32.gmra.mrb[0].mxu0 %v2201
      %v2576 = vpop.f32.mrb[0].mxu0
      %v2577 = vadd.f32 %v2506, %v2576
      %v2578 = vpop.f32.mrb[0].mxu0
      %v2579 = vadd.f32 %v2508, %v2578
      %2580 = vdwg.mxu0
      %2581 = vmatprep.subr.mxu0 %v2228
      %2582 = vmatpush1.msra.mxu0 %v2227
      %2583 = vmatprep.subr.mxu0 %v2232
      %2584 = vmatpush1.msra.mxu0 %v2231
      %2585 = vmatprep.subr.mxu0 %v2236
      %2586 = vmatpush1.msra.mxu0 %v2235
      %2587 = vmatprep.subr.mxu0 %v2240
      %2588 = vmatpush1.msra.mxu0 %v2239
      %2589 = vmatprep.subr.mxu0 %v2244
      %2590 = vmatpush1.msra.mxu0 %v2243
      %2591 = vmatprep.subr.mxu0 %v2248
      %2592 = vmatpush1.msra.mxu0 %v2247
      %2593 = vmatprep.subr.mxu0 %v2252
      %2594 = vmatpush1.msra.mxu0 %v2251
      %2595 = vmatprep.subr.mxu0 %v2256
      %2596 = vmatpush1.msra.mxu0 %v2255
      %2597 = vmatprep.subr.mxu0 %v2260
      %2598 = vmatpush1.msra.mxu0 %v2259
      %2599 = vmatprep.subr.mxu0 %v2264
      %2600 = vmatpush1.msra.mxu0 %v2263
      %2601 = vmatprep.subr.mxu0 %v2268
      %2602 = vmatpush1.msra.mxu0 %v2267
      %2603 = vmatprep.subr.mxu0 %v2272
      %2604 = vmatpush1.msra.mxu0 %v2271
      %2605 = vmatprep.subr.mxu0 %v2276
      %2606 = vmatpush1.msra.mxu0 %v2275
      %2607 = vmatprep.subr.mxu0 %v2280
      %2608 = vmatpush1.msra.mxu0 %v2279
      %2609 = vmatprep.subr.mxu0 %v2284
      %2610 = vmatpush1.msra.mxu0 %v2283
      %2611 = vmatprep.subr.mxu0 %v2288
      %2612 = vmatpush1.msra.mxu0 %v2287
      %2613 = vmatprep.subr.mxu0 %v2292
      %2614 = vmatpush1.msra.mxu0 %v2291
      %2615 = vmatprep.subr.mxu0 %v2296
      %2616 = vmatpush1.msra.mxu0 %v2295
      %2617 = vmatprep.subr.mxu0 %v2300
      %2618 = vmatpush1.msra.mxu0 %v2299
      %2619 = vmatprep.subr.mxu0 %v2304
      %2620 = vmatpush1.msra.mxu0 %v2303
      %2621 = vmatprep.subr.mxu0 %v2308
      %2622 = vmatpush1.msra.mxu0 %v2307
      %2623 = vmatprep.subr.mxu0 %v2312
      %2624 = vmatpush1.msra.mxu0 %v2311
      %2625 = vmatprep.subr.mxu0 %v2316
      %2626 = vmatpush1.msra.mxu0 %v2315
      %2627 = vmatprep.subr.mxu0 %v2320
      %2628 = vmatpush1.msra.mxu0 %v2319
      %2629 = vmatprep.subr.mxu0 %v2324
      %2630 = vmatpush1.msra.mxu0 %v2323
      %2631 = vmatprep.subr.mxu0 %v2328
      %2632 = vmatpush1.msra.mxu0 %v2327
      %2633 = vmatprep.subr.mxu0 %v2332
      %2634 = vmatpush1.msra.mxu0 %v2331
      %2635 = vmatprep.subr.mxu0 %v2336
      %2636 = vmatpush1.msra.mxu0 %v2335
      %2637 = vmatprep.subr.mxu0 %v2340
      %2638 = vmatpush1.msra.mxu0 %v2339
      %2639 = vmatprep.subr.mxu0 %v2344
      %2640 = vmatpush1.msra.mxu0 %v2343
      %2641 = vmatprep.subr.mxu0 %v2348
      %2642 = vmatpush1.msra.mxu0 %v2347
      %2643 = vmatprep.subr.mxu0 %v2352
      %2644 = vmatpush1.msra.mxu0 %v2351
      %2645 = vmatprep.mubr.f32.mxu0 %v2223
      %2646 = vmatmul.mubr.f32.gmra.mrb[0].mxu0 %v618
      %v2647 = vpop.f32.mrb[0].mxu0
      %v2648 = vadd.f32 %v2430, %v2647
      %v2649 = vpop.f32.mrb[0].mxu0
      %v2650 = vadd.f32 %v2434, %v2649
      %2651 = vdwg.mxu0
      %2652 = vmatprep.subr.mxu0 %v2356
      %2653 = vmatpush1.msra.mxu0 %v2355
      %2654 = vmatprep.subr.mxu0 %v2360
      %2655 = vmatpush1.msra.mxu0 %v2359
      %2656 = vmatprep.subr.mxu0 %v2364
      %2657 = vmatpush1.msra.mxu0 %v2363
      %2658 = vmatprep.subr.mxu0 %v2368
      %2659 = vmatpush1.msra.mxu0 %v2367
      %2660 = vmatprep.subr.mxu0 %v2372
      %2661 = vmatpush1.msra.mxu0 %v2371
      %2662 = vmatprep.subr.mxu0 %v2376
      %2663 = vmatpush1.msra.mxu0 %v2375
      %2664 = vmatprep.subr.mxu0 %v2380
      %2665 = vmatpush1.msra.mxu0 %v2379
      %2666 = vmatprep.subr.mxu0 %v2384
      %2667 = vmatpush1.msra.mxu0 %v2383
      %2668 = vmatprep.subr.mxu0 %v2388
      %2669 = vmatpush1.msra.mxu0 %v2387
      %2670 = vmatprep.subr.mxu0 %v2392
      %2671 = vmatpush1.msra.mxu0 %v2391
      %2672 = vmatprep.subr.mxu0 %v2396
      %2673 = vmatpush1.msra.mxu0 %v2395
      %2674 = vmatprep.subr.mxu0 %v2400
      %2675 = vmatpush1.msra.mxu0 %v2399
      %2676 = vmatprep.subr.mxu0 %v2404
      %2677 = vmatpush1.msra.mxu0 %v2403
      %2678 = vmatprep.subr.mxu0 %v2408
      %2679 = vmatpush1.msra.mxu0 %v2407
      %2680 = vmatprep.subr.mxu0 %v2412
      %2681 = vmatpush1.msra.mxu0 %v2411
      %2682 = vmatprep.subr.mxu0 %v2416
      %2683 = vmatpush1.msra.mxu0 %v2415
      %2684 = vmatprep.subr.mxu0 0.0
      %2685 = vmatpush1.msra.mxu0 0.0
      %2686 = vmatprep.subr.mxu0 0.0
      %2687 = vmatpush1.msra.mxu0 0.0
      %2688 = vmatprep.subr.mxu0 0.0
      %2689 = vmatpush1.msra.mxu0 0.0
      %2690 = vmatprep.subr.mxu0 0.0
      %2691 = vmatpush1.msra.mxu0 0.0
      %2692 = vmatprep.subr.mxu0 0.0
      %2693 = vmatpush1.msra.mxu0 0.0
      %2694 = vmatprep.subr.mxu0 0.0
      %2695 = vmatpush1.msra.mxu0 0.0
      %2696 = vmatprep.subr.mxu0 0.0
      %2697 = vmatpush1.msra.mxu0 0.0
      %2698 = vmatprep.subr.mxu0 0.0
      %2699 = vmatpush1.msra.mxu0 0.0
      %2700 = vmatprep.subr.mxu0 0.0
      %2701 = vmatpush1.msra.mxu0 0.0
      %2702 = vmatprep.subr.mxu0 0.0
      %2703 = vmatpush1.msra.mxu0 0.0
      %2704 = vmatprep.subr.mxu0 0.0
      %2705 = vmatpush1.msra.mxu0 0.0
      %2706 = vmatprep.subr.mxu0 0.0
      %2707 = vmatpush1.msra.mxu0 0.0
      %2708 = vmatprep.subr.mxu0 0.0
      %2709 = vmatpush1.msra.mxu0 0.0
      %2710 = vmatprep.subr.mxu0 0.0
      %2711 = vmatpush1.msra.mxu0 0.0
      %2712 = vmatprep.subr.mxu0 0.0
      %2713 = vmatpush1.msra.mxu0 0.0
      %2714 = vmatprep.subr.mxu0 0.0
      %2715 = vmatpush1.msra.mxu0 0.0
      %2716 = vmatprep.mubr.f32.mxu0 0.0
      %2717 = vmatmul.mubr.f32.gmra.mrb[0].mxu0 %v2201
      %v2718 = vpop.f32.mrb[0].mxu0
      %v2719 = vadd.f32 %v2648, %v2718
      %v2720 = vpop.f32.mrb[0].mxu0
      %v2721 = vadd.f32 %v2650, %v2720
      %2722 = vdwg.mxu0
      %v2723 = vxor.u32 %v2577, 2147483648
      %v2724 = vmul.f32 %v2723, 1.442695
      %v2725 = vpow.pop %v2724
      %v2726 = vadd.f32 %v2725, 1.0
      %v2727 = vrcp.pop %v2726
      %v2728 = vmul.f32 1.0, %v2727
      %v2729 = vxor.u32 %v2579, 2147483648
      %v2730 = vmul.f32 %v2729, 1.442695
      %v2731 = vpow.pop %v2730
      %v2732 = vadd.f32 %v2731, 1.0
      %v2733 = vrcp.pop %v2732
      %v2734 = vmul.f32 1.0, %v2733
      %v2735 = vtanh.pop %v2719
      %v2736 = vxor.u32 %v2721, 2147483648
      %v2737 = vmul.f32 %v2736, 1.442695
      %v2738 = vpow.pop %v2737
      %v2739 = vadd.f32 %v2738, 1.0
      %v2740 = vrcp.pop %v2739
      %v2741 = vmul.f32 1.0, %v2740
      %v2742 = vld [vmem:[#allocation3] sm:$0xff]
      %v2743 = vmul.f32 %v2734, %v2742
      %v2744 = vmul.f32 %v2728, %v2735
      %v2745 = vadd.f32 %v2743, %v2744
      %v2746 = vtanh.pop %v2745
      %v2747 = vmul.f32 %v2741, %v2746
      %2748 = vst [vmem:[#allocation2] sm:$0xff] %v2747
      %2749 = vst [vmem:[#allocation3] sm:$0xff] %v2745
      %v2750 = vld [vmem:[%s621] sm:$0xff]
      %v2751 = vld [vmem:[%s6] sm:$0xff]
      %v2752 = vld [vmem:[%s6 + $0x8] sm:$0xff]
      %v2753 = vld [vmem:[%s6 + $0x10] sm:$0xff]
      %v2754 = vld [vmem:[%s6 + $0x18] sm:$0xff]
      %v2755 = vld [vmem:[%s6 + $0x20] sm:$0xff]
      %v2756 = vld [vmem:[%s6 + $0x28] sm:$0xff]
      %v2757 = vld [vmem:[%s6 + $0x30] sm:$0xff]
      %v2758 = vld [vmem:[%s6 + $0x38] sm:$0xff]
      %v2759 = vld [vmem:[%s6 + $0x40] sm:$0xff]
      %v2760 = vld [vmem:[%s6 + $0x48] sm:$0xff]
      %v2761 = vld [vmem:[%s6 + $0x50] sm:$0xff]
      %v2762 = vld [vmem:[%s6 + $0x58] sm:$0xff]
      %v2763 = vld [vmem:[%s6 + $0x60] sm:$0xff]
      %v2764 = vld [vmem:[%s6 + $0x68] sm:$0xff]
      %v2765 = vld [vmem:[%s6 + $0x70] sm:$0xff]
      %v2766 = vld [vmem:[%s6 + $0x78] sm:$0xff]
      %v2767 = vld [vmem:[%s6 + $0x80] sm:$0xff]
      %v2768 = vld [vmem:[%s6 + $0x88] sm:$0xff]
      %v2769 = vld [vmem:[%s6 + $0x90] sm:$0xff]
      %v2770 = vld [vmem:[%s6 + $0x98] sm:$0xff]
      %v2771 = vld [vmem:[%s6 + $0xa0] sm:$0xff]
      %v2772 = vld [vmem:[%s6 + $0xa8] sm:$0xff]
      %v2773 = vld [vmem:[%s6 + $0xb0] sm:$0xff]
      %v2774 = vld [vmem:[%s6 + $0xb8] sm:$0xff]
      %v2775 = vld [vmem:[%s6 + $0xc0] sm:$0xff]
      %v2776 = vld [vmem:[%s6 + $0xc8] sm:$0xff]
      %v2777 = vld [vmem:[%s6 + $0xd0] sm:$0xff]
      %v2778 = vld [vmem:[%s6 + $0xd8] sm:$0xff]
      %v2779 = vld [vmem:[%s6 + $0xe0] sm:$0xff]
      %v2780 = vld [vmem:[%s6 + $0xe8] sm:$0xff]
      %v2781 = vld [vmem:[%s6 + $0xf0] sm:$0xff]
      %v2782 = vld [vmem:[%s6 + $0xf8] sm:$0xff]
      %v2783 = vld [vmem:[%s6 + $0x100] sm:$0xff]
      %v2784 = vld [vmem:[%s6 + $0x108] sm:$0xff]
      %v2785 = vld [vmem:[%s6 + $0x110] sm:$0xff]
      %v2786 = vld [vmem:[%s6 + $0x118] sm:$0xff]
      %v2787 = vld [vmem:[%s6 + $0x120] sm:$0xff]
      %v2788 = vld [vmem:[%s6 + $0x128] sm:$0xff]
      %v2789 = vld [vmem:[%s6 + $0x130] sm:$0xff]
      %v2790 = vld [vmem:[%s6 + $0x138] sm:$0xff]
      %v2791 = vld [vmem:[%s6 + $0x140] sm:$0xff]
      %v2792 = vld [vmem:[%s6 + $0x148] sm:$0xff]
      %v2793 = vld [vmem:[%s6 + $0x150] sm:$0xff]
      %v2794 = vld [vmem:[%s6 + $0x158] sm:$0xff]
      %v2795 = vld [vmem:[%s6 + $0x160] sm:$0xff]
      %v2796 = vld [vmem:[%s6 + $0x168] sm:$0xff]
      %v2797 = vld [vmem:[%s6 + $0x170] sm:$0xff]
      %v2798 = vld [vmem:[%s6 + $0x178] sm:$0xff]
      %v2799 = vld [vmem:[%s6 + $0x180] sm:$0xff]
      %v2800 = vld [vmem:[%s6 + $0x188] sm:$0xff]
      %v2801 = vld [vmem:[%s6 + $0x190] sm:$0xff]
      %v2802 = vld [vmem:[%s6 + $0x198] sm:$0xff]
      %v2803 = vld [vmem:[%s6 + $0x1a0] sm:$0xff]
      %v2804 = vld [vmem:[%s6 + $0x1a8] sm:$0xff]
      %v2805 = vld [vmem:[%s6 + $0x1b0] sm:$0xff]
      %v2806 = vld [vmem:[%s6 + $0x1b8] sm:$0xff]
      %v2807 = vld [vmem:[%s6 + $0x1c0] sm:$0xff]
      %v2808 = vld [vmem:[%s6 + $0x1c8] sm:$0xff]
      %v2809 = vld [vmem:[%s6 + $0x1d0] sm:$0xff]
      %v2810 = vld [vmem:[%s6 + $0x1d8] sm:$0xff]
      %v2811 = vld [vmem:[%s6 + $0x1e0] sm:$0xff]
      %v2812 = vld [vmem:[%s6 + $0x1e8] sm:$0xff]
      %v2813 = vld [vmem:[%s6 + $0x1f0] sm:$0xff]
      %v2814 = vld [vmem:[%s6 + $0x1f8] sm:$0xff]
      %v2815 = vld [vmem:[%s6 + $0x200] sm:$0xff]
      %v2816 = vld [vmem:[%s6 + $0x208] sm:$0xff]
      %v2817 = vld [vmem:[%s6 + $0x210] sm:$0xff]
      %v2818 = vld [vmem:[%s6 + $0x218] sm:$0xff]
      %v2819 = vld [vmem:[%s6 + $0x220] sm:$0xff]
      %v2820 = vld [vmem:[%s6 + $0x228] sm:$0xff]
      %v2821 = vld [vmem:[%s6 + $0x230] sm:$0xff]
      %v2822 = vld [vmem:[%s6 + $0x238] sm:$0xff]
      %v2823 = vld [vmem:[%s6 + $0x240] sm:$0xff]
      %v2824 = vld [vmem:[%s6 + $0x248] sm:$0xff]
      %v2825 = vld [vmem:[%s6 + $0x250] sm:$0xff]
      %v2826 = vld [vmem:[%s6 + $0x258] sm:$0xff]
      %v2827 = vld [vmem:[%s6 + $0x260] sm:$0xff]
      %v2828 = vld [vmem:[%s6 + $0x268] sm:$0xff]
      %v2829 = vld [vmem:[%s6 + $0x270] sm:$0xff]
      %v2830 = vld [vmem:[%s6 + $0x278] sm:$0xff]
      %v2831 = vld [vmem:[%s6 + $0x280] sm:$0xff]
      %v2832 = vld [vmem:[%s6 + $0x288] sm:$0xff]
      %v2833 = vld [vmem:[%s6 + $0x290] sm:$0xff]
      %v2834 = vld [vmem:[%s6 + $0x298] sm:$0xff]
      %v2835 = vld [vmem:[%s6 + $0x2a0] sm:$0xff]
      %v2836 = vld [vmem:[%s6 + $0x2a8] sm:$0xff]
      %v2837 = vld [vmem:[%s6 + $0x2b0] sm:$0xff]
      %v2838 = vld [vmem:[%s6 + $0x2b8] sm:$0xff]
      %v2839 = vld [vmem:[%s6 + $0x2c0] sm:$0xff]
      %v2840 = vld [vmem:[%s6 + $0x2c8] sm:$0xff]
      %v2841 = vld [vmem:[%s6 + $0x2d0] sm:$0xff]
      %v2842 = vld [vmem:[%s6 + $0x2d8] sm:$0xff]
      %v2843 = vld [vmem:[%s6 + $0x2e0] sm:$0xff]
      %v2844 = vld [vmem:[%s6 + $0x2e8] sm:$0xff]
      %v2845 = vld [vmem:[%s6 + $0x2f0] sm:$0xff]
      %v2846 = vld [vmem:[%s6 + $0x2f8] sm:$0xff]
      %v2847 = vld [vmem:[%s6 + $0x300] sm:$0xff]
      %v2848 = vld [vmem:[%s6 + $0x308] sm:$0xff]
      %v2849 = vld [vmem:[%s6 + $0x310] sm:$0xff]
      %v2850 = vld [vmem:[%s6 + $0x318] sm:$0xff]
      %v2851 = vld [vmem:[%s6 + $0x320] sm:$0xff]
      %v2852 = vld [vmem:[%s6 + $0x328] sm:$0xff]
      %v2853 = vld [vmem:[%s6 + $0x330] sm:$0xff]
      %v2854 = vld [vmem:[%s6 + $0x338] sm:$0xff]
      %v2855 = vld [vmem:[%s6 + $0x340] sm:$0xff]
      %v2856 = vld [vmem:[%s6 + $0x348] sm:$0xff]
      %v2857 = vld [vmem:[%s6 + $0x350] sm:$0xff]
      %v2858 = vld [vmem:[%s6 + $0x358] sm:$0xff]
      %v2859 = vld [vmem:[%s6 + $0x360] sm:$0xff]
      %v2860 = vld [vmem:[%s6 + $0x368] sm:$0xff]
      %v2861 = vld [vmem:[%s6 + $0x370] sm:$0xff]
      %v2862 = vld [vmem:[%s6 + $0x378] sm:$0xff]
      %v2863 = vld [vmem:[%s6 + $0x380] sm:$0xff]
      %v2864 = vld [vmem:[%s6 + $0x388] sm:$0xff]
      %v2865 = vld [vmem:[%s6 + $0x390] sm:$0xff]
      %v2866 = vld [vmem:[%s6 + $0x398] sm:$0xff]
      %v2867 = vld [vmem:[%s6 + $0x3a0] sm:$0xff]
      %v2868 = vld [vmem:[%s6 + $0x3a8] sm:$0xff]
      %v2869 = vld [vmem:[%s6 + $0x3b0] sm:$0xff]
      %v2870 = vld [vmem:[%s6 + $0x3b8] sm:$0xff]
      %v2871 = vld [vmem:[%s6 + $0x3c0] sm:$0xff]
      %v2872 = vld [vmem:[%s6 + $0x3c8] sm:$0xff]
      %v2873 = vld [vmem:[%s6 + $0x3d0] sm:$0xff]
      %v2874 = vld [vmem:[%s6 + $0x3d8] sm:$0xff]
      %v2875 = vld [vmem:[%s6 + $0x3e0] sm:$0xff]
      %v2876 = vld [vmem:[%s6 + $0x3e8] sm:$0xff]
      %v2877 = vld [vmem:[%s6 + $0x3f0] sm:$0xff]
      %v2878 = vld [vmem:[%s6 + $0x3f8] sm:$0xff]
      %s2879 = scalar_lea.vmem %s7, 4
      %v2880 = vld [vmem:[%s2879] sm:$0xf]
      %v2882 = vlaneseq
      %v2883 = vshrl.u32 %v2882, 7
      %v2884 = vsub.s32 0, %v2883
      %v2885 = vrot.slane %v2880, %v2884
      %v2886 = vlaneseq
      %v2887 = vshrl.u32 %v2886, 7
      %v2888 = vsub.s32 1, %v2887
      %v2889 = vrot.slane %v2880, %v2888
      %v2890 = vlaneseq
      %v2891 = vshrl.u32 %v2890, 7
      %v2892 = vsub.s32 2, %v2891
      %v2893 = vrot.slane %v2880, %v2892
      %v2894 = vlaneseq
      %v2895 = vshrl.u32 %v2894, 7
      %v2896 = vsub.s32 3, %v2895
      %v2897 = vrot.slane %v2880, %v2896
      %2902 = vmatprep.subr.mxu0 %v2752
      %2903 = vmatpush1.msra.mxu0 %v2751
      %2904 = vmatprep.subr.mxu0 %v2756
      %2905 = vmatpush1.msra.mxu0 %v2755
      %2906 = vmatprep.subr.mxu0 %v2760
      %2907 = vmatpush1.msra.mxu0 %v2759
      %2908 = vmatprep.subr.mxu0 %v2764
      %2909 = vmatpush1.msra.mxu0 %v2763
      %2910 = vmatprep.subr.mxu0 %v2768
      %2911 = vmatpush1.msra.mxu0 %v2767
      %2912 = vmatprep.subr.mxu0 %v2772
      %2913 = vmatpush1.msra.mxu0 %v2771
      %2914 = vmatprep.subr.mxu0 %v2776
      %2915 = vmatpush1.msra.mxu0 %v2775
      %2916 = vmatprep.subr.mxu0 %v2780
      %2917 = vmatpush1.msra.mxu0 %v2779
      %2918 = vmatprep.subr.mxu0 %v2784
      %2919 = vmatpush1.msra.mxu0 %v2783
      %2920 = vmatprep.subr.mxu0 %v2788
      %2921 = vmatpush1.msra.mxu0 %v2787
      %2922 = vmatprep.subr.mxu0 %v2792
      %2923 = vmatpush1.msra.mxu0 %v2791
      %2924 = vmatprep.subr.mxu0 %v2796
      %2925 = vmatpush1.msra.mxu0 %v2795
      %2926 = vmatprep.subr.mxu0 %v2800
      %2927 = vmatpush1.msra.mxu0 %v2799
      %2928 = vmatprep.subr.mxu0 %v2804
      %2929 = vmatpush1.msra.mxu0 %v2803
      %2930 = vmatprep.subr.mxu0 %v2808
      %2931 = vmatpush1.msra.mxu0 %v2807
      %2932 = vmatprep.subr.mxu0 %v2812
      %2933 = vmatpush1.msra.mxu0 %v2811
      %2934 = vmatprep.subr.mxu0 %v2816
      %2935 = vmatpush1.msra.mxu0 %v2815
      %2936 = vmatprep.subr.mxu0 %v2820
      %2937 = vmatpush1.msra.mxu0 %v2819
      %2938 = vmatprep.subr.mxu0 %v2824
      %2939 = vmatpush1.msra.mxu0 %v2823
      %2940 = vmatprep.subr.mxu0 %v2828
      %2941 = vmatpush1.msra.mxu0 %v2827
      %2942 = vmatprep.subr.mxu0 %v2832
      %2943 = vmatpush1.msra.mxu0 %v2831
      %2944 = vmatprep.subr.mxu0 %v2836
      %2945 = vmatpush1.msra.mxu0 %v2835
      %2946 = vmatprep.subr.mxu0 %v2840
      %2947 = vmatpush1.msra.mxu0 %v2839
      %2948 = vmatprep.subr.mxu0 %v2844
      %2949 = vmatpush1.msra.mxu0 %v2843
      %2950 = vmatprep.subr.mxu0 %v2848
      %2951 = vmatpush1.msra.mxu0 %v2847
      %2952 = vmatprep.subr.mxu0 %v2852
      %2953 = vmatpush1.msra.mxu0 %v2851
      %2954 = vmatprep.subr.mxu0 %v2856
      %2955 = vmatpush1.msra.mxu0 %v2855
      %2956 = vmatprep.subr.mxu0 %v2860
      %2957 = vmatpush1.msra.mxu0 %v2859
      %2958 = vmatprep.subr.mxu0 %v2864
      %2959 = vmatpush1.msra.mxu0 %v2863
      %2960 = vmatprep.subr.mxu0 %v2868
      %2961 = vmatpush1.msra.mxu0 %v2867
      %2962 = vmatprep.subr.mxu0 %v2872
      %2963 = vmatpush1.msra.mxu0 %v2871
      %2964 = vmatprep.subr.mxu0 %v2876
      %2965 = vmatpush1.msra.mxu0 %v2875
      %2966 = vmatprep.mubr.f32.mxu0 %v2750
      %2967 = vmatmul.mubr.f32.gmra.mrb[0].mxu0 %v2747
      %v2968 = vpop.f32.mrb[0].mxu0
      %v2969 = vadd.f32 %v2885, %v2968
      %v2970 = vpop.f32.mrb[0].mxu0
      %v2971 = vadd.f32 %v2889, %v2970
      %2972 = vdwg.mxu0
      %2973 = vmatprep.subr.mxu0 %v2754
      %2974 = vmatpush1.msra.mxu0 %v2753
      %2975 = vmatprep.subr.mxu0 %v2758
      %2976 = vmatpush1.msra.mxu0 %v2757
      %2977 = vmatprep.subr.mxu0 %v2762
      %2978 = vmatpush1.msra.mxu0 %v2761
      %2979 = vmatprep.subr.mxu0 %v2766
      %2980 = vmatpush1.msra.mxu0 %v2765
      %2981 = vmatprep.subr.mxu0 %v2770
      %2982 = vmatpush1.msra.mxu0 %v2769
      %2983 = vmatprep.subr.mxu0 %v2774
      %2984 = vmatpush1.msra.mxu0 %v2773
      %2985 = vmatprep.subr.mxu0 %v2778
      %2986 = vmatpush1.msra.mxu0 %v2777
      %2987 = vmatprep.subr.mxu0 %v2782
      %2988 = vmatpush1.msra.mxu0 %v2781
      %2989 = vmatprep.subr.mxu0 %v2786
      %2990 = vmatpush1.msra.mxu0 %v2785
      %2991 = vmatprep.subr.mxu0 %v2790
      %2992 = vmatpush1.msra.mxu0 %v2789
      %2993 = vmatprep.subr.mxu0 %v2794
      %2994 = vmatpush1.msra.mxu0 %v2793
      %2995 = vmatprep.subr.mxu0 %v2798
      %2996 = vmatpush1.msra.mxu0 %v2797
      %2997 = vmatprep.subr.mxu0 %v2802
      %2998 = vmatpush1.msra.mxu0 %v2801
      %2999 = vmatprep.subr.mxu0 %v2806
      %3000 = vmatpush1.msra.mxu0 %v2805
      %3001 = vmatprep.subr.mxu0 %v2810
      %3002 = vmatpush1.msra.mxu0 %v2809
      %3003 = vmatprep.subr.mxu0 %v2814
      %3004 = vmatpush1.msra.mxu0 %v2813
      %3005 = vmatprep.subr.mxu0 %v2818
      %3006 = vmatpush1.msra.mxu0 %v2817
      %3007 = vmatprep.subr.mxu0 %v2822
      %3008 = vmatpush1.msra.mxu0 %v2821
      %3009 = vmatprep.subr.mxu0 %v2826
      %3010 = vmatpush1.msra.mxu0 %v2825
      %3011 = vmatprep.subr.mxu0 %v2830
      %3012 = vmatpush1.msra.mxu0 %v2829
      %3013 = vmatprep.subr.mxu0 %v2834
      %3014 = vmatpush1.msra.mxu0 %v2833
      %3015 = vmatprep.subr.mxu0 %v2838
      %3016 = vmatpush1.msra.mxu0 %v2837
      %3017 = vmatprep.subr.mxu0 %v2842
      %3018 = vmatpush1.msra.mxu0 %v2841
      %3019 = vmatprep.subr.mxu0 %v2846
      %3020 = vmatpush1.msra.mxu0 %v2845
      %3021 = vmatprep.subr.mxu0 %v2850
      %3022 = vmatpush1.msra.mxu0 %v2849
      %3023 = vmatprep.subr.mxu0 %v2854
      %3024 = vmatpush1.msra.mxu0 %v2853
      %3025 = vmatprep.subr.mxu0 %v2858
      %3026 = vmatpush1.msra.mxu0 %v2857
      %3027 = vmatprep.subr.mxu0 %v2862
      %3028 = vmatpush1.msra.mxu0 %v2861
      %3029 = vmatprep.subr.mxu0 %v2866
      %3030 = vmatpush1.msra.mxu0 %v2865
      %3031 = vmatprep.subr.mxu0 %v2870
      %3032 = vmatpush1.msra.mxu0 %v2869
      %3033 = vmatprep.subr.mxu0 %v2874
      %3034 = vmatpush1.msra.mxu0 %v2873
      %3035 = vmatprep.subr.mxu0 %v2878
      %3036 = vmatpush1.msra.mxu0 %v2877
      %3037 = vmatprep.mubr.f32.mxu0 %v2750
      %3038 = vmatmul.mubr.f32.gmra.mrb[0].mxu0 %v2747
      %v3039 = vpop.f32.mrb[0].mxu0
      %v3040 = vadd.f32 %v2893, %v3039
      %v3041 = vpop.f32.mrb[0].mxu0
      %v3042 = vadd.f32 %v2897, %v3041
      %3043 = vdwg.mxu0
      %v3044 = vxor.u32 %v2969, 2147483648
      %v3045 = vmul.f32 %v3044, 1.442695
      %v3046 = vpow.pop %v3045
      %v3047 = vadd.f32 %v3046, 1.0
      %v3048 = vrcp.pop %v3047
      %v3049 = vmul.f32 1.0, %v3048
      %v3050 = vxor.u32 %v2971, 2147483648
      %v3051 = vmul.f32 %v3050, 1.442695
      %v3052 = vpow.pop %v3051
      %v3053 = vadd.f32 %v3052, 1.0
      %v3054 = vrcp.pop %v3053
      %v3055 = vmul.f32 1.0, %v3054
      %v3056 = vtanh.pop %v3040
      %v3057 = vxor.u32 %v3042, 2147483648
      %v3058 = vmul.f32 %v3057, 1.442695
      %v3059 = vpow.pop %v3058
      %v3060 = vadd.f32 %v3059, 1.0
      %v3061 = vrcp.pop %v3060
      %v3062 = vmul.f32 1.0, %v3061
      %s3063 = scalar_lea.vmem [#allocation3], 8
      %v3064 = vld [vmem:[%s3063] sm:$0xff]
      %v3065 = vmul.f32 %v3055, %v3064
      %v3066 = vmul.f32 %v3049, %v3056
      %v3067 = vadd.f32 %v3065, %v3066
      %v3068 = vtanh.pop %v3067
      %v3069 = vmul.f32 %v3062, %v3068
      %3070 = vst [vmem:[%s621] sm:$0xff] %v3069
      %3071 = vst [vmem:[%s3063] sm:$0xff] %v3067
      %v3072 = vld [vmem:[%s8] sm:$0xff]
      %v3073 = vld [vmem:[%s8 + $0x8] sm:$0xff]
      %v3074 = vld [vmem:[%s8 + $0x10] sm:$0xff]
      %v3075 = vld [vmem:[%s8 + $0x18] sm:$0xff]
      %v3076 = vld [vmem:[%s8 + $0x20] sm:$0xff]
      %v3077 = vld [vmem:[%s8 + $0x28] sm:$0xff]
      %v3078 = vld [vmem:[%s8 + $0x30] sm:$0xff]
      %v3079 = vld [vmem:[%s8 + $0x38] sm:$0xff]
      %v3080 = vld [vmem:[%s8 + $0x40] sm:$0xff]
      %v3081 = vld [vmem:[%s8 + $0x48] sm:$0xff]
      %v3082 = vld [vmem:[%s8 + $0x50] sm:$0xff]
      %v3083 = vld [vmem:[%s8 + $0x58] sm:$0xff]
      %v3084 = vld [vmem:[%s8 + $0x60] sm:$0xff]
      %v3085 = vld [vmem:[%s8 + $0x68] sm:$0xff]
      %v3086 = vld [vmem:[%s8 + $0x70] sm:$0xff]
      %v3087 = vld [vmem:[%s8 + $0x78] sm:$0xff]
      %v3088 = vld [vmem:[%s9] sm:$0x1]
      %v3090 = vlaneseq
      %v3091 = vshrl.u32 %v3090, 7
      %v3092 = vsub.s32 0, %v3091
      %v3093 = vrot.slane %v3088, %v3092
      %3095 = vmatprep.subr.mxu0 0.0
      %3096 = vmatpush1.msra.mxu0 %v3072
      %3097 = vmatprep.subr.mxu0 0.0
      %3098 = vmatpush1.msra.mxu0 %v3073
      %3099 = vmatprep.subr.mxu0 0.0
      %3100 = vmatpush1.msra.mxu0 %v3074
      %3101 = vmatprep.subr.mxu0 0.0
      %3102 = vmatpush1.msra.mxu0 %v3075
      %3103 = vmatprep.subr.mxu0 0.0
      %3104 = vmatpush1.msra.mxu0 %v3076
      %3105 = vmatprep.subr.mxu0 0.0
      %3106 = vmatpush1.msra.mxu0 %v3077
      %3107 = vmatprep.subr.mxu0 0.0
      %3108 = vmatpush1.msra.mxu0 %v3078
      %3109 = vmatprep.subr.mxu0 0.0
      %3110 = vmatpush1.msra.mxu0 %v3079
      %3111 = vmatprep.subr.mxu0 0.0
      %3112 = vmatpush1.msra.mxu0 %v3080
      %3113 = vmatprep.subr.mxu0 0.0
      %3114 = vmatpush1.msra.mxu0 %v3081
      %3115 = vmatprep.subr.mxu0 0.0
      %3116 = vmatpush1.msra.mxu0 %v3082
      %3117 = vmatprep.subr.mxu0 0.0
      %3118 = vmatpush1.msra.mxu0 %v3083
      %3119 = vmatprep.subr.mxu0 0.0
      %3120 = vmatpush1.msra.mxu0 %v3084
      %3121 = vmatprep.subr.mxu0 0.0
      %3122 = vmatpush1.msra.mxu0 %v3085
      %3123 = vmatprep.subr.mxu0 0.0
      %3124 = vmatpush1.msra.mxu0 %v3086
      %3125 = vmatprep.subr.mxu0 0.0
      %3126 = vmatpush1.msra.mxu0 %v3087
      %3127 = vmatprep.subr.mxu0 0.0
      %3128 = vmatpush1.msra.mxu0 0.0
      %3129 = vmatprep.subr.mxu0 0.0
      %3130 = vmatpush1.msra.mxu0 0.0
      %3131 = vmatprep.subr.mxu0 0.0
      %3132 = vmatpush1.msra.mxu0 0.0
      %3133 = vmatprep.subr.mxu0 0.0
      %3134 = vmatpush1.msra.mxu0 0.0
      %3135 = vmatprep.subr.mxu0 0.0
      %3136 = vmatpush1.msra.mxu0 0.0
      %3137 = vmatprep.subr.mxu0 0.0
      %3138 = vmatpush1.msra.mxu0 0.0
      %3139 = vmatprep.subr.mxu0 0.0
      %3140 = vmatpush1.msra.mxu0 0.0
      %3141 = vmatprep.subr.mxu0 0.0
      %3142 = vmatpush1.msra.mxu0 0.0
      %3143 = vmatprep.subr.mxu0 0.0
      %3144 = vmatpush1.msra.mxu0 0.0
      %3145 = vmatprep.subr.mxu0 0.0
      %3146 = vmatpush1.msra.mxu0 0.0
      %3147 = vmatprep.subr.mxu0 0.0
      %3148 = vmatpush1.msra.mxu0 0.0
      %3149 = vmatprep.subr.mxu0 0.0
      %3150 = vmatpush1.msra.mxu0 0.0
      %3151 = vmatprep.subr.mxu0 0.0
      %3152 = vmatpush1.msra.mxu0 0.0
      %3153 = vmatprep.subr.mxu0 0.0
      %3154 = vmatpush1.msra.mxu0 0.0
      %3155 = vmatprep.subr.mxu0 0.0
      %3156 = vmatpush1.msra.mxu0 0.0
      %3157 = vmatprep.subr.mxu0 0.0
      %3158 = vmatpush1.msra.mxu0 0.0
      %3159 = vmatprep.mubr.f32.mxu0 0.0
      %3160 = vmatmul.mubr.f32.gmra.mrb[0].mxu0 %v3069
      %v3161 = vpop.f32.mrb[0].mxu0
      %v3162 = vadd.f32 %v3093, %v3161
      %v3163 = vpop.f32.mrb[0].mxu0
      %3164 = vdwg.mxu0
      %3165 = vmax.xlane.f32.xlu0 %v3162
      %v3166 = vpop.xlane.xlu0 %3165
      %v3167 = vsub.f32 %v3162, %v3166
      %v3168 = vmul.f32 %v3167, 1.442695
      %v3169 = vpow.pop %v3168
      %3170 = vadd.xlane.f32.xlu0 %v3169
      %v3171 = vpop.xlane.xlu0 %3170
      %v3172 = vlog2.pop %v3171
      %v3173 = vmul.f32 %v3172, 0.6931472
      %v3174 = vsub.f32 %v3167, %v3173
      %v3175 = vlaneseq
      %v3176 = vand.u32 %v3175, 127
      %vm3177 = vcmp.eq.f32.partialorder %v3162, %v3166
      %v3178 = vsel %vm3177, %v3176, 128
      %v3179 = vand.u32 %v3178, 65535
      %v3180 = vshra.s32 %v3178, 16
      %v3181 = vcvt.s32.f32 %v3179
      %v3182 = vcvt.s32.f32 %v3180
      %3183 = vmin.xlane.f32.xlu0 %v3182
      %v3184 = vpop.xlane.xlu0 %3183
      %vm3185 = vcmp.eq.f32.partialorder %v3182, %v3184
      %v3186 = vsel %vm3185, %v3181, inf
      %3187 = vmin.xlane.f32.xlu0 %v3186
      %v3188 = vpop.xlane.xlu0 %3187
      %v3189 = vcvt.f32.s32 %v3188
      %v3190 = vcvt.f32.s32 %v3184
      %v3191 = vshll.u32 %v3190, 16
      %v3192 = vadd.s32 %v3191, %v3189
      %vm3193 = vcmp.eq.s32.totalorder %v3176, %v3192
      %v3194 = vsel %vm3193, 1, 0
      %v3195 = vcvt.s32.f32 %v3194
      %3196 = vst [vmem:[#allocation4] sm:$0xff] %v3195
      %3197 = vst [vmem:[%s497] sm:$0xff] %v3174
      %v3206 = vrot.slane %v1500, 7
      %v3207 = vsel %vm1393, %v3206, %v1498
      %v3208 = vrot.slane %v1502, 6
      %v3209 = vsel %vm1396, %v3208, %v3207
      %v3210 = vrot.slane %v1504, 5
      %v3211 = vsel %vm1399, %v3210, %v3209
      %v3212 = vrot.slane %v1506, 4
      %v3213 = vsel %vm1402, %v3212, %v3211
      %v3214 = vrot.slane %v1508, 3
      %v3215 = vsel %vm1405, %v3214, %v3213
      %v3216 = vrot.slane %v1510, 2
      %v3217 = vsel %vm1408, %v3216, %v3215
      %v3218 = vrot.slane %v1512, 1
      %v3219 = vsel %vm1411, %v3218, %v3217
      %3221 = vst [vmem:[%s505] sm:$0xff] %v3219
      %3222 = vst [vmem:[%s513] sm:$0xff] %v3192
      %p3223 = scmp.lt.s32.totalorder %s28, 0
      %s3224 = scalar_select %p3223, %s28, 0
      %p3225 = scmp.lt.s32.totalorder %s29, 7
      %s3226 = scalar_select %p3225, %s29, 7
      %s3227 = smul.addr %s3224, 8
      %s3228 = sadd.s32 %s3226, %s3227
      %s3229 = smul.addr %s3228, 8
      %s3230 = scalar_lea.vmem %s10, %s3229
      %p3231 = scmp.lt.s32.totalorder %s28, 0
      %s3232 = scalar_select %p3231, %s28, 0
      %p3233 = scmp.lt.s32.totalorder %s29, 7
      %s3234 = scalar_select %p3233, %s29, 7
      %s3235 = smul.addr %s3232, 8
      %s3236 = sadd.s32 %s3234, %s3235
      %s3237 = smul.addr %s3236, 8
      %s3238 = scalar_lea.vmem %s11, %s3237
      %p3239 = scmp.lt.s32.totalorder %s28, 0
      %s3240 = scalar_select %p3239, %s28, 0
      %p3241 = scmp.lt.s32.totalorder %s29, 7
      %s3242 = scalar_select %p3241, %s29, 7
      %s3243 = smul.addr %s3240, 8
      %s3244 = sadd.s32 %s3242, %s3243
      %s3245 = smul.addr %s3244, 8
      %s3246 = scalar_lea.vmem %s12, %s3245
      // Predicated region
      $region65: #{decoder_rnn_forward.1} parent=59 // pred_check
        %p3247 = pneg %p281
      $region66: #{decoder_rnn_forward.1} parent=59 // pred_check_branch
        %3249 = sbr.rel (%p3247) target = $region68
      $region67: #{decoder_rnn_forward.1} parent=59 // pred_region
        _
      $region68: #{decoder_rnn_forward.1} parent=59 // pred_fallthru
        _
      // Predicated region
      $region69: #{decoder_rnn_forward.1} parent=59 // pred_check
        %p3250 = pneg %p309
      $region70: #{decoder_rnn_forward.1} parent=59 // pred_check_branch
        %3252 = sbr.rel (%p3250) target = $region72
      $region71: #{decoder_rnn_forward.1} parent=59 // pred_region
        _
      $region72: #{decoder_rnn_forward.1} parent=59 // pred_fallthru
        _
      // Predicated region
      $region73: #{decoder_rnn_forward.1} parent=59 // pred_check
        %p3253 = pneg %p337
      $region74: #{decoder_rnn_forward.1} parent=59 // pred_check_branch
        %3255 = sbr.rel (%p3253) target = $region76
      $region75: #{decoder_rnn_forward.1} parent=59 // pred_region
        _
      $region76: #{decoder_rnn_forward.1} parent=59 // pred_fallthru
        _
    $region60: #{decoder_rnn_forward.1} parent=5 // pred_fallthru
      _
    %p3256 = scmp.le.s32.totalorder 2, %s19
    // Predicated region
    $region77: #{decoder_rnn_forward.1} parent=5 // pred_check
      %p3257 = pneg %p3256
    $region78: #{decoder_rnn_forward.1} parent=5 // pred_check_branch
      %3259 = sbr.rel (%p3257) target = $region80
    $region79: #{decoder_rnn_forward.1} parent=5 // pred_region
      %s3260 = ssub.s32 %s19, 2
      // Predicated region
      $region81: #{decoder_rnn_forward.1} parent=79 // pred_check
        %p3261 = pneg %p287
      $region82: #{decoder_rnn_forward.1} parent=79 // pred_check_branch
        %3263 = sbr.rel (%p3261) target = $region84
      $region83: #{decoder_rnn_forward.1} parent=79 // pred_region
        %p3264 = scmp.lt.s32.totalorder %s30, 0
        %s3265 = scalar_select %p3264, %s30, 0
        %p3266 = scmp.lt.s32.totalorder %s31, 7
        %s3267 = scalar_select %p3266, %s31, 7
        %s3268 = smul.addr %s3265, 8
        %s3269 = sadd.s32 %s3267, %s3268
        %s3270 = smul.addr %s3269, 8
        %s3271 = scalar_lea.vmem %s10, %s3270
      $region84: #{decoder_rnn_forward.1} parent=79 // pred_fallthru
        _
      // Predicated region
      $region85: #{decoder_rnn_forward.1} parent=79 // pred_check
        %p3272 = pneg %p315
      $region86: #{decoder_rnn_forward.1} parent=79 // pred_check_branch
        %3274 = sbr.rel (%p3272) target = $region88
      $region87: #{decoder_rnn_forward.1} parent=79 // pred_region
        %p3275 = scmp.lt.s32.totalorder %s30, 0
        %s3276 = scalar_select %p3275, %s30, 0
        %p3277 = scmp.lt.s32.totalorder %s31, 7
        %s3278 = scalar_select %p3277, %s31, 7
        %s3279 = smul.addr %s3276, 8
        %s3280 = sadd.s32 %s3278, %s3279
        %s3281 = smul.addr %s3280, 8
        %s3282 = scalar_lea.vmem %s11, %s3281
      $region88: #{decoder_rnn_forward.1} parent=79 // pred_fallthru
        _
      // Predicated region
      $region89: #{decoder_rnn_forward.1} parent=79 // pred_check
        %p3283 = pneg %p343
      $region90: #{decoder_rnn_forward.1} parent=79 // pred_check_branch
        %3285 = sbr.rel (%p3283) target = $region92
      $region91: #{decoder_rnn_forward.1} parent=79 // pred_region
        %p3286 = scmp.lt.s32.totalorder %s30, 0
        %s3287 = scalar_select %p3286, %s30, 0
        %p3288 = scmp.lt.s32.totalorder %s31, 7
        %s3289 = scalar_select %p3288, %s31, 7
        %s3290 = smul.addr %s3287, 8
        %s3291 = sadd.s32 %s3289, %s3290
        %s3292 = smul.addr %s3291, 8
        %s3293 = scalar_lea.vmem %s12, %s3292
      $region92: #{decoder_rnn_forward.1} parent=79 // pred_fallthru
        _
    $region80: #{decoder_rnn_forward.1} parent=5 // pred_fallthru
      _
  $region6: #{decoder_rnn_forward.1} parent=0 // loop_footer
    %s23 = sadd.s32 1, %s19
  $region7: #{decoder_rnn_forward.1} parent=0 // loop_footer_branch
    %18 = sbr.rel target = $region3
  $region8: #{decoder_rnn_forward.1} parent=0 // loop_exit
    _

</llo_original>
